<compile_context>
chip_gen: v6e
topology: v6e:2x2x1
jax: 0.10.0
libtpu: 0.0.40
codegen_flags: <defaults>
</compile_context>

<pallas_src>
import jax
import jax.numpy as jnp
from jax.experimental import pallas as pl
from jax.experimental.pallas import tpu as pltpu


# ---------------------------------------------------------------------------
# Fused kernel: both encoders + fusion MLP + per-pairing head
# ---------------------------------------------------------------------------

def _av_fused_kernel(aud1_ref, aud2_ref, img1_ref, img2_ref,
                     wa_ref, wv_ref, w1i_ref, w1a_ref,
                     ba_ref, bv_ref, b1_ref, w2_ref, b2_ref,
                     o_ref):
    f32 = jnp.float32
    bf16 = jnp.bfloat16

    ba = ba_ref[...]      # (1, F) f32
    bv = bv_ref[...]      # (1, F) f32
    b1 = b1_ref[...]      # (1, F) f32
    w2 = w2_ref[...]      # (1, F) f32  (final Linear(F->1) weight as a row)
    b2 = b2_ref[0]        # scalar f32 from SMEM

    w1i = w1i_ref[...]    # (F, F) bf16  == W1[:, :F].T  (image half)
    w1a = w1a_ref[...]    # (F, F) bf16  == W1[:, F:].T  (audio half)

    # --- backbones (NN-form, bf16 operands, f32 accumulate). Each fusion
    # --- projection is computed right after its feature so only the four
    # --- (tn, F) p-tiles stay live into the head section.
    fi1 = jnp.dot(img1_ref[...], wv_ref[...], preferred_element_type=f32) + bv
    pi1 = jnp.dot(fi1.astype(bf16), w1i, preferred_element_type=f32)
    fi2 = jnp.dot(img2_ref[...], wv_ref[...], preferred_element_type=f32) + bv
    pi2 = jnp.dot(fi2.astype(bf16), w1i, preferred_element_type=f32)

    fa1 = jnp.dot(aud1_ref[...], wa_ref[...], preferred_element_type=f32) + ba
    pa1 = jnp.dot(fa1.astype(bf16), w1a, preferred_element_type=f32)
    fa2 = jnp.dot(aud2_ref[...], wa_ref[...], preferred_element_type=f32) + ba
    pa2 = jnp.dot(fa2.astype(bf16), w1a, preferred_element_type=f32)

    def head(pi, pa):
        # cat([img, aud]) @ W1.T == img @ W1[:, :F].T + aud @ W1[:, F:].T
        h = jnp.maximum(pi + pa + b1, 0.0)                        # (tn, F) f32, VPU
        # F -> 1 head as VPU mul + XLU lane reduce (no width-1 matmul)
        return jnp.sum(h * w2, axis=-1, keepdims=True) + b2       # (tn, 1)

    o_ref[...] = jnp.concatenate(
        [head(pi1, pa1),   # fusion(img_1, aud_1)
         head(pi1, pa2),   # fusion(img_1, aud_2)
         head(pi2, pa1),   # fusion(img_2, aud_1)
         head(pi2, pa2)],  # fusion(img_2, aud_2)
        axis=1)            # (tn, 4) -- matches torch's (N, 4) ordering


# ---------------------------------------------------------------------------
# Tile selection / VMEM budgeting
# ---------------------------------------------------------------------------

def _round_up(x, m):
    return ((x + m - 1) // m) * m


def _physical_vmem_bytes():
    try:
        return int(pltpu.get_tpu_info().vmem_capacity_bytes)
    except Exception:
        return 64 * 1024 * 1024   # v7x per-TC VMEM: most conservative of v5e/v6e/v7x


def _footprint_bytes(tn, k, chw, f):
    """Estimated VMEM footprint of one pipelined grid step."""
    bf16, f32 = 2, 4
    f_pad = _round_up(f, 128)
    acts = 2 * 2 * tn * (k + chw) * bf16          # aud1/aud2/img1/img2, double-buffered
    wgts = (k * f + chw * f + 2 * f * f) * bf16   # resident weights (single-buffered)
    bias = 4 * 8 * f_pad * f32                    # (1,F) rows pad to (8, F_pad) tiles
    outb = 2 * tn * 128 * f32                     # (tn,4) output pads lanes, 2 bufs
    live = 6 * tn * f_pad * f32                   # f32 feature/projection tiles + spill slack
    return acts + wgts + bias + outb + live


def _choose_batch_tile(n, k, chw, f):
    phys = _physical_vmem_bytes()
    budget = int(phys * 0.65)
    cap = 128
    for cand in (1024, 768, 512, 384, 256, 128):
        if _footprint_bytes(cand, k, chw, f) <= budget:
            cap = cand
            break
    if n <= cap:
        tn, n_pad = n, n
    else:
        tn = cap
        n_pad = _round_up(n, tn)
    vmem_limit = int(min(phys * 0.85,
                         max(32 * 1024 * 1024,
                             _footprint_bytes(tn, k, chw, f) * 1.4 + (4 << 20))))
    return tn, n_pad, vmem_limit


# ---------------------------------------------------------------------------
# Single pallas_call for the whole forward
# ---------------------------------------------------------------------------

def fused_av_forward(a1, a2, i1, i2, params):
    """One fused pallas_call. Inputs are bf16 (N, K)/(N, CHW); returns (N, 4) f32."""
    n, k = a1.shape
    chw = i1.shape[1]
    f = params["wa_t"].shape[1]

    tn, n_pad, vmem_limit = _choose_batch_tile(n, k, chw, f)
    if n_pad != n:
        pad = ((0, n_pad - n), (0, 0))
        a1, a2 = jnp.pad(a1, pad), jnp.pad(a2, pad)
        i1, i2 = jnp.pad(i1, pad), jnp.pad(i2, pad)

    grid = (n_pad // tn,)

    def call(single_buffer_weights):
        wkw = ({"pipeline_mode": pl.Buffered(1)}
               if single_buffer_weights else {})
        x_map = lambda i: (i, 0)   # activations / output tiled over batch rows
        w_map = lambda i: (0, 0)   # weights resident, reused across the grid
        in_specs = [
            pl.BlockSpec((tn, k),   x_map),          # audio_1
            pl.BlockSpec((tn, k),   x_map),          # audio_2
            pl.BlockSpec((tn, chw), x_map),          # img_1 (flattened)
            pl.BlockSpec((tn, chw), x_map),          # img_2 (flattened)
            pl.BlockSpec((k, f),    w_map, **wkw),   # wa_t
            pl.BlockSpec((chw, f),  w_map, **wkw),   # wv_t (dominant weight)
            pl.BlockSpec((f, f),    w_map, **wkw),   # w1 img half (transposed)
            pl.BlockSpec((f, f),    w_map, **wkw),   # w1 aud half (transposed)
            pl.BlockSpec((1, f),    w_map, **wkw),   # ba
            pl.BlockSpec((1, f),    w_map, **wkw),   # bv
            pl.BlockSpec((1, f),    w_map, **wkw),   # b1
            pl.BlockSpec((1, f),    w_map, **wkw),   # w2 (row)
            pl.BlockSpec(memory_space=pltpu.SMEM),   # b2 scalar
        ]
        out_specs = pl.BlockSpec((tn, 4), x_map)
        return pl.pallas_call(
            _av_fused_kernel,
            out_shape=jax.ShapeDtypeStruct((n_pad, 4), jnp.float32),
            grid=grid,
            in_specs=in_specs,
            out_specs=out_specs,
            compiler_params=pltpu.CompilerParams(
                # "parallel" shards the batch grid across both TCs on v7x
                # (no-op on v5e/v6e). Switch to pltpu.CORE_PARALLEL if an
                # xprof trace shows one TensorCore idle.
                dimension_semantics=("parallel",),
                vmem_limit_bytes=vmem_limit),
        )(a1, a2, i1, i2,
          params["wa_t"], params["wv_t"], params["w1i_t"], params["w1a_t"],
          params["ba"], params["bv"], params["b1"], params["w2"], params["b2"])

    try:
        out = call(single_buffer_weights=True)
    except Exception:
        # Fallback for jax versions that reject pipeline_mode=pl.Buffered(1).
        out = call(single_buffer_weights=False)

    return out[:n] if n_pad != n else out


# ---------------------------------------------------------------------------
# AVEncoderBinary forward (thin JAX glue around the fused kernel)
# ---------------------------------------------------------------------------

def av_encoder_binary_forward(params, audio_1, audio_2, img_1, img_2):
    n = audio_1.shape[0]
    bf16 = jnp.bfloat16
    a1 = audio_1.reshape(n, -1).astype(bf16)
    a2 = audio_2.reshape(n, -1).astype(bf16)
    i1 = img_1.reshape(n, -1).astype(bf16)   # NCHW -> (N, C*H*W), torch .view order
    i2 = img_2.reshape(n, -1).astype(bf16)

    out_n4 = fused_av_forward(a1, a2, i1, i2, params)          # (N, 4) f32

    pred = out_n4.reshape(-1)                                   # == torch (N,4).view(-1)
    target = jnp.tile(jnp.array([1, 0, 0, 1], dtype=jnp.int32), (n,))
    return {"pred": pred, "target": target}


def init_params(key, audio_k, img_flat, feat_dim):
    """Weights pre-transposed to (in_features, out_features) so the kernel runs
    NN-form matmuls (no in-kernel transposes), stored bf16 for the MXU fast
    path.  Biases / head weights stay f32 (post-matmul VPU work is f32)."""
    ks = jax.random.split(key, 9)
    s = 0.02
    nrm = jax.random.normal
    bf16, f32 = jnp.bfloat16, jnp.float32
    return {
        # audio backbone: Linear(K -> F)
        "wa_t": (s * nrm(ks[0], (audio_k, feat_dim), f32)).astype(bf16),
        # vision backbone: Linear(C*H*W -> F)
        "wv_t": (s * nrm(ks[1], (img_flat, feat_dim), f32)).astype(bf16),
        # fusion first layer Linear(2F -> F), pre-split + pre-transposed halves
        "w1i_t": (s * nrm(ks[2], (feat_dim, feat_dim), f32)).astype(bf16),  # W1[:, :F].T
        "w1a_t": (s * nrm(ks[3], (feat_dim, feat_dim), f32)).astype(bf16),  # W1[:, F:].T
        # f32 biases / head
        "ba": s * nrm(ks[4], (1, feat_dim), f32),
        "bv": s * nrm(ks[5], (1, feat_dim), f32),
        "b1": s * nrm(ks[6], (1, feat_dim), f32),
        "w2": s * nrm(ks[7], (1, feat_dim), f32),   # final Linear(F->1) weight row
        "b2": s * nrm(ks[8], (1,), f32),
    }


# ---------------------------------------------------------------------------
# Pure-JAX references for correctness
# ---------------------------------------------------------------------------

def _reference_forward_bf16(params, audio_1, audio_2, img_1, img_2):
    """Mirror of the kernel's numerics (bf16 MXU operands, f32 accumulate)."""
    bf16, f32 = jnp.bfloat16, jnp.float32
    n = audio_1.shape[0]
    a1 = audio_1.reshape(n, -1).astype(bf16)
    a2 = audio_2.reshape(n, -1).astype(bf16)
    i1 = img_1.reshape(n, -1).astype(bf16)
    i2 = img_2.reshape(n, -1).astype(bf16)
    dot = lambda x, w: jnp.dot(x, w, preferred_element_type=f32)

    fa1 = dot(a1, params["wa_t"]) + params["ba"]
    fa2 = dot(a2, params["wa_t"]) + params["ba"]
    fi1 = dot(i1, params["wv_t"]) + params["bv"]
    fi2 = dot(i2, params["wv_t"]) + params["bv"]

    def fusion(fi, fa):
        h = jnp.maximum(dot(fi.astype(bf16), params["w1i_t"])
                        + dot(fa.astype(bf16), params["w1a_t"])
                        + params["b1"], 0.0)
        return jnp.sum(h * params["w2"], axis=-1, keepdims=True) + params["b2"][0]

    out = jnp.concatenate([fusion(fi1, fa1), fusion(fi1, fa2),
                           fusion(fi2, fa1), fusion(fi2, fa2)], axis=-1)
    return out.reshape(-1)


def _reference_forward_f32(params, audio_1, audio_2, img_1, img_2):
    """Torch-module semantics in plain f32 (weights upcast) — loose sanity check."""
    f32 = jnp.float32
    n = audio_1.shape[0]
    a1 = audio_1.reshape(n, -1).astype(f32)
    a2 = audio_2.reshape(n, -1).astype(f32)
    i1 = img_1.reshape(n, -1).astype(f32)
    i2 = img_2.reshape(n, -1).astype(f32)
    wa, wv = params["wa_t"].astype(f32), params["wv_t"].astype(f32)
    w1i, w1a = params["w1i_t"].astype(f32), params["w1a_t"].astype(f32)

    fa1 = a1 @ wa + params["ba"]
    fa2 = a2 @ wa + params["ba"]
    fi1 = i1 @ wv + params["bv"]
    fi2 = i2 @ wv + params["bv"]

    def fusion(fi, fa):
        h = jnp.maximum(fi @ w1i + fa @ w1a + params["b1"], 0.0)
        return h @ params["w2"].T + params["b2"][0]

    out = jnp.concatenate([fusion(fi1, fa1), fusion(fi1, fa2),
                           fusion(fi2, fa1), fusion(fi2, fa2)], axis=-1)
    return out.reshape(-1)


if __name__ == "__main__":
    # Small shapes consistent with the module's forward signature.
    N, K = 2, 64            # audio: (N, K)
    C, H, W = 4, 16, 16     # images: (N, C, H, W)
    FEAT = 32               # pr.feat_dim (use >=256, a multiple of 128, for real runs)

    key = jax.random.PRNGKey(0)
    k_a1, k_a2, k_i1, k_i2, k_p = jax.random.split(key, 5)

    audio_1 = jax.random.normal(k_a1, (N, K), jnp.float32)
    audio_2 = jax.random.normal(k_a2, (N, K), jnp.float32)
    img_1 = jax.random.normal(k_i1, (N, C, H, W), jnp.float32)
    img_2 = jax.random.normal(k_i2, (N, C, H, W), jnp.float32)

    params = init_params(k_p, K, C * H * W, FEAT)

    out = av_encoder_binary_forward(params, audio_1, audio_2, img_1, img_2)
    jax.block_until_ready(out)

    assert out["pred"].shape == (4 * N,)
    assert out["target"].shape == (4 * N,)

    # Tight check vs. a pure-JAX mirror of the kernel's bf16/f32 numerics.
    ref_bf16 = _reference_forward_bf16(params, audio_1, audio_2, img_1, img_2)
    assert jnp.allclose(out["pred"], ref_bf16, atol=1e-3, rtol=1e-3), (
        float(jnp.max(jnp.abs(out["pred"] - ref_bf16))))
    # Loose check vs. the torch-semantic f32 path (bf16 rounding only).
    ref_f32 = _reference_forward_f32(params, audio_1, audio_2, img_1, img_2)
    assert jnp.allclose(out["pred"], ref_f32, atol=5e-2, rtol=5e-2)
    assert jnp.array_equal(
        out["target"], jnp.tile(jnp.array([1, 0, 0, 1], jnp.int32), (N,)))

    print("KERNEL_OK")
</pallas_src>

<mosaic_0001>
module attributes {stable_mosaic.version = 11 : i64} {
  func.func @_av_fused_kernel(%arg0: i32, %arg1: memref<2x64xbf16, #tpu.memory_space<vmem>>, %arg2: memref<2x64xbf16, #tpu.memory_space<vmem>>, %arg3: memref<2x1024xbf16, #tpu.memory_space<vmem>>, %arg4: memref<2x1024xbf16, #tpu.memory_space<vmem>>, %arg5: memref<64x32xbf16, #tpu.memory_space<vmem>>, %arg6: memref<1024x32xbf16, #tpu.memory_space<vmem>>, %arg7: memref<32x32xbf16, #tpu.memory_space<vmem>>, %arg8: memref<32x32xbf16, #tpu.memory_space<vmem>>, %arg9: memref<1x32xf32, #tpu.memory_space<vmem>>, %arg10: memref<1x32xf32, #tpu.memory_space<vmem>>, %arg11: memref<1x32xf32, #tpu.memory_space<vmem>>, %arg12: memref<1x32xf32, #tpu.memory_space<vmem>>, %arg13: memref<1xf32, #tpu.memory_space<smem>>, %arg14: memref<2x4xf32, #tpu.memory_space<vmem>>) attributes {dimension_semantics = [#tpu.dimension_semantics<parallel>], iteration_bounds = array<i64: 1>, scalar_prefetch = 0 : i64, scratch_operands = 0 : i64, tpu.core_type = #tpu.core_type<tc>, window_params = [{transform_indices = @transform_0, window_bounds = array<i64: 2, 64>}, {transform_indices = @transform_1, window_bounds = array<i64: 2, 64>}, {transform_indices = @transform_2, window_bounds = array<i64: 2, 1024>}, {transform_indices = @transform_3, window_bounds = array<i64: 2, 1024>}, {pipeline_mode = #tpu.pipeline_mode<synchronous>, transform_indices = @transform_4, window_bounds = array<i64: 64, 32>}, {pipeline_mode = #tpu.pipeline_mode<synchronous>, transform_indices = @transform_5, window_bounds = array<i64: 1024, 32>}, {pipeline_mode = #tpu.pipeline_mode<synchronous>, transform_indices = @transform_6, window_bounds = array<i64: 32, 32>}, {pipeline_mode = #tpu.pipeline_mode<synchronous>, transform_indices = @transform_7, window_bounds = array<i64: 32, 32>}, {pipeline_mode = #tpu.pipeline_mode<synchronous>, transform_indices = @transform_8, window_bounds = array<i64: 1, 32>}, {pipeline_mode = #tpu.pipeline_mode<synchronous>, transform_indices = @transform_9, window_bounds = array<i64: 1, 32>}, {pipeline_mode = #tpu.pipeline_mode<synchronous>, transform_indices = @transform_10, window_bounds = array<i64: 1, 32>}, {pipeline_mode = #tpu.pipeline_mode<synchronous>, transform_indices = @transform_11, window_bounds = array<i64: 1, 32>}, {transform_indices = @transform_12, window_bounds = array<i64: 1>}, {transform_indices = @transform_13, window_bounds = array<i64: 2, 4>}]} {
    %c0 = arith.constant 0 : index
    %c0_0 = arith.constant 0 : index
    %0 = vector.load %arg9[%c0, %c0_0] : memref<1x32xf32, #tpu.memory_space<vmem>>, vector<1x32xf32>
    %c0_1 = arith.constant 0 : index
    %c0_2 = arith.constant 0 : index
    %1 = vector.load %arg10[%c0_1, %c0_2] : memref<1x32xf32, #tpu.memory_space<vmem>>, vector<1x32xf32>
    %c0_3 = arith.constant 0 : index
    %c0_4 = arith.constant 0 : index
    %2 = vector.load %arg11[%c0_3, %c0_4] : memref<1x32xf32, #tpu.memory_space<vmem>>, vector<1x32xf32>
    %c0_5 = arith.constant 0 : index
    %c0_6 = arith.constant 0 : index
    %3 = vector.load %arg12[%c0_5, %c0_6] : memref<1x32xf32, #tpu.memory_space<vmem>>, vector<1x32xf32>
    %c0_7 = arith.constant 0 : index
    %4 = memref.load %arg13[%c0_7] : memref<1xf32, #tpu.memory_space<smem>>
    %c0_8 = arith.constant 0 : index
    %c0_9 = arith.constant 0 : index
    %5 = vector.load %arg7[%c0_8, %c0_9] : memref<32x32xbf16, #tpu.memory_space<vmem>>, vector<32x32xbf16>
    %c0_10 = arith.constant 0 : index
    %c0_11 = arith.constant 0 : index
    %6 = vector.load %arg8[%c0_10, %c0_11] : memref<32x32xbf16, #tpu.memory_space<vmem>>, vector<32x32xbf16>
    %c0_12 = arith.constant 0 : index
    %c0_13 = arith.constant 0 : index
    %7 = vector.load %arg3[%c0_12, %c0_13] : memref<2x1024xbf16, #tpu.memory_space<vmem>>, vector<2x1024xbf16>
    %c0_14 = arith.constant 0 : index
    %c0_15 = arith.constant 0 : index
    %8 = vector.load %arg6[%c0_14, %c0_15] : memref<1024x32xbf16, #tpu.memory_space<vmem>>, vector<1024x32xbf16>
    %cst = arith.constant dense<0.000000e+00> : vector<2x32xf32>
    %9 = tpu.matmul %7, %8, %cst {dimension_numbers = #tpu.dot_dimension_numbers<[1], [0], [0], [1], [0, 0, 1, 1], [], []>} : vector<2x1024xbf16>, vector<1024x32xbf16>, vector<2x32xf32> -> vector<2x32xf32>
    %10 = vector.broadcast %1 : vector<1x32xf32> to vector<2x32xf32>
    %11 = arith.addf %9, %10 : vector<2x32xf32>
    %12 = arith.truncf %11 : vector<2x32xf32> to vector<2x32xbf16>
    %cst_16 = arith.constant dense<0.000000e+00> : vector<2x32xf32>
    %13 = tpu.matmul %12, %5, %cst_16 {dimension_numbers = #tpu.dot_dimension_numbers<[1], [0], [0], [1], [0, 0, 1, 1], [], []>} : vector<2x32xbf16>, vector<32x32xbf16>, vector<2x32xf32> -> vector<2x32xf32>
    %c0_17 = arith.constant 0 : index
    %c0_18 = arith.constant 0 : index
    %14 = vector.load %arg4[%c0_17, %c0_18] : memref<2x1024xbf16, #tpu.memory_space<vmem>>, vector<2x1024xbf16>
    %c0_19 = arith.constant 0 : index
    %c0_20 = arith.constant 0 : index
    %15 = vector.load %arg6[%c0_19, %c0_20] : memref<1024x32xbf16, #tpu.memory_space<vmem>>, vector<1024x32xbf16>
    %cst_21 = arith.constant dense<0.000000e+00> : vector<2x32xf32>
    %16 = tpu.matmul %14, %15, %cst_21 {dimension_numbers = #tpu.dot_dimension_numbers<[1], [0], [0], [1], [0, 0, 1, 1], [], []>} : vector<2x1024xbf16>, vector<1024x32xbf16>, vector<2x32xf32> -> vector<2x32xf32>
    %17 = vector.broadcast %1 : vector<1x32xf32> to vector<2x32xf32>
    %18 = arith.addf %16, %17 : vector<2x32xf32>
    %19 = arith.truncf %18 : vector<2x32xf32> to vector<2x32xbf16>
    %cst_22 = arith.constant dense<0.000000e+00> : vector<2x32xf32>
    %20 = tpu.matmul %19, %5, %cst_22 {dimension_numbers = #tpu.dot_dimension_numbers<[1], [0], [0], [1], [0, 0, 1, 1], [], []>} : vector<2x32xbf16>, vector<32x32xbf16>, vector<2x32xf32> -> vector<2x32xf32>
    %c0_23 = arith.constant 0 : index
    %c0_24 = arith.constant 0 : index
    %21 = vector.load %arg1[%c0_23, %c0_24] : memref<2x64xbf16, #tpu.memory_space<vmem>>, vector<2x64xbf16>
    %c0_25 = arith.constant 0 : index
    %c0_26 = arith.constant 0 : index
    %22 = vector.load %arg5[%c0_25, %c0_26] : memref<64x32xbf16, #tpu.memory_space<vmem>>, vector<64x32xbf16>
    %cst_27 = arith.constant dense<0.000000e+00> : vector<2x32xf32>
    %23 = tpu.matmul %21, %22, %cst_27 {dimension_numbers = #tpu.dot_dimension_numbers<[1], [0], [0], [1], [0, 0, 1, 1], [], []>} : vector<2x64xbf16>, vector<64x32xbf16>, vector<2x32xf32> -> vector<2x32xf32>
    %24 = vector.broadcast %0 : vector<1x32xf32> to vector<2x32xf32>
    %25 = arith.addf %23, %24 : vector<2x32xf32>
    %26 = arith.truncf %25 : vector<2x32xf32> to vector<2x32xbf16>
    %cst_28 = arith.constant dense<0.000000e+00> : vector<2x32xf32>
    %27 = tpu.matmul %26, %6, %cst_28 {dimension_numbers = #tpu.dot_dimension_numbers<[1], [0], [0], [1], [0, 0, 1, 1], [], []>} : vector<2x32xbf16>, vector<32x32xbf16>, vector<2x32xf32> -> vector<2x32xf32>
    %c0_29 = arith.constant 0 : index
    %c0_30 = arith.constant 0 : index
    %28 = vector.load %arg2[%c0_29, %c0_30] : memref<2x64xbf16, #tpu.memory_space<vmem>>, vector<2x64xbf16>
    %c0_31 = arith.constant 0 : index
    %c0_32 = arith.constant 0 : index
    %29 = vector.load %arg5[%c0_31, %c0_32] : memref<64x32xbf16, #tpu.memory_space<vmem>>, vector<64x32xbf16>
    %cst_33 = arith.constant dense<0.000000e+00> : vector<2x32xf32>
    %30 = tpu.matmul %28, %29, %cst_33 {dimension_numbers = #tpu.dot_dimension_numbers<[1], [0], [0], [1], [0, 0, 1, 1], [], []>} : vector<2x64xbf16>, vector<64x32xbf16>, vector<2x32xf32> -> vector<2x32xf32>
    %31 = vector.broadcast %0 : vector<1x32xf32> to vector<2x32xf32>
    %32 = arith.addf %30, %31 : vector<2x32xf32>
    %33 = arith.truncf %32 : vector<2x32xf32> to vector<2x32xbf16>
    %cst_34 = arith.constant dense<0.000000e+00> : vector<2x32xf32>
    %34 = tpu.matmul %33, %6, %cst_34 {dimension_numbers = #tpu.dot_dimension_numbers<[1], [0], [0], [1], [0, 0, 1, 1], [], []>} : vector<2x32xbf16>, vector<32x32xbf16>, vector<2x32xf32> -> vector<2x32xf32>
    %35 = arith.addf %13, %27 : vector<2x32xf32>
    %36 = vector.broadcast %2 : vector<1x32xf32> to vector<2x32xf32>
    %37 = arith.addf %35, %36 : vector<2x32xf32>
    %cst_35 = arith.constant 0.000000e+00 : f32
    %38 = vector.broadcast %cst_35 : f32 to vector<2x32xf32>
    %39 = arith.maximumf %37, %38 : vector<2x32xf32>
    %40 = vector.broadcast %3 : vector<1x32xf32> to vector<2x32xf32>
    %41 = arith.mulf %39, %40 : vector<2x32xf32>
    %cst_36 = arith.constant dense<0.000000e+00> : vector<2xf32>
    %42 = vector.multi_reduction <add>, %41, %cst_36 [1] : vector<2x32xf32> to vector<2xf32>
    %43 = vector.shape_cast %42 : vector<2xf32> to vector<2x1xf32>
    %44 = vector.broadcast %4 : f32 to vector<2x1xf32>
    %45 = arith.addf %43, %44 : vector<2x1xf32>
    %46 = arith.addf %13, %34 : vector<2x32xf32>
    %47 = vector.broadcast %2 : vector<1x32xf32> to vector<2x32xf32>
    %48 = arith.addf %46, %47 : vector<2x32xf32>
    %cst_37 = arith.constant 0.000000e+00 : f32
    %49 = vector.broadcast %cst_37 : f32 to vector<2x32xf32>
    %50 = arith.maximumf %48, %49 : vector<2x32xf32>
    %51 = vector.broadcast %3 : vector<1x32xf32> to vector<2x32xf32>
    %52 = arith.mulf %50, %51 : vector<2x32xf32>
    %cst_38 = arith.constant dense<0.000000e+00> : vector<2xf32>
    %53 = vector.multi_reduction <add>, %52, %cst_38 [1] : vector<2x32xf32> to vector<2xf32>
    %54 = vector.shape_cast %53 : vector<2xf32> to vector<2x1xf32>
    %55 = vector.broadcast %4 : f32 to vector<2x1xf32>
    %56 = arith.addf %54, %55 : vector<2x1xf32>
    %57 = arith.addf %20, %27 : vector<2x32xf32>
    %58 = vector.broadcast %2 : vector<1x32xf32> to vector<2x32xf32>
    %59 = arith.addf %57, %58 : vector<2x32xf32>
    %cst_39 = arith.constant 0.000000e+00 : f32
    %60 = vector.broadcast %cst_39 : f32 to vector<2x32xf32>
    %61 = arith.maximumf %59, %60 : vector<2x32xf32>
    %62 = vector.broadcast %3 : vector<1x32xf32> to vector<2x32xf32>
    %63 = arith.mulf %61, %62 : vector<2x32xf32>
    %cst_40 = arith.constant dense<0.000000e+00> : vector<2xf32>
    %64 = vector.multi_reduction <add>, %63, %cst_40 [1] : vector<2x32xf32> to vector<2xf32>
    %65 = vector.shape_cast %64 : vector<2xf32> to vector<2x1xf32>
    %66 = vector.broadcast %4 : f32 to vector<2x1xf32>
    %67 = arith.addf %65, %66 : vector<2x1xf32>
    %68 = arith.addf %20, %34 : vector<2x32xf32>
    %69 = vector.broadcast %2 : vector<1x32xf32> to vector<2x32xf32>
    %70 = arith.addf %68, %69 : vector<2x32xf32>
    %cst_41 = arith.constant 0.000000e+00 : f32
    %71 = vector.broadcast %cst_41 : f32 to vector<2x32xf32>
    %72 = arith.maximumf %70, %71 : vector<2x32xf32>
    %73 = vector.broadcast %3 : vector<1x32xf32> to vector<2x32xf32>
    %74 = arith.mulf %72, %73 : vector<2x32xf32>
    %cst_42 = arith.constant dense<0.000000e+00> : vector<2xf32>
    %75 = vector.multi_reduction <add>, %74, %cst_42 [1] : vector<2x32xf32> to vector<2xf32>
    %76 = vector.shape_cast %75 : vector<2xf32> to vector<2x1xf32>
    %77 = vector.broadcast %4 : f32 to vector<2x1xf32>
    %78 = arith.addf %76, %77 : vector<2x1xf32>
    %79 = tpu.concatenate %45, %56, %67, %78 in 1 : vector<2x1xf32>, vector<2x1xf32>, vector<2x1xf32>, vector<2x1xf32> -> vector<2x4xf32>
    %c0_43 = arith.constant 0 : index
    %c0_44 = arith.constant 0 : index
    %80 = vector.load %arg14[%c0_43, %c0_44] : memref<2x4xf32, #tpu.memory_space<vmem>>, vector<2x4xf32>
    tpu.vector_store %arg14[%c0_43, %c0_44], %79 {strides = array<i32>} : memref<2x4xf32, #tpu.memory_space<vmem>>, vector<2x4xf32>,
    return
  }
  func.func @transform_0(%arg0: i32) -> (i32, i32) {
    %c0_i32 = arith.constant 0 : i32
    %c0_i32_0 = arith.constant 0 : i32
    return %arg0, %c0_i32 : i32, i32
  }
  func.func @transform_1(%arg0: i32) -> (i32, i32) {
    %c0_i32 = arith.constant 0 : i32
    %c0_i32_0 = arith.constant 0 : i32
    return %arg0, %c0_i32 : i32, i32
  }
  func.func @transform_2(%arg0: i32) -> (i32, i32) {
    %c0_i32 = arith.constant 0 : i32
    %c0_i32_0 = arith.constant 0 : i32
    return %arg0, %c0_i32 : i32, i32
  }
  func.func @transform_3(%arg0: i32) -> (i32, i32) {
    %c0_i32 = arith.constant 0 : i32
    %c0_i32_0 = arith.constant 0 : i32
    return %arg0, %c0_i32 : i32, i32
  }
  func.func @transform_4(%arg0: i32) -> (i32, i32) {
    %c0_i32 = arith.constant 0 : i32
    %c0_i32_0 = arith.constant 0 : i32
    %c0_i32_1 = arith.constant 0 : i32
    return %c0_i32, %c0_i32_0 : i32, i32
  }
  func.func @transform_5(%arg0: i32) -> (i32, i32) {
    %c0_i32 = arith.constant 0 : i32
    %c0_i32_0 = arith.constant 0 : i32
    %c0_i32_1 = arith.constant 0 : i32
    return %c0_i32, %c0_i32_0 : i32, i32
  }
  func.func @transform_6(%arg0: i32) -> (i32, i32) {
    %c0_i32 = arith.constant 0 : i32
    %c0_i32_0 = arith.constant 0 : i32
    %c0_i32_1 = arith.constant 0 : i32
    return %c0_i32, %c0_i32_0 : i32, i32
  }
  func.func @transform_7(%arg0: i32) -> (i32, i32) {
    %c0_i32 = arith.constant 0 : i32
    %c0_i32_0 = arith.constant 0 : i32
    %c0_i32_1 = arith.constant 0 : i32
    return %c0_i32, %c0_i32_0 : i32, i32
  }
  func.func @transform_8(%arg0: i32) -> (i32, i32) {
    %c0_i32 = arith.constant 0 : i32
    %c0_i32_0 = arith.constant 0 : i32
    %c0_i32_1 = arith.constant 0 : i32
    return %c0_i32, %c0_i32_0 : i32, i32
  }
  func.func @transform_9(%arg0: i32) -> (i32, i32) {
    %c0_i32 = arith.constant 0 : i32
    %c0_i32_0 = arith.constant 0 : i32
    %c0_i32_1 = arith.constant 0 : i32
    return %c0_i32, %c0_i32_0 : i32, i32
  }
  func.func @transform_10(%arg0: i32) -> (i32, i32) {
    %c0_i32 = arith.constant 0 : i32
    %c0_i32_0 = arith.constant 0 : i32
    %c0_i32_1 = arith.constant 0 : i32
    return %c0_i32, %c0_i32_0 : i32, i32
  }
  func.func @transform_11(%arg0: i32) -> (i32, i32) {
    %c0_i32 = arith.constant 0 : i32
    %c0_i32_0 = arith.constant 0 : i32
    %c0_i32_1 = arith.constant 0 : i32
    return %c0_i32, %c0_i32_0 : i32, i32
  }
  func.func @transform_12(%arg0: i32) -> i32 {
    %c0_i32 = arith.constant 0 : i32
    %c0_i32_0 = arith.constant 0 : i32
    return %c0_i32 : i32
  }
  func.func @transform_13(%arg0: i32) -> (i32, i32) {
    %c0_i32 = arith.constant 0 : i32
    %c0_i32_0 = arith.constant 0 : i32
    return %arg0, %c0_i32 : i32, i32
  }
}

module attributes {stable_mosaic.version = 11 : i64} {
  func.func @_av_fused_kernel(%arg0: i32, %arg1: memref<2x64xbf16, #tpu.memory_space<vmem>>, %arg2: memref<2x64xbf16, #tpu.memory_space<vmem>>, %arg3: memref<2x1024xbf16, #tpu.memory_space<vmem>>, %arg4: memref<2x1024xbf16, #tpu.memory_space<vmem>>, %arg5: memref<64x32xbf16, #tpu.memory_space<vmem>>, %arg6: memref<1024x32xbf16, #tpu.memory_space<vmem>>, %arg7: memref<32x32xbf16, #tpu.memory_space<vmem>>, %arg8: memref<32x32xbf16, #tpu.memory_space<vmem>>, %arg9: memref<1x32xf32, #tpu.memory_space<vmem>>, %arg10: memref<1x32xf32, #tpu.memory_space<vmem>>, %arg11: memref<1x32xf32, #tpu.memory_space<vmem>>, %arg12: memref<1x32xf32, #tpu.memory_space<vmem>>, %arg13: memref<1xf32, #tpu.memory_space<smem>>, %arg14: memref<2x4xf32, #tpu.memory_space<vmem>>) attributes {dimension_semantics = [#tpu.dimension_semantics<parallel>], iteration_bounds = array<i64: 1>, scalar_prefetch = 0 : i64, scratch_operands = 0 : i64, tpu.core_type = #tpu.core_type<tc>, window_params = [{transform_indices = @transform_0, window_bounds = array<i64: 2, 64>}, {transform_indices = @transform_1, window_bounds = array<i64: 2, 64>}, {transform_indices = @transform_2, window_bounds = array<i64: 2, 1024>}, {transform_indices = @transform_3, window_bounds = array<i64: 2, 1024>}, {pipeline_mode = #tpu.pipeline_mode<synchronous>, transform_indices = @transform_4, window_bounds = array<i64: 64, 32>}, {pipeline_mode = #tpu.pipeline_mode<synchronous>, transform_indices = @transform_5, window_bounds = array<i64: 1024, 32>}, {pipeline_mode = #tpu.pipeline_mode<synchronous>, transform_indices = @transform_6, window_bounds = array<i64: 32, 32>}, {pipeline_mode = #tpu.pipeline_mode<synchronous>, transform_indices = @transform_7, window_bounds = array<i64: 32, 32>}, {pipeline_mode = #tpu.pipeline_mode<synchronous>, transform_indices = @transform_8, window_bounds = array<i64: 1, 32>}, {pipeline_mode = #tpu.pipeline_mode<synchronous>, transform_indices = @transform_9, window_bounds = array<i64: 1, 32>}, {pipeline_mode = #tpu.pipeline_mode<synchronous>, transform_indices = @transform_10, window_bounds = array<i64: 1, 32>}, {pipeline_mode = #tpu.pipeline_mode<synchronous>, transform_indices = @transform_11, window_bounds = array<i64: 1, 32>}, {transform_indices = @transform_12, window_bounds = array<i64: 1>}, {transform_indices = @transform_13, window_bounds = array<i64: 2, 4>}]} {
    %c0 = arith.constant 0 : index
    %c0_0 = arith.constant 0 : index
    %0 = vector.load %arg9[%c0, %c0_0] : memref<1x32xf32, #tpu.memory_space<vmem>>, vector<1x32xf32>
    %c0_1 = arith.constant 0 : index
    %c0_2 = arith.constant 0 : index
    %1 = vector.load %arg10[%c0_1, %c0_2] : memref<1x32xf32, #tpu.memory_space<vmem>>, vector<1x32xf32>
    %c0_3 = arith.constant 0 : index
    %c0_4 = arith.constant 0 : index
    %2 = vector.load %arg11[%c0_3, %c0_4] : memref<1x32xf32, #tpu.memory_space<vmem>>, vector<1x32xf32>
    %c0_5 = arith.constant 0 : index
    %c0_6 = arith.constant 0 : index
    %3 = vector.load %arg12[%c0_5, %c0_6] : memref<1x32xf32, #tpu.memory_space<vmem>>, vector<1x32xf32>
    %c0_7 = arith.constant 0 : index
    %4 = memref.load %arg13[%c0_7] : memref<1xf32, #tpu.memory_space<smem>>
    %c0_8 = arith.constant 0 : index
    %c0_9 = arith.constant 0 : index
    %5 = vector.load %arg7[%c0_8, %c0_9] : memref<32x32xbf16, #tpu.memory_space<vmem>>, vector<32x32xbf16>
    %c0_10 = arith.constant 0 : index
    %c0_11 = arith.constant 0 : index
    %6 = vector.load %arg8[%c0_10, %c0_11] : memref<32x32xbf16, #tpu.memory_space<vmem>>, vector<32x32xbf16>
    %c0_12 = arith.constant 0 : index
    %c0_13 = arith.constant 0 : index
    %7 = vector.load %arg3[%c0_12, %c0_13] : memref<2x1024xbf16, #tpu.memory_space<vmem>>, vector<2x1024xbf16>
    %c0_14 = arith.constant 0 : index
    %c0_15 = arith.constant 0 : index
    %8 = vector.load %arg6[%c0_14, %c0_15] : memref<1024x32xbf16, #tpu.memory_space<vmem>>, vector<1024x32xbf16>
    %cst = arith.constant dense<0.000000e+00> : vector<2x32xf32>
    %9 = tpu.matmul %7, %8, %cst {dimension_numbers = #tpu.dot_dimension_numbers<[1], [0], [0], [1], [0, 0, 1, 1], [], []>} : vector<2x1024xbf16>, vector<1024x32xbf16>, vector<2x32xf32> -> vector<2x32xf32>
    %10 = vector.broadcast %1 : vector<1x32xf32> to vector<2x32xf32>
    %11 = arith.addf %9, %10 : vector<2x32xf32>
    %12 = arith.truncf %11 : vector<2x32xf32> to vector<2x32xbf16>
    %cst_16 = arith.constant dense<0.000000e+00> : vector<2x32xf32>
    %13 = tpu.matmul %12, %5, %cst_16 {dimension_numbers = #tpu.dot_dimension_numbers<[1], [0], [0], [1], [0, 0, 1, 1], [], []>} : vector<2x32xbf16>, vector<32x32xbf16>, vector<2x32xf32> -> vector<2x32xf32>
    %c0_17 = arith.constant 0 : index
    %c0_18 = arith.constant 0 : index
    %14 = vector.load %arg4[%c0_17, %c0_18] : memref<2x1024xbf16, #tpu.memory_space<vmem>>, vector<2x1024xbf16>
    %c0_19 = arith.constant 0 : index
    %c0_20 = arith.constant 0 : index
    %15 = vector.load %arg6[%c0_19, %c0_20] : memref<1024x32xbf16, #tpu.memory_space<vmem>>, vector<1024x32xbf16>
    %cst_21 = arith.constant dense<0.000000e+00> : vector<2x32xf32>
    %16 = tpu.matmul %14, %15, %cst_21 {dimension_numbers = #tpu.dot_dimension_numbers<[1], [0], [0], [1], [0, 0, 1, 1], [], []>} : vector<2x1024xbf16>, vector<1024x32xbf16>, vector<2x32xf32> -> vector<2x32xf32>
    %17 = vector.broadcast %1 : vector<1x32xf32> to vector<2x32xf32>
    %18 = arith.addf %16, %17 : vector<2x32xf32>
    %19 = arith.truncf %18 : vector<2x32xf32> to vector<2x32xbf16>
    %cst_22 = arith.constant dense<0.000000e+00> : vector<2x32xf32>
    %20 = tpu.matmul %19, %5, %cst_22 {dimension_numbers = #tpu.dot_dimension_numbers<[1], [0], [0], [1], [0, 0, 1, 1], [], []>} : vector<2x32xbf16>, vector<32x32xbf16>, vector<2x32xf32> -> vector<2x32xf32>
    %c0_23 = arith.constant 0 : index
    %c0_24 = arith.constant 0 : index
    %21 = vector.load %arg1[%c0_23, %c0_24] : memref<2x64xbf16, #tpu.memory_space<vmem>>, vector<2x64xbf16>
    %c0_25 = arith.constant 0 : index
    %c0_26 = arith.constant 0 : index
    %22 = vector.load %arg5[%c0_25, %c0_26] : memref<64x32xbf16, #tpu.memory_space<vmem>>, vector<64x32xbf16>
    %cst_27 = arith.constant dense<0.000000e+00> : vector<2x32xf32>
    %23 = tpu.matmul %21, %22, %cst_27 {dimension_numbers = #tpu.dot_dimension_numbers<[1], [0], [0], [1], [0, 0, 1, 1], [], []>} : vector<2x64xbf16>, vector<64x32xbf16>, vector<2x32xf32> -> vector<2x32xf32>
    %24 = vector.broadcast %0 : vector<1x32xf32> to vector<2x32xf32>
    %25 = arith.addf %23, %24 : vector<2x32xf32>
    %26 = arith.truncf %25 : vector<2x32xf32> to vector<2x32xbf16>
    %cst_28 = arith.constant dense<0.000000e+00> : vector<2x32xf32>
    %27 = tpu.matmul %26, %6, %cst_28 {dimension_numbers = #tpu.dot_dimension_numbers<[1], [0], [0], [1], [0, 0, 1, 1], [], []>} : vector<2x32xbf16>, vector<32x32xbf16>, vector<2x32xf32> -> vector<2x32xf32>
    %c0_29 = arith.constant 0 : index
    %c0_30 = arith.constant 0 : index
    %28 = vector.load %arg2[%c0_29, %c0_30] : memref<2x64xbf16, #tpu.memory_space<vmem>>, vector<2x64xbf16>
    %c0_31 = arith.constant 0 : index
    %c0_32 = arith.constant 0 : index
    %29 = vector.load %arg5[%c0_31, %c0_32] : memref<64x32xbf16, #tpu.memory_space<vmem>>, vector<64x32xbf16>
    %cst_33 = arith.constant dense<0.000000e+00> : vector<2x32xf32>
    %30 = tpu.matmul %28, %29, %cst_33 {dimension_numbers = #tpu.dot_dimension_numbers<[1], [0], [0], [1], [0, 0, 1, 1], [], []>} : vector<2x64xbf16>, vector<64x32xbf16>, vector<2x32xf32> -> vector<2x32xf32>
    %31 = vector.broadcast %0 : vector<1x32xf32> to vector<2x32xf32>
    %32 = arith.addf %30, %31 : vector<2x32xf32>
    %33 = arith.truncf %32 : vector<2x32xf32> to vector<2x32xbf16>
    %cst_34 = arith.constant dense<0.000000e+00> : vector<2x32xf32>
    %34 = tpu.matmul %33, %6, %cst_34 {dimension_numbers = #tpu.dot_dimension_numbers<[1], [0], [0], [1], [0, 0, 1, 1], [], []>} : vector<2x32xbf16>, vector<32x32xbf16>, vector<2x32xf32> -> vector<2x32xf32>
    %35 = arith.addf %13, %27 : vector<2x32xf32>
    %36 = vector.broadcast %2 : vector<1x32xf32> to vector<2x32xf32>
    %37 = arith.addf %35, %36 : vector<2x32xf32>
    %cst_35 = arith.constant 0.000000e+00 : f32
    %38 = vector.broadcast %cst_35 : f32 to vector<2x32xf32>
    %39 = arith.maximumf %37, %38 : vector<2x32xf32>
    %40 = vector.broadcast %3 : vector<1x32xf32> to vector<2x32xf32>
    %41 = arith.mulf %39, %40 : vector<2x32xf32>
    %cst_36 = arith.constant dense<0.000000e+00> : vector<2xf32>
    %42 = vector.multi_reduction <add>, %41, %cst_36 [1] : vector<2x32xf32> to vector<2xf32>
    %43 = vector.shape_cast %42 : vector<2xf32> to vector<2x1xf32>
    %44 = vector.broadcast %4 : f32 to vector<2x1xf32>
    %45 = arith.addf %43, %44 : vector<2x1xf32>
    %46 = arith.addf %13, %34 : vector<2x32xf32>
    %47 = vector.broadcast %2 : vector<1x32xf32> to vector<2x32xf32>
    %48 = arith.addf %46, %47 : vector<2x32xf32>
    %cst_37 = arith.constant 0.000000e+00 : f32
    %49 = vector.broadcast %cst_37 : f32 to vector<2x32xf32>
    %50 = arith.maximumf %48, %49 : vector<2x32xf32>
    %51 = vector.broadcast %3 : vector<1x32xf32> to vector<2x32xf32>
    %52 = arith.mulf %50, %51 : vector<2x32xf32>
    %cst_38 = arith.constant dense<0.000000e+00> : vector<2xf32>
    %53 = vector.multi_reduction <add>, %52, %cst_38 [1] : vector<2x32xf32> to vector<2xf32>
    %54 = vector.shape_cast %53 : vector<2xf32> to vector<2x1xf32>
    %55 = vector.broadcast %4 : f32 to vector<2x1xf32>
    %56 = arith.addf %54, %55 : vector<2x1xf32>
    %57 = arith.addf %20, %27 : vector<2x32xf32>
    %58 = vector.broadcast %2 : vector<1x32xf32> to vector<2x32xf32>
    %59 = arith.addf %57, %58 : vector<2x32xf32>
    %cst_39 = arith.constant 0.000000e+00 : f32
    %60 = vector.broadcast %cst_39 : f32 to vector<2x32xf32>
    %61 = arith.maximumf %59, %60 : vector<2x32xf32>
    %62 = vector.broadcast %3 : vector<1x32xf32> to vector<2x32xf32>
    %63 = arith.mulf %61, %62 : vector<2x32xf32>
    %cst_40 = arith.constant dense<0.000000e+00> : vector<2xf32>
    %64 = vector.multi_reduction <add>, %63, %cst_40 [1] : vector<2x32xf32> to vector<2xf32>
    %65 = vector.shape_cast %64 : vector<2xf32> to vector<2x1xf32>
    %66 = vector.broadcast %4 : f32 to vector<2x1xf32>
    %67 = arith.addf %65, %66 : vector<2x1xf32>
    %68 = arith.addf %20, %34 : vector<2x32xf32>
    %69 = vector.broadcast %2 : vector<1x32xf32> to vector<2x32xf32>
    %70 = arith.addf %68, %69 : vector<2x32xf32>
    %cst_41 = arith.constant 0.000000e+00 : f32
    %71 = vector.broadcast %cst_41 : f32 to vector<2x32xf32>
    %72 = arith.maximumf %70, %71 : vector<2x32xf32>
    %73 = vector.broadcast %3 : vector<1x32xf32> to vector<2x32xf32>
    %74 = arith.mulf %72, %73 : vector<2x32xf32>
    %cst_42 = arith.constant dense<0.000000e+00> : vector<2xf32>
    %75 = vector.multi_reduction <add>, %74, %cst_42 [1] : vector<2x32xf32> to vector<2xf32>
    %76 = vector.shape_cast %75 : vector<2xf32> to vector<2x1xf32>
    %77 = vector.broadcast %4 : f32 to vector<2x1xf32>
    %78 = arith.addf %76, %77 : vector<2x1xf32>
    %79 = tpu.concatenate %45, %56, %67, %78 in 1 : vector<2x1xf32>, vector<2x1xf32>, vector<2x1xf32>, vector<2x1xf32> -> vector<2x4xf32>
    %c0_43 = arith.constant 0 : index
    %c0_44 = arith.constant 0 : index
    %80 = vector.load %arg14[%c0_43, %c0_44] : memref<2x4xf32, #tpu.memory_space<vmem>>, vector<2x4xf32>
    tpu.vector_store %arg14[%c0_43, %c0_44], %79 {strides = array<i32>} : memref<2x4xf32, #tpu.memory_space<vmem>>, vector<2x4xf32>,
    return
  }
  func.func @transform_0(%arg0: i32) -> (i32, i32) {
    %c0_i32 = arith.constant 0 : i32
    %c0_i32_0 = arith.constant 0 : i32
    return %arg0, %c0_i32 : i32, i32
  }
  func.func @transform_1(%arg0: i32) -> (i32, i32) {
    %c0_i32 = arith.constant 0 : i32
    %c0_i32_0 = arith.constant 0 : i32
    return %arg0, %c0_i32 : i32, i32
  }
  func.func @transform_2(%arg0: i32) -> (i32, i32) {
    %c0_i32 = arith.constant 0 : i32
    %c0_i32_0 = arith.constant 0 : i32
    return %arg0, %c0_i32 : i32, i32
  }
  func.func @transform_3(%arg0: i32) -> (i32, i32) {
    %c0_i32 = arith.constant 0 : i32
    %c0_i32_0 = arith.constant 0 : i32
    return %arg0, %c0_i32 : i32, i32
  }
  func.func @transform_4(%arg0: i32) -> (i32, i32) {
    %c0_i32 = arith.constant 0 : i32
    %c0_i32_0 = arith.constant 0 : i32
    %c0_i32_1 = arith.constant 0 : i32
    return %c0_i32, %c0_i32_0 : i32, i32
  }
  func.func @transform_5(%arg0: i32) -> (i32, i32) {
    %c0_i32 = arith.constant 0 : i32
    %c0_i32_0 = arith.constant 0 : i32
    %c0_i32_1 = arith.constant 0 : i32
    return %c0_i32, %c0_i32_0 : i32, i32
  }
  func.func @transform_6(%arg0: i32) -> (i32, i32) {
    %c0_i32 = arith.constant 0 : i32
    %c0_i32_0 = arith.constant 0 : i32
    %c0_i32_1 = arith.constant 0 : i32
    return %c0_i32, %c0_i32_0 : i32, i32
  }
  func.func @transform_7(%arg0: i32) -> (i32, i32) {
    %c0_i32 = arith.constant 0 : i32
    %c0_i32_0 = arith.constant 0 : i32
    %c0_i32_1 = arith.constant 0 : i32
    return %c0_i32, %c0_i32_0 : i32, i32
  }
  func.func @transform_8(%arg0: i32) -> (i32, i32) {
    %c0_i32 = arith.constant 0 : i32
    %c0_i32_0 = arith.constant 0 : i32
    %c0_i32_1 = arith.constant 0 : i32
    return %c0_i32, %c0_i32_0 : i32, i32
  }
  func.func @transform_9(%arg0: i32) -> (i32, i32) {
    %c0_i32 = arith.constant 0 : i32
    %c0_i32_0 = arith.constant 0 : i32
    %c0_i32_1 = arith.constant 0 : i32
    return %c0_i32, %c0_i32_0 : i32, i32
  }
  func.func @transform_10(%arg0: i32) -> (i32, i32) {
    %c0_i32 = arith.constant 0 : i32
    %c0_i32_0 = arith.constant 0 : i32
    %c0_i32_1 = arith.constant 0 : i32
    return %c0_i32, %c0_i32_0 : i32, i32
  }
  func.func @transform_11(%arg0: i32) -> (i32, i32) {
    %c0_i32 = arith.constant 0 : i32
    %c0_i32_0 = arith.constant 0 : i32
    %c0_i32_1 = arith.constant 0 : i32
    return %c0_i32, %c0_i32_0 : i32, i32
  }
  func.func @transform_12(%arg0: i32) -> i32 {
    %c0_i32 = arith.constant 0 : i32
    %c0_i32_0 = arith.constant 0 : i32
    return %c0_i32 : i32
  }
  func.func @transform_13(%arg0: i32) -> (i32, i32) {
    %c0_i32 = arith.constant 0 : i32
    %c0_i32_0 = arith.constant 0 : i32
    return %arg0, %c0_i32 : i32, i32
  }
}

</mosaic_0001>

<llo_original>
// kernel: tpu_custom_call.1
$region0: #{tpu_custom_call.1}
  #allocation0 [shape = 'u32[]', space=smem, size = 0x4, offset = 0x4, fixed_abs, tag = 'smem constant byte address 0x4 - core index']
  #allocation1 [shape = 'u32[144,128]{1,0:T(1,128)}', space=vmem, size = 0x12000, scoped, tag = 'internal scratch']
  #allocation2 [shape = 'f32[1]{0:T(128)S(6)}', space=smem, size = 0x200, scoped, tag = 'scoped memory for tpu_custom_call.1']
  %s0 = inlined_call_operand.vmem [shape: bf16[2,64], index: 0, kind: input, shape index: {}]
  %s1 = inlined_call_operand.vmem [shape: bf16[2,64], index: 1, kind: input, shape index: {}]
  %s2 = inlined_call_operand.vmem [shape: bf16[2,1024], index: 2, kind: input, shape index: {}]
  %s3 = inlined_call_operand.vmem [shape: bf16[2,1024], index: 3, kind: input, shape index: {}]
  %s4 = inlined_call_operand.vmem [shape: bf16[64,32], index: 4, kind: input, shape index: {}]
  %s5 = inlined_call_operand.vmem [shape: bf16[1024,32], index: 5, kind: input, shape index: {}]
  %s6 = inlined_call_operand.vmem [shape: bf16[32,32], index: 6, kind: input, shape index: {}]
  %s7 = inlined_call_operand.vmem [shape: bf16[32,32], index: 7, kind: input, shape index: {}]
  %s8 = inlined_call_operand.vmem [shape: f32[1,32], index: 8, kind: input, shape index: {}]
  %s9 = inlined_call_operand.vmem [shape: f32[1,32], index: 9, kind: input, shape index: {}]
  %s10 = inlined_call_operand.vmem [shape: f32[1,32], index: 10, kind: input, shape index: {}]
  %s11 = inlined_call_operand.vmem [shape: f32[1,32], index: 11, kind: input, shape index: {}]
  %s12 = inlined_call_operand.<no memory space> [shape: f32[1], index: 12, kind: input, shape index: {}]
  %s13 = inlined_call_operand.hbm [shape: f32[2,4], index: 13, kind: output, shape index: {}]
  %s14 = sld [smem:[#allocation0]]
  $region62: #{tpu_custom_call.1} parent=0
    _
  %s16 = ssub.s32 1, %s14
  %s17 = scalar_select 0, %s16, %s14
  %18 = sst [smem:[#allocation2]] %s12
  $region1: #{tpu_custom_call.1} parent=0
    #allocation3 [shape = 'u8[1024]{0}', space=vmem, size = 0x400, scoped, tag = 'output window, operand 0, single buffered']
    #allocation4 [shape = 's32[1]{0}', space=sflag, size = 0x4, scoped, tag = 'scoped memory for tpu_custom_call.1']
    %19 = vsyncpa [#allocation4], 0
    // Predicated region
    $region2: #{tpu_custom_call.1} parent=1 // pred_check
      _
    $region3: #{tpu_custom_call.1} parent=1 // pred_check_branch
      %21 = sbr.rel (0) target = $region5
    $region4: #{tpu_custom_call.1} parent=1 // pred_region
      _
    $region5: #{tpu_custom_call.1} parent=1 // pred_fallthru
      _
    // Predicated region
    $region6: #{tpu_custom_call.1} parent=1 // pred_check
      _
    $region7: #{tpu_custom_call.1} parent=1 // pred_check_branch
      %23 = sbr.rel (0) target = $region9
    $region8: #{tpu_custom_call.1} parent=1 // pred_region
      _
    $region9: #{tpu_custom_call.1} parent=1 // pred_fallthru
      _
    // Predicated region
    $region10: #{tpu_custom_call.1} parent=1 // pred_check
      _
    $region11: #{tpu_custom_call.1} parent=1 // pred_check_branch
      %25 = sbr.rel (0) target = $region13
    $region12: #{tpu_custom_call.1} parent=1 // pred_region
      _
    $region13: #{tpu_custom_call.1} parent=1 // pred_fallthru
      _
    // Predicated region
    $region14: #{tpu_custom_call.1} parent=1 // pred_check
      _
    $region15: #{tpu_custom_call.1} parent=1 // pred_check_branch
      %27 = sbr.rel (0) target = $region17
    $region16: #{tpu_custom_call.1} parent=1 // pred_region
      _
    $region17: #{tpu_custom_call.1} parent=1 // pred_fallthru
      _
    // Predicated region
    $region18: #{tpu_custom_call.1} parent=1 // pred_check
      _
    $region19: #{tpu_custom_call.1} parent=1 // pred_check_branch
      %29 = sbr.rel (0) target = $region21
    $region20: #{tpu_custom_call.1} parent=1 // pred_region
      _
    $region21: #{tpu_custom_call.1} parent=1 // pred_fallthru
      _
    // Predicated region
    $region22: #{tpu_custom_call.1} parent=1 // pred_check
      _
    $region23: #{tpu_custom_call.1} parent=1 // pred_check_branch
      %31 = sbr.rel (0) target = $region25
    $region24: #{tpu_custom_call.1} parent=1 // pred_region
      _
    $region25: #{tpu_custom_call.1} parent=1 // pred_fallthru
      _
    // Predicated region
    $region26: #{tpu_custom_call.1} parent=1 // pred_check
      _
    $region27: #{tpu_custom_call.1} parent=1 // pred_check_branch
      %33 = sbr.rel (0) target = $region29
    $region28: #{tpu_custom_call.1} parent=1 // pred_region
      _
    $region29: #{tpu_custom_call.1} parent=1 // pred_fallthru
      _
    // Predicated region
    $region30: #{tpu_custom_call.1} parent=1 // pred_check
      _
    $region31: #{tpu_custom_call.1} parent=1 // pred_check_branch
      %35 = sbr.rel (0) target = $region33
    $region32: #{tpu_custom_call.1} parent=1 // pred_region
      _
    $region33: #{tpu_custom_call.1} parent=1 // pred_fallthru
      _
    // Predicated region
    $region34: #{tpu_custom_call.1} parent=1 // pred_check
      _
    $region35: #{tpu_custom_call.1} parent=1 // pred_check_branch
      %37 = sbr.rel (0) target = $region37
    $region36: #{tpu_custom_call.1} parent=1 // pred_region
      _
    $region37: #{tpu_custom_call.1} parent=1 // pred_fallthru
      _
    // Predicated region
    $region38: #{tpu_custom_call.1} parent=1 // pred_check
      _
    $region39: #{tpu_custom_call.1} parent=1 // pred_check_branch
      %39 = sbr.rel (0) target = $region41
    $region40: #{tpu_custom_call.1} parent=1 // pred_region
      _
    $region41: #{tpu_custom_call.1} parent=1 // pred_fallthru
      _
    // Predicated region
    $region42: #{tpu_custom_call.1} parent=1 // pred_check
      _
    $region43: #{tpu_custom_call.1} parent=1 // pred_check_branch
      %41 = sbr.rel (0) target = $region45
    $region44: #{tpu_custom_call.1} parent=1 // pred_region
      _
    $region45: #{tpu_custom_call.1} parent=1 // pred_fallthru
      _
    // Predicated region
    $region46: #{tpu_custom_call.1} parent=1 // pred_check
      _
    $region47: #{tpu_custom_call.1} parent=1 // pred_check_branch
      %43 = sbr.rel (0) target = $region49
    $region48: #{tpu_custom_call.1} parent=1 // pred_region
      _
    $region49: #{tpu_custom_call.1} parent=1 // pred_fallthru
      _
    // Predicated region
    $region50: #{tpu_custom_call.1} parent=1 // pred_check
      _
    $region51: #{tpu_custom_call.1} parent=1 // pred_check_branch
      %45 = sbr.rel (0) target = $region53
    $region52: #{tpu_custom_call.1} parent=1 // pred_region
      _
    $region53: #{tpu_custom_call.1} parent=1 // pred_fallthru
      _
    %v47 = vld [vmem:[%s8] sm:$0x1]
    %v48 = vld [vmem:[%s9] sm:$0x1]
    %v49 = vld [vmem:[%s10] sm:$0x1]
    %v50 = vld [vmem:[%s11] sm:$0x1]
    %s51 = sld [smem:[#allocation2]]
    %v52 = vld [vmem:[%s6] sm:$0xf]
    %v53 = vld [vmem:[%s6 + $0x4] sm:$0xf]
    %v54 = vld [vmem:[%s6 + $0x8] sm:$0xf]
    %v55 = vld [vmem:[%s6 + $0xc] sm:$0xf]
    %v56 = vld [vmem:[%s7] sm:$0xf]
    %v57 = vld [vmem:[%s7 + $0x4] sm:$0xf]
    %v58 = vld [vmem:[%s7 + $0x8] sm:$0xf]
    %v59 = vld [vmem:[%s7 + $0xc] sm:$0xf]
    %v60 = vld [vmem:[%s2] sm:$0xff]
    %v61 = vld [vmem:[%s5] sm:$0xf]
    %v62 = vld [vmem:[%s5 + $0x4] sm:$0xf]
    %v63 = vld [vmem:[%s5 + $0x8] sm:$0xf]
    %v64 = vld [vmem:[%s5 + $0xc] sm:$0xf]
    %v65 = vld [vmem:[%s5 + $0x10] sm:$0xf]
    %v66 = vld [vmem:[%s5 + $0x14] sm:$0xf]
    %v67 = vld [vmem:[%s5 + $0x18] sm:$0xf]
    %v68 = vld [vmem:[%s5 + $0x1c] sm:$0xf]
    %v69 = vld [vmem:[%s5 + $0x20] sm:$0xf]
    %v70 = vld [vmem:[%s5 + $0x24] sm:$0xf]
    %v71 = vld [vmem:[%s5 + $0x28] sm:$0xf]
    %v72 = vld [vmem:[%s5 + $0x2c] sm:$0xf]
    %v73 = vld [vmem:[%s5 + $0x30] sm:$0xf]
    %v74 = vld [vmem:[%s5 + $0x34] sm:$0xf]
    %v75 = vld [vmem:[%s5 + $0x38] sm:$0xf]
    %v76 = vld [vmem:[%s5 + $0x3c] sm:$0xf]
    %v77 = vld [vmem:[%s5 + $0x40] sm:$0xf]
    %v78 = vld [vmem:[%s5 + $0x44] sm:$0xf]
    %v79 = vld [vmem:[%s5 + $0x48] sm:$0xf]
    %v80 = vld [vmem:[%s5 + $0x4c] sm:$0xf]
    %v81 = vld [vmem:[%s5 + $0x50] sm:$0xf]
    %v82 = vld [vmem:[%s5 + $0x54] sm:$0xf]
    %v83 = vld [vmem:[%s5 + $0x58] sm:$0xf]
    %v84 = vld [vmem:[%s5 + $0x5c] sm:$0xf]
    %v85 = vld [vmem:[%s5 + $0x60] sm:$0xf]
    %v86 = vld [vmem:[%s5 + $0x64] sm:$0xf]
    %v87 = vld [vmem:[%s5 + $0x68] sm:$0xf]
    %v88 = vld [vmem:[%s5 + $0x6c] sm:$0xf]
    %v89 = vld [vmem:[%s5 + $0x70] sm:$0xf]
    %v90 = vld [vmem:[%s5 + $0x74] sm:$0xf]
    %v91 = vld [vmem:[%s5 + $0x78] sm:$0xf]
    %v92 = vld [vmem:[%s5 + $0x7c] sm:$0xf]
    %v93 = vld [vmem:[%s5 + $0x80] sm:$0xf]
    %v94 = vld [vmem:[%s5 + $0x84] sm:$0xf]
    %v95 = vld [vmem:[%s5 + $0x88] sm:$0xf]
    %v96 = vld [vmem:[%s5 + $0x8c] sm:$0xf]
    %v97 = vld [vmem:[%s5 + $0x90] sm:$0xf]
    %v98 = vld [vmem:[%s5 + $0x94] sm:$0xf]
    %v99 = vld [vmem:[%s5 + $0x98] sm:$0xf]
    %v100 = vld [vmem:[%s5 + $0x9c] sm:$0xf]
    %v101 = vld [vmem:[%s5 + $0xa0] sm:$0xf]
    %v102 = vld [vmem:[%s5 + $0xa4] sm:$0xf]
    %v103 = vld [vmem:[%s5 + $0xa8] sm:$0xf]
    %v104 = vld [vmem:[%s5 + $0xac] sm:$0xf]
    %v105 = vld [vmem:[%s5 + $0xb0] sm:$0xf]
    %v106 = vld [vmem:[%s5 + $0xb4] sm:$0xf]
    %v107 = vld [vmem:[%s5 + $0xb8] sm:$0xf]
    %v108 = vld [vmem:[%s5 + $0xbc] sm:$0xf]
    %v109 = vld [vmem:[%s5 + $0xc0] sm:$0xf]
    %v110 = vld [vmem:[%s5 + $0xc4] sm:$0xf]
    %v111 = vld [vmem:[%s5 + $0xc8] sm:$0xf]
    %v112 = vld [vmem:[%s5 + $0xcc] sm:$0xf]
    %v113 = vld [vmem:[%s5 + $0xd0] sm:$0xf]
    %v114 = vld [vmem:[%s5 + $0xd4] sm:$0xf]
    %v115 = vld [vmem:[%s5 + $0xd8] sm:$0xf]
    %v116 = vld [vmem:[%s5 + $0xdc] sm:$0xf]
    %v117 = vld [vmem:[%s5 + $0xe0] sm:$0xf]
    %v118 = vld [vmem:[%s5 + $0xe4] sm:$0xf]
    %v119 = vld [vmem:[%s5 + $0xe8] sm:$0xf]
    %v120 = vld [vmem:[%s5 + $0xec] sm:$0xf]
    %v121 = vld [vmem:[%s5 + $0xf0] sm:$0xf]
    %v122 = vld [vmem:[%s5 + $0xf4] sm:$0xf]
    %v123 = vld [vmem:[%s5 + $0xf8] sm:$0xf]
    %v124 = vld [vmem:[%s5 + $0xfc] sm:$0xf]
    %v125 = vld [vmem:[%s5 + $0x100] sm:$0xf]
    %v126 = vld [vmem:[%s5 + $0x104] sm:$0xf]
    %v127 = vld [vmem:[%s5 + $0x108] sm:$0xf]
    %v128 = vld [vmem:[%s5 + $0x10c] sm:$0xf]
    %v129 = vld [vmem:[%s5 + $0x110] sm:$0xf]
    %v130 = vld [vmem:[%s5 + $0x114] sm:$0xf]
    %v131 = vld [vmem:[%s5 + $0x118] sm:$0xf]
    %v132 = vld [vmem:[%s5 + $0x11c] sm:$0xf]
    %v133 = vld [vmem:[%s5 + $0x120] sm:$0xf]
    %v134 = vld [vmem:[%s5 + $0x124] sm:$0xf]
    %v135 = vld [vmem:[%s5 + $0x128] sm:$0xf]
    %v136 = vld [vmem:[%s5 + $0x12c] sm:$0xf]
    %v137 = vld [vmem:[%s5 + $0x130] sm:$0xf]
    %v138 = vld [vmem:[%s5 + $0x134] sm:$0xf]
    %v139 = vld [vmem:[%s5 + $0x138] sm:$0xf]
    %v140 = vld [vmem:[%s5 + $0x13c] sm:$0xf]
    %v141 = vld [vmem:[%s5 + $0x140] sm:$0xf]
    %v142 = vld [vmem:[%s5 + $0x144] sm:$0xf]
    %v143 = vld [vmem:[%s5 + $0x148] sm:$0xf]
    %v144 = vld [vmem:[%s5 + $0x14c] sm:$0xf]
    %v145 = vld [vmem:[%s5 + $0x150] sm:$0xf]
    %v146 = vld [vmem:[%s5 + $0x154] sm:$0xf]
    %v147 = vld [vmem:[%s5 + $0x158] sm:$0xf]
    %v148 = vld [vmem:[%s5 + $0x15c] sm:$0xf]
    %v149 = vld [vmem:[%s5 + $0x160] sm:$0xf]
    %v150 = vld [vmem:[%s5 + $0x164] sm:$0xf]
    %v151 = vld [vmem:[%s5 + $0x168] sm:$0xf]
    %v152 = vld [vmem:[%s5 + $0x16c] sm:$0xf]
    %v153 = vld [vmem:[%s5 + $0x170] sm:$0xf]
    %v154 = vld [vmem:[%s5 + $0x174] sm:$0xf]
    %v155 = vld [vmem:[%s5 + $0x178] sm:$0xf]
    %v156 = vld [vmem:[%s5 + $0x17c] sm:$0xf]
    %v157 = vld [vmem:[%s5 + $0x180] sm:$0xf]
    %v158 = vld [vmem:[%s5 + $0x184] sm:$0xf]
    %v159 = vld [vmem:[%s5 + $0x188] sm:$0xf]
    %v160 = vld [vmem:[%s5 + $0x18c] sm:$0xf]
    %v161 = vld [vmem:[%s5 + $0x190] sm:$0xf]
    %v162 = vld [vmem:[%s5 + $0x194] sm:$0xf]
    %v163 = vld [vmem:[%s5 + $0x198] sm:$0xf]
    %v164 = vld [vmem:[%s5 + $0x19c] sm:$0xf]
    %v165 = vld [vmem:[%s5 + $0x1a0] sm:$0xf]
    %v166 = vld [vmem:[%s5 + $0x1a4] sm:$0xf]
    %v167 = vld [vmem:[%s5 + $0x1a8] sm:$0xf]
    %v168 = vld [vmem:[%s5 + $0x1ac] sm:$0xf]
    %v169 = vld [vmem:[%s5 + $0x1b0] sm:$0xf]
    %v170 = vld [vmem:[%s5 + $0x1b4] sm:$0xf]
    %v171 = vld [vmem:[%s5 + $0x1b8] sm:$0xf]
    %v172 = vld [vmem:[%s5 + $0x1bc] sm:$0xf]
    %v173 = vld [vmem:[%s5 + $0x1c0] sm:$0xf]
    %v174 = vld [vmem:[%s5 + $0x1c4] sm:$0xf]
    %v175 = vld [vmem:[%s5 + $0x1c8] sm:$0xf]
    %v176 = vld [vmem:[%s5 + $0x1cc] sm:$0xf]
    %v177 = vld [vmem:[%s5 + $0x1d0] sm:$0xf]
    %v178 = vld [vmem:[%s5 + $0x1d4] sm:$0xf]
    %v179 = vld [vmem:[%s5 + $0x1d8] sm:$0xf]
    %v180 = vld [vmem:[%s5 + $0x1dc] sm:$0xf]
    %v181 = vld [vmem:[%s5 + $0x1e0] sm:$0xf]
    %v182 = vld [vmem:[%s5 + $0x1e4] sm:$0xf]
    %v183 = vld [vmem:[%s5 + $0x1e8] sm:$0xf]
    %v184 = vld [vmem:[%s5 + $0x1ec] sm:$0xf]
    %v185 = vld [vmem:[%s5 + $0x1f0] sm:$0xf]
    %v186 = vld [vmem:[%s5 + $0x1f4] sm:$0xf]
    %v187 = vld [vmem:[%s5 + $0x1f8] sm:$0xf]
    %v188 = vld [vmem:[%s5 + $0x1fc] sm:$0xf]
    %v190 = vlaneseq
    %v191 = vshrl.u32 %v190, 7
    %v192 = vsub.s32 0, %v191
    %v193 = vrot.slane %v48, %v192
    %v196 = vcombine.high %v60, %v60
    %v198 = vunpack.c.l.s4 1966171168
    %v199 = vunpack.c.0.s8 %v198
    %v200 = vlaneseq
    %v201 = vshrl.u32 %v200, 7
    %v202 = vsub.s32 %v199, %v201
    %v203 = vrot.slane %v60, %v202
    %v205 = vunpack.c.l.s4 1966171168
    %v206 = vunpack.c.0.s8 %v205
    %v207 = vlaneseq
    %v208 = vshrl.u32 %v207, 7
    %v209 = vsub.s32 %v206, %v208
    %v210 = vrot.slane %v196, %v209
    %v211 = vcombine.high %v203, %v203
    %v212 = vcombine.high %v210, %v210
    %v214 = vunpack.c.l.s4 1966171168
    %v215 = vunpack.c.0.s8 %v214
    %v216 = vlaneseq
    %v217 = vshrl.u32 %v216, 7
    %v218 = vsub.s32 %v215, %v217
    %v219 = vrot.slane %v203, %v218
    %v221 = vunpack.c.l.s4 1966171168
    %v222 = vunpack.c.0.s8 %v221
    %v223 = vlaneseq
    %v224 = vshrl.u32 %v223, 7
    %v225 = vsub.s32 %v222, %v224
    %v226 = vrot.slane %v210, %v225
    %v228 = vunpack.c.l.s4 1966171168
    %v229 = vunpack.c.0.s8 %v228
    %v230 = vlaneseq
    %v231 = vshrl.u32 %v230, 7
    %v232 = vsub.s32 %v229, %v231
    %v233 = vrot.slane %v211, %v232
    %v235 = vunpack.c.l.s4 1966171168
    %v236 = vunpack.c.0.s8 %v235
    %v237 = vlaneseq
    %v238 = vshrl.u32 %v237, 7
    %v239 = vsub.s32 %v236, %v238
    %v240 = vrot.slane %v212, %v239
    %v241 = vcombine.high %v219, %v219
    %v242 = vcombine.high %v226, %v226
    %v243 = vcombine.high %v233, %v233
    %v244 = vcombine.high %v240, %v240
    %v381 = vunpack.c.l.b16 %v61
    %v382 = vunpack.c.l.b16 %v62
    %v383 = vunpack.c.l.b16 %v63
    %v384 = vunpack.c.l.b16 %v64
    %v385 = vunpack.c.l.b16 %v65
    %v386 = vunpack.c.l.b16 %v66
    %v387 = vunpack.c.l.b16 %v67
    %v388 = vunpack.c.l.b16 %v68
    %v389 = vunpack.c.l.b16 %v69
    %v390 = vunpack.c.l.b16 %v70
    %v391 = vunpack.c.l.b16 %v71
    %v392 = vunpack.c.l.b16 %v72
    %v393 = vunpack.c.l.b16 %v73
    %v394 = vunpack.c.l.b16 %v74
    %v395 = vunpack.c.l.b16 %v75
    %v396 = vunpack.c.l.b16 %v76
    %v397 = vunpack.c.l.b16 %v77
    %v398 = vunpack.c.l.b16 %v78
    %v399 = vunpack.c.l.b16 %v79
    %v400 = vunpack.c.l.b16 %v80
    %v401 = vunpack.c.l.b16 %v81
    %v402 = vunpack.c.l.b16 %v82
    %v403 = vunpack.c.l.b16 %v83
    %v404 = vunpack.c.l.b16 %v84
    %v405 = vunpack.c.l.b16 %v85
    %v406 = vunpack.c.l.b16 %v86
    %v407 = vunpack.c.l.b16 %v87
    %v408 = vunpack.c.l.b16 %v88
    %v409 = vunpack.c.l.b16 %v89
    %v410 = vunpack.c.l.b16 %v90
    %v411 = vunpack.c.l.b16 %v91
    %v412 = vunpack.c.l.b16 %v92
    %v413 = vunpack.c.l.b16 %v93
    %v414 = vunpack.c.l.b16 %v94
    %v415 = vunpack.c.l.b16 %v95
    %v416 = vunpack.c.l.b16 %v96
    %v417 = vunpack.c.l.b16 %v97
    %v418 = vunpack.c.l.b16 %v98
    %v419 = vunpack.c.l.b16 %v99
    %v420 = vunpack.c.l.b16 %v100
    %v421 = vunpack.c.l.b16 %v101
    %v422 = vunpack.c.l.b16 %v102
    %v423 = vunpack.c.l.b16 %v103
    %v424 = vunpack.c.l.b16 %v104
    %v425 = vunpack.c.l.b16 %v105
    %v426 = vunpack.c.l.b16 %v106
    %v427 = vunpack.c.l.b16 %v107
    %v428 = vunpack.c.l.b16 %v108
    %v429 = vunpack.c.l.b16 %v109
    %v430 = vunpack.c.l.b16 %v110
    %v431 = vunpack.c.l.b16 %v111
    %v432 = vunpack.c.l.b16 %v112
    %v433 = vunpack.c.l.b16 %v113
    %v434 = vunpack.c.l.b16 %v114
    %v435 = vunpack.c.l.b16 %v115
    %v436 = vunpack.c.l.b16 %v116
    %v437 = vunpack.c.l.b16 %v117
    %v438 = vunpack.c.l.b16 %v118
    %v439 = vunpack.c.l.b16 %v119
    %v440 = vunpack.c.l.b16 %v120
    %v441 = vunpack.c.l.b16 %v121
    %v442 = vunpack.c.l.b16 %v122
    %v443 = vunpack.c.l.b16 %v123
    %v444 = vunpack.c.l.b16 %v124
    %v445 = vunpack.c.l.b16 %v125
    %v446 = vunpack.c.l.b16 %v126
    %v447 = vunpack.c.l.b16 %v127
    %v448 = vunpack.c.l.b16 %v128
    %v449 = vunpack.c.l.b16 %v129
    %v450 = vunpack.c.l.b16 %v130
    %v451 = vunpack.c.l.b16 %v131
    %v452 = vunpack.c.l.b16 %v132
    %v453 = vunpack.c.l.b16 %v133
    %v454 = vunpack.c.l.b16 %v134
    %v455 = vunpack.c.l.b16 %v135
    %v456 = vunpack.c.l.b16 %v136
    %v457 = vunpack.c.l.b16 %v137
    %v458 = vunpack.c.l.b16 %v138
    %v459 = vunpack.c.l.b16 %v139
    %v460 = vunpack.c.l.b16 %v140
    %v461 = vunpack.c.l.b16 %v141
    %v462 = vunpack.c.l.b16 %v142
    %v463 = vunpack.c.l.b16 %v143
    %v464 = vunpack.c.l.b16 %v144
    %v465 = vunpack.c.l.b16 %v145
    %v466 = vunpack.c.l.b16 %v146
    %v467 = vunpack.c.l.b16 %v147
    %v468 = vunpack.c.l.b16 %v148
    %v469 = vunpack.c.l.b16 %v149
    %v470 = vunpack.c.l.b16 %v150
    %v471 = vunpack.c.l.b16 %v151
    %v472 = vunpack.c.l.b16 %v152
    %v473 = vunpack.c.l.b16 %v153
    %v474 = vunpack.c.l.b16 %v154
    %v475 = vunpack.c.l.b16 %v155
    %v476 = vunpack.c.l.b16 %v156
    %v477 = vunpack.c.l.b16 %v157
    %v478 = vunpack.c.l.b16 %v158
    %v479 = vunpack.c.l.b16 %v159
    %v480 = vunpack.c.l.b16 %v160
    %v481 = vunpack.c.l.b16 %v161
    %v482 = vunpack.c.l.b16 %v162
    %v483 = vunpack.c.l.b16 %v163
    %v484 = vunpack.c.l.b16 %v164
    %v485 = vunpack.c.l.b16 %v165
    %v486 = vunpack.c.l.b16 %v166
    %v487 = vunpack.c.l.b16 %v167
    %v488 = vunpack.c.l.b16 %v168
    %v489 = vunpack.c.l.b16 %v169
    %v490 = vunpack.c.l.b16 %v170
    %v491 = vunpack.c.l.b16 %v171
    %v492 = vunpack.c.l.b16 %v172
    %v493 = vunpack.c.l.b16 %v173
    %v494 = vunpack.c.l.b16 %v174
    %v495 = vunpack.c.l.b16 %v175
    %v496 = vunpack.c.l.b16 %v176
    %v497 = vunpack.c.l.b16 %v177
    %v498 = vunpack.c.l.b16 %v178
    %v499 = vunpack.c.l.b16 %v179
    %v500 = vunpack.c.l.b16 %v180
    %v501 = vunpack.c.l.b16 %v181
    %v502 = vunpack.c.l.b16 %v182
    %v503 = vunpack.c.l.b16 %v183
    %v504 = vunpack.c.l.b16 %v184
    %v505 = vunpack.c.l.b16 %v185
    %v506 = vunpack.c.l.b16 %v186
    %v507 = vunpack.c.l.b16 %v187
    %v508 = vunpack.c.l.b16 %v188
    %v509 = vpack.c.b16 %v382, %v381
    %v510 = vpack.c.b16 %v384, %v383
    %v511 = vpack.c.b16 %v386, %v385
    %v512 = vpack.c.b16 %v388, %v387
    %v513 = vpack.c.b16 %v390, %v389
    %v514 = vpack.c.b16 %v392, %v391
    %v515 = vpack.c.b16 %v394, %v393
    %v516 = vpack.c.b16 %v396, %v395
    %v517 = vpack.c.b16 %v398, %v397
    %v518 = vpack.c.b16 %v400, %v399
    %v519 = vpack.c.b16 %v402, %v401
    %v520 = vpack.c.b16 %v404, %v403
    %v521 = vpack.c.b16 %v406, %v405
    %v522 = vpack.c.b16 %v408, %v407
    %v523 = vpack.c.b16 %v410, %v409
    %v524 = vpack.c.b16 %v412, %v411
    %v525 = vpack.c.b16 %v414, %v413
    %v526 = vpack.c.b16 %v416, %v415
    %v527 = vpack.c.b16 %v418, %v417
    %v528 = vpack.c.b16 %v420, %v419
    %v529 = vpack.c.b16 %v422, %v421
    %v530 = vpack.c.b16 %v424, %v423
    %v531 = vpack.c.b16 %v426, %v425
    %v532 = vpack.c.b16 %v428, %v427
    %v533 = vpack.c.b16 %v430, %v429
    %v534 = vpack.c.b16 %v432, %v431
    %v535 = vpack.c.b16 %v434, %v433
    %v536 = vpack.c.b16 %v436, %v435
    %v537 = vpack.c.b16 %v438, %v437
    %v538 = vpack.c.b16 %v440, %v439
    %v539 = vpack.c.b16 %v442, %v441
    %v540 = vpack.c.b16 %v444, %v443
    %v541 = vpack.c.b16 %v446, %v445
    %v542 = vpack.c.b16 %v448, %v447
    %v543 = vpack.c.b16 %v450, %v449
    %v544 = vpack.c.b16 %v452, %v451
    %v545 = vpack.c.b16 %v454, %v453
    %v546 = vpack.c.b16 %v456, %v455
    %v547 = vpack.c.b16 %v458, %v457
    %v548 = vpack.c.b16 %v460, %v459
    %v549 = vpack.c.b16 %v462, %v461
    %v550 = vpack.c.b16 %v464, %v463
    %v551 = vpack.c.b16 %v466, %v465
    %v552 = vpack.c.b16 %v468, %v467
    %v553 = vpack.c.b16 %v470, %v469
    %v554 = vpack.c.b16 %v472, %v471
    %v555 = vpack.c.b16 %v474, %v473
    %v556 = vpack.c.b16 %v476, %v475
    %v557 = vpack.c.b16 %v478, %v477
    %v558 = vpack.c.b16 %v480, %v479
    %v559 = vpack.c.b16 %v482, %v481
    %v560 = vpack.c.b16 %v484, %v483
    %v561 = vpack.c.b16 %v486, %v485
    %v562 = vpack.c.b16 %v488, %v487
    %v563 = vpack.c.b16 %v490, %v489
    %v564 = vpack.c.b16 %v492, %v491
    %v565 = vpack.c.b16 %v494, %v493
    %v566 = vpack.c.b16 %v496, %v495
    %v567 = vpack.c.b16 %v498, %v497
    %v568 = vpack.c.b16 %v500, %v499
    %v569 = vpack.c.b16 %v502, %v501
    %v570 = vpack.c.b16 %v504, %v503
    %v571 = vpack.c.b16 %v506, %v505
    %v572 = vpack.c.b16 %v508, %v507
    %637 = vmatprep.subr.bf16.mxu0 0
    %638 = vmatpush1.bf16.msra.mxu0 %v516
    %639 = vmatprep.subr.bf16.mxu0 0
    %640 = vmatpush1.bf16.msra.mxu0 %v515
    %641 = vmatprep.subr.bf16.mxu0 0
    %642 = vmatpush1.bf16.msra.mxu0 %v514
    %643 = vmatprep.subr.bf16.mxu0 0
    %644 = vmatpush1.bf16.msra.mxu0 %v513
    %645 = vmatprep.subr.bf16.mxu0 0
    %646 = vmatpush1.bf16.msra.mxu0 %v512
    %647 = vmatprep.subr.bf16.mxu0 0
    %648 = vmatpush1.bf16.msra.mxu0 %v511
    %649 = vmatprep.subr.bf16.mxu0 0
    %650 = vmatpush1.bf16.msra.mxu0 %v510
    %651 = vmatprep.subr.bf16.mxu0 0
    %652 = vmatpush1.bf16.msra.mxu0 %v509
    %653 = vmatprep.subr.bf16.mxu0 0
    %654 = vmatpush2.bf16.msra.mxu0 %v524
    %655 = vmatprep.subr.bf16.mxu0 0
    %656 = vmatpush2.bf16.msra.mxu0 %v523
    %657 = vmatprep.subr.bf16.mxu0 0
    %658 = vmatpush2.bf16.msra.mxu0 %v522
    %659 = vmatprep.subr.bf16.mxu0 0
    %660 = vmatpush2.bf16.msra.mxu0 %v521
    %661 = vmatprep.subr.bf16.mxu0 0
    %662 = vmatpush2.bf16.msra.mxu0 %v520
    %663 = vmatprep.subr.bf16.mxu0 0
    %664 = vmatpush2.bf16.msra.mxu0 %v519
    %665 = vmatprep.subr.bf16.mxu0 0
    %666 = vmatpush2.bf16.msra.mxu0 %v518
    %667 = vmatprep.subr.bf16.mxu0 0
    %668 = vmatpush2.bf16.msra.mxu0 %v517
    %669 = vmatprep.mubr.bf16.mxu0 %v233
    %670 = vmatmul.mubr.bf16.gmra.mxu0 %v219
    %v671 = vpop.f32.mrf.mxu0
    %v672 = vadd.f32 %v193, %v671
    %v673 = vpop.f32.mrf.mxu0
    %v674 = vpop.f32.mrf.mxu0
    %v675 = vpop.f32.mrf.mxu0
    %676 = vdwg.mxu0
    %677 = vmatprep.subr.bf16.mxu0 0
    %678 = vmatpush1.bf16.msra.mxu0 %v532
    %679 = vmatprep.subr.bf16.mxu0 0
    %680 = vmatpush1.bf16.msra.mxu0 %v531
    %681 = vmatprep.subr.bf16.mxu0 0
    %682 = vmatpush1.bf16.msra.mxu0 %v530
    %683 = vmatprep.subr.bf16.mxu0 0
    %684 = vmatpush1.bf16.msra.mxu0 %v529
    %685 = vmatprep.subr.bf16.mxu0 0
    %686 = vmatpush1.bf16.msra.mxu0 %v528
    %687 = vmatprep.subr.bf16.mxu0 0
    %688 = vmatpush1.bf16.msra.mxu0 %v527
    %689 = vmatprep.subr.bf16.mxu0 0
    %690 = vmatpush1.bf16.msra.mxu0 %v526
    %691 = vmatprep.subr.bf16.mxu0 0
    %692 = vmatpush1.bf16.msra.mxu0 %v525
    %693 = vmatprep.subr.bf16.mxu0 0
    %694 = vmatpush2.bf16.msra.mxu0 %v540
    %695 = vmatprep.subr.bf16.mxu0 0
    %696 = vmatpush2.bf16.msra.mxu0 %v539
    %697 = vmatprep.subr.bf16.mxu0 0
    %698 = vmatpush2.bf16.msra.mxu0 %v538
    %699 = vmatprep.subr.bf16.mxu0 0
    %700 = vmatpush2.bf16.msra.mxu0 %v537
    %701 = vmatprep.subr.bf16.mxu0 0
    %702 = vmatpush2.bf16.msra.mxu0 %v536
    %703 = vmatprep.subr.bf16.mxu0 0
    %704 = vmatpush2.bf16.msra.mxu0 %v535
    %705 = vmatprep.subr.bf16.mxu0 0
    %706 = vmatpush2.bf16.msra.mxu0 %v534
    %707 = vmatprep.subr.bf16.mxu0 0
    %708 = vmatpush2.bf16.msra.mxu0 %v533
    %709 = vmatprep.mubr.bf16.mxu0 %v243
    %710 = vmatmul.mubr.bf16.gmra.mxu0 %v241
    %v711 = vpop.f32.mrf.mxu0
    %v712 = vadd.f32 %v672, %v711
    %v713 = vpop.f32.mrf.mxu0
    %v714 = vpop.f32.mrf.mxu0
    %v715 = vpop.f32.mrf.mxu0
    %716 = vdwg.mxu0
    %717 = vmatprep.subr.bf16.mxu0 0
    %718 = vmatpush1.bf16.msra.mxu0 %v548
    %719 = vmatprep.subr.bf16.mxu0 0
    %720 = vmatpush1.bf16.msra.mxu0 %v547
    %721 = vmatprep.subr.bf16.mxu0 0
    %722 = vmatpush1.bf16.msra.mxu0 %v546
    %723 = vmatprep.subr.bf16.mxu0 0
    %724 = vmatpush1.bf16.msra.mxu0 %v545
    %725 = vmatprep.subr.bf16.mxu0 0
    %726 = vmatpush1.bf16.msra.mxu0 %v544
    %727 = vmatprep.subr.bf16.mxu0 0
    %728 = vmatpush1.bf16.msra.mxu0 %v543
    %729 = vmatprep.subr.bf16.mxu0 0
    %730 = vmatpush1.bf16.msra.mxu0 %v542
    %731 = vmatprep.subr.bf16.mxu0 0
    %732 = vmatpush1.bf16.msra.mxu0 %v541
    %733 = vmatprep.subr.bf16.mxu0 0
    %734 = vmatpush2.bf16.msra.mxu0 %v556
    %735 = vmatprep.subr.bf16.mxu0 0
    %736 = vmatpush2.bf16.msra.mxu0 %v555
    %737 = vmatprep.subr.bf16.mxu0 0
    %738 = vmatpush2.bf16.msra.mxu0 %v554
    %739 = vmatprep.subr.bf16.mxu0 0
    %740 = vmatpush2.bf16.msra.mxu0 %v553
    %741 = vmatprep.subr.bf16.mxu0 0
    %742 = vmatpush2.bf16.msra.mxu0 %v552
    %743 = vmatprep.subr.bf16.mxu0 0
    %744 = vmatpush2.bf16.msra.mxu0 %v551
    %745 = vmatprep.subr.bf16.mxu0 0
    %746 = vmatpush2.bf16.msra.mxu0 %v550
    %747 = vmatprep.subr.bf16.mxu0 0
    %748 = vmatpush2.bf16.msra.mxu0 %v549
    %749 = vmatprep.mubr.bf16.mxu0 %v240
    %750 = vmatmul.mubr.bf16.gmra.mxu0 %v226
    %v751 = vpop.f32.mrf.mxu0
    %v752 = vadd.f32 %v712, %v751
    %v753 = vpop.f32.mrf.mxu0
    %v754 = vpop.f32.mrf.mxu0
    %v755 = vpop.f32.mrf.mxu0
    %756 = vdwg.mxu0
    %757 = vmatprep.subr.bf16.mxu0 0
    %758 = vmatpush1.bf16.msra.mxu0 %v564
    %759 = vmatprep.subr.bf16.mxu0 0
    %760 = vmatpush1.bf16.msra.mxu0 %v563
    %761 = vmatprep.subr.bf16.mxu0 0
    %762 = vmatpush1.bf16.msra.mxu0 %v562
    %763 = vmatprep.subr.bf16.mxu0 0
    %764 = vmatpush1.bf16.msra.mxu0 %v561
    %765 = vmatprep.subr.bf16.mxu0 0
    %766 = vmatpush1.bf16.msra.mxu0 %v560
    %767 = vmatprep.subr.bf16.mxu0 0
    %768 = vmatpush1.bf16.msra.mxu0 %v559
    %769 = vmatprep.subr.bf16.mxu0 0
    %770 = vmatpush1.bf16.msra.mxu0 %v558
    %771 = vmatprep.subr.bf16.mxu0 0
    %772 = vmatpush1.bf16.msra.mxu0 %v557
    %773 = vmatprep.subr.bf16.mxu0 0
    %774 = vmatpush2.bf16.msra.mxu0 %v572
    %775 = vmatprep.subr.bf16.mxu0 0
    %776 = vmatpush2.bf16.msra.mxu0 %v571
    %777 = vmatprep.subr.bf16.mxu0 0
    %778 = vmatpush2.bf16.msra.mxu0 %v570
    %779 = vmatprep.subr.bf16.mxu0 0
    %780 = vmatpush2.bf16.msra.mxu0 %v569
    %781 = vmatprep.subr.bf16.mxu0 0
    %782 = vmatpush2.bf16.msra.mxu0 %v568
    %783 = vmatprep.subr.bf16.mxu0 0
    %784 = vmatpush2.bf16.msra.mxu0 %v567
    %785 = vmatprep.subr.bf16.mxu0 0
    %786 = vmatpush2.bf16.msra.mxu0 %v566
    %787 = vmatprep.subr.bf16.mxu0 0
    %788 = vmatpush2.bf16.msra.mxu0 %v565
    %789 = vmatprep.mubr.bf16.mxu0 %v244
    %790 = vmatmul.mubr.bf16.gmra.mxu0 %v242
    %v791 = vpop.f32.mrf.mxu0
    %v792 = vadd.f32 %v752, %v791
    %v793 = vpop.f32.mrf.mxu0
    %v794 = vpop.f32.mrf.mxu0
    %v795 = vpop.f32.mrf.mxu0
    %796 = vdwg.mxu0
    %v797 = vpack.c.bf16 %v792, %v792
    %v802 = vunpack.c.l.b16 %v52
    %v803 = vunpack.c.l.b16 %v53
    %v804 = vunpack.c.l.b16 %v54
    %v805 = vunpack.c.l.b16 %v55
    %v806 = vpack.c.b16 %v803, %v802
    %v807 = vpack.c.b16 %v805, %v804
    %vm810 = vcmask 261120
    %v812 = vsel %vm810, %v797, 0
    %814 = vmatprep.subr.bf16.mxu0 0
    %815 = vmatpush1.bf16.msra.mxu0 0
    %816 = vmatprep.subr.bf16.mxu0 0
    %817 = vmatpush1.bf16.msra.mxu0 0
    %818 = vmatprep.subr.bf16.mxu0 0
    %819 = vmatpush1.bf16.msra.mxu0 0
    %820 = vmatprep.subr.bf16.mxu0 0
    %821 = vmatpush1.bf16.msra.mxu0 0
    %822 = vmatprep.subr.bf16.mxu0 0
    %823 = vmatpush1.bf16.msra.mxu0 0
    %824 = vmatprep.subr.bf16.mxu0 0
    %825 = vmatpush1.bf16.msra.mxu0 0
    %826 = vmatprep.subr.bf16.mxu0 0
    %827 = vmatpush1.bf16.msra.mxu0 %v807
    %828 = vmatprep.subr.bf16.mxu0 0
    %829 = vmatpush1.bf16.msra.mxu0 %v806
    %830 = vmatprep.subr.bf16.mxu0 0
    %831 = vmatpush2.bf16.msra.mxu0 0
    %832 = vmatprep.subr.bf16.mxu0 0
    %833 = vmatpush2.bf16.msra.mxu0 0
    %834 = vmatprep.subr.bf16.mxu0 0
    %835 = vmatpush2.bf16.msra.mxu0 0
    %836 = vmatprep.subr.bf16.mxu0 0
    %837 = vmatpush2.bf16.msra.mxu0 0
    %838 = vmatprep.subr.bf16.mxu0 0
    %839 = vmatpush2.bf16.msra.mxu0 0
    %840 = vmatprep.subr.bf16.mxu0 0
    %841 = vmatpush2.bf16.msra.mxu0 0
    %842 = vmatprep.subr.bf16.mxu0 0
    %843 = vmatpush2.bf16.msra.mxu0 0
    %844 = vmatprep.subr.bf16.mxu0 0
    %845 = vmatpush2.bf16.msra.mxu0 0
    %846 = vmatprep.mubr.bf16.mxu0 0
    %847 = vmatmul.mubr.bf16.gmra.mxu0 %v812
    %v848 = vpop.f32.mrf.mxu0
    %v849 = vadd.f32 0.0, %v848
    %v850 = vpop.f32.mrf.mxu0
    %v851 = vpop.f32.mrf.mxu0
    %v852 = vpop.f32.mrf.mxu0
    %853 = vdwg.mxu0
    %v854 = vld [vmem:[%s3] sm:$0xff]
    %v856 = vcombine.high %v854, %v854
    %v858 = vunpack.c.l.s4 1966171168
    %v859 = vunpack.c.0.s8 %v858
    %v860 = vlaneseq
    %v861 = vshrl.u32 %v860, 7
    %v862 = vsub.s32 %v859, %v861
    %v863 = vrot.slane %v854, %v862
    %v865 = vunpack.c.l.s4 1966171168
    %v866 = vunpack.c.0.s8 %v865
    %v867 = vlaneseq
    %v868 = vshrl.u32 %v867, 7
    %v869 = vsub.s32 %v866, %v868
    %v870 = vrot.slane %v856, %v869
    %v871 = vcombine.high %v863, %v863
    %v872 = vcombine.high %v870, %v870
    %v874 = vunpack.c.l.s4 1966171168
    %v875 = vunpack.c.0.s8 %v874
    %v876 = vlaneseq
    %v877 = vshrl.u32 %v876, 7
    %v878 = vsub.s32 %v875, %v877
    %v879 = vrot.slane %v863, %v878
    %v881 = vunpack.c.l.s4 1966171168
    %v882 = vunpack.c.0.s8 %v881
    %v883 = vlaneseq
    %v884 = vshrl.u32 %v883, 7
    %v885 = vsub.s32 %v882, %v884
    %v886 = vrot.slane %v870, %v885
    %v888 = vunpack.c.l.s4 1966171168
    %v889 = vunpack.c.0.s8 %v888
    %v890 = vlaneseq
    %v891 = vshrl.u32 %v890, 7
    %v892 = vsub.s32 %v889, %v891
    %v893 = vrot.slane %v871, %v892
    %v895 = vunpack.c.l.s4 1966171168
    %v896 = vunpack.c.0.s8 %v895
    %v897 = vlaneseq
    %v898 = vshrl.u32 %v897, 7
    %v899 = vsub.s32 %v896, %v898
    %v900 = vrot.slane %v872, %v899
    %v901 = vcombine.high %v879, %v879
    %v902 = vcombine.high %v886, %v886
    %v903 = vcombine.high %v893, %v893
    %v904 = vcombine.high %v900, %v900
    %913 = vmatprep.subr.bf16.mxu0 0
    %914 = vmatpush1.bf16.msra.mxu0 %v516
    %915 = vmatprep.subr.bf16.mxu0 0
    %916 = vmatpush1.bf16.msra.mxu0 %v515
    %917 = vmatprep.subr.bf16.mxu0 0
    %918 = vmatpush1.bf16.msra.mxu0 %v514
    %919 = vmatprep.subr.bf16.mxu0 0
    %920 = vmatpush1.bf16.msra.mxu0 %v513
    %921 = vmatprep.subr.bf16.mxu0 0
    %922 = vmatpush1.bf16.msra.mxu0 %v512
    %923 = vmatprep.subr.bf16.mxu0 0
    %924 = vmatpush1.bf16.msra.mxu0 %v511
    %925 = vmatprep.subr.bf16.mxu0 0
    %926 = vmatpush1.bf16.msra.mxu0 %v510
    %927 = vmatprep.subr.bf16.mxu0 0
    %928 = vmatpush1.bf16.msra.mxu0 %v509
    %929 = vmatprep.subr.bf16.mxu0 0
    %930 = vmatpush2.bf16.msra.mxu0 %v524
    %931 = vmatprep.subr.bf16.mxu0 0
    %932 = vmatpush2.bf16.msra.mxu0 %v523
    %933 = vmatprep.subr.bf16.mxu0 0
    %934 = vmatpush2.bf16.msra.mxu0 %v522
    %935 = vmatprep.subr.bf16.mxu0 0
    %936 = vmatpush2.bf16.msra.mxu0 %v521
    %937 = vmatprep.subr.bf16.mxu0 0
    %938 = vmatpush2.bf16.msra.mxu0 %v520
    %939 = vmatprep.subr.bf16.mxu0 0
    %940 = vmatpush2.bf16.msra.mxu0 %v519
    %941 = vmatprep.subr.bf16.mxu0 0
    %942 = vmatpush2.bf16.msra.mxu0 %v518
    %943 = vmatprep.subr.bf16.mxu0 0
    %944 = vmatpush2.bf16.msra.mxu0 %v517
    %945 = vmatprep.mubr.bf16.mxu0 %v893
    %946 = vmatmul.mubr.bf16.gmra.mxu0 %v879
    %v947 = vpop.f32.mrf.mxu0
    %v948 = vadd.f32 %v193, %v947
    %v949 = vpop.f32.mrf.mxu0
    %v950 = vpop.f32.mrf.mxu0
    %v951 = vpop.f32.mrf.mxu0
    %952 = vdwg.mxu0
    %953 = vmatprep.subr.bf16.mxu0 0
    %954 = vmatpush1.bf16.msra.mxu0 %v532
    %955 = vmatprep.subr.bf16.mxu0 0
    %956 = vmatpush1.bf16.msra.mxu0 %v531
    %957 = vmatprep.subr.bf16.mxu0 0
    %958 = vmatpush1.bf16.msra.mxu0 %v530
    %959 = vmatprep.subr.bf16.mxu0 0
    %960 = vmatpush1.bf16.msra.mxu0 %v529
    %961 = vmatprep.subr.bf16.mxu0 0
    %962 = vmatpush1.bf16.msra.mxu0 %v528
    %963 = vmatprep.subr.bf16.mxu0 0
    %964 = vmatpush1.bf16.msra.mxu0 %v527
    %965 = vmatprep.subr.bf16.mxu0 0
    %966 = vmatpush1.bf16.msra.mxu0 %v526
    %967 = vmatprep.subr.bf16.mxu0 0
    %968 = vmatpush1.bf16.msra.mxu0 %v525
    %969 = vmatprep.subr.bf16.mxu0 0
    %970 = vmatpush2.bf16.msra.mxu0 %v540
    %971 = vmatprep.subr.bf16.mxu0 0
    %972 = vmatpush2.bf16.msra.mxu0 %v539
    %973 = vmatprep.subr.bf16.mxu0 0
    %974 = vmatpush2.bf16.msra.mxu0 %v538
    %975 = vmatprep.subr.bf16.mxu0 0
    %976 = vmatpush2.bf16.msra.mxu0 %v537
    %977 = vmatprep.subr.bf16.mxu0 0
    %978 = vmatpush2.bf16.msra.mxu0 %v536
    %979 = vmatprep.subr.bf16.mxu0 0
    %980 = vmatpush2.bf16.msra.mxu0 %v535
    %981 = vmatprep.subr.bf16.mxu0 0
    %982 = vmatpush2.bf16.msra.mxu0 %v534
    %983 = vmatprep.subr.bf16.mxu0 0
    %984 = vmatpush2.bf16.msra.mxu0 %v533
    %985 = vmatprep.mubr.bf16.mxu0 %v903
    %986 = vmatmul.mubr.bf16.gmra.mxu0 %v901
    %v987 = vpop.f32.mrf.mxu0
    %v988 = vadd.f32 %v948, %v987
    %v989 = vpop.f32.mrf.mxu0
    %v990 = vpop.f32.mrf.mxu0
    %v991 = vpop.f32.mrf.mxu0
    %992 = vdwg.mxu0
    %993 = vmatprep.subr.bf16.mxu0 0
    %994 = vmatpush1.bf16.msra.mxu0 %v548
    %995 = vmatprep.subr.bf16.mxu0 0
    %996 = vmatpush1.bf16.msra.mxu0 %v547
    %997 = vmatprep.subr.bf16.mxu0 0
    %998 = vmatpush1.bf16.msra.mxu0 %v546
    %999 = vmatprep.subr.bf16.mxu0 0
    %1000 = vmatpush1.bf16.msra.mxu0 %v545
    %1001 = vmatprep.subr.bf16.mxu0 0
    %1002 = vmatpush1.bf16.msra.mxu0 %v544
    %1003 = vmatprep.subr.bf16.mxu0 0
    %1004 = vmatpush1.bf16.msra.mxu0 %v543
    %1005 = vmatprep.subr.bf16.mxu0 0
    %1006 = vmatpush1.bf16.msra.mxu0 %v542
    %1007 = vmatprep.subr.bf16.mxu0 0
    %1008 = vmatpush1.bf16.msra.mxu0 %v541
    %1009 = vmatprep.subr.bf16.mxu0 0
    %1010 = vmatpush2.bf16.msra.mxu0 %v556
    %1011 = vmatprep.subr.bf16.mxu0 0
    %1012 = vmatpush2.bf16.msra.mxu0 %v555
    %1013 = vmatprep.subr.bf16.mxu0 0
    %1014 = vmatpush2.bf16.msra.mxu0 %v554
    %1015 = vmatprep.subr.bf16.mxu0 0
    %1016 = vmatpush2.bf16.msra.mxu0 %v553
    %1017 = vmatprep.subr.bf16.mxu0 0
    %1018 = vmatpush2.bf16.msra.mxu0 %v552
    %1019 = vmatprep.subr.bf16.mxu0 0
    %1020 = vmatpush2.bf16.msra.mxu0 %v551
    %1021 = vmatprep.subr.bf16.mxu0 0
    %1022 = vmatpush2.bf16.msra.mxu0 %v550
    %1023 = vmatprep.subr.bf16.mxu0 0
    %1024 = vmatpush2.bf16.msra.mxu0 %v549
    %1025 = vmatprep.mubr.bf16.mxu0 %v900
    %1026 = vmatmul.mubr.bf16.gmra.mxu0 %v886
    %v1027 = vpop.f32.mrf.mxu0
    %v1028 = vadd.f32 %v988, %v1027
    %v1029 = vpop.f32.mrf.mxu0
    %v1030 = vpop.f32.mrf.mxu0
    %v1031 = vpop.f32.mrf.mxu0
    %1032 = vdwg.mxu0
    %1033 = vmatprep.subr.bf16.mxu0 0
    %1034 = vmatpush1.bf16.msra.mxu0 %v564
    %1035 = vmatprep.subr.bf16.mxu0 0
    %1036 = vmatpush1.bf16.msra.mxu0 %v563
    %1037 = vmatprep.subr.bf16.mxu0 0
    %1038 = vmatpush1.bf16.msra.mxu0 %v562
    %1039 = vmatprep.subr.bf16.mxu0 0
    %1040 = vmatpush1.bf16.msra.mxu0 %v561
    %1041 = vmatprep.subr.bf16.mxu0 0
    %1042 = vmatpush1.bf16.msra.mxu0 %v560
    %1043 = vmatprep.subr.bf16.mxu0 0
    %1044 = vmatpush1.bf16.msra.mxu0 %v559
    %1045 = vmatprep.subr.bf16.mxu0 0
    %1046 = vmatpush1.bf16.msra.mxu0 %v558
    %1047 = vmatprep.subr.bf16.mxu0 0
    %1048 = vmatpush1.bf16.msra.mxu0 %v557
    %1049 = vmatprep.subr.bf16.mxu0 0
    %1050 = vmatpush2.bf16.msra.mxu0 %v572
    %1051 = vmatprep.subr.bf16.mxu0 0
    %1052 = vmatpush2.bf16.msra.mxu0 %v571
    %1053 = vmatprep.subr.bf16.mxu0 0
    %1054 = vmatpush2.bf16.msra.mxu0 %v570
    %1055 = vmatprep.subr.bf16.mxu0 0
    %1056 = vmatpush2.bf16.msra.mxu0 %v569
    %1057 = vmatprep.subr.bf16.mxu0 0
    %1058 = vmatpush2.bf16.msra.mxu0 %v568
    %1059 = vmatprep.subr.bf16.mxu0 0
    %1060 = vmatpush2.bf16.msra.mxu0 %v567
    %1061 = vmatprep.subr.bf16.mxu0 0
    %1062 = vmatpush2.bf16.msra.mxu0 %v566
    %1063 = vmatprep.subr.bf16.mxu0 0
    %1064 = vmatpush2.bf16.msra.mxu0 %v565
    %1065 = vmatprep.mubr.bf16.mxu0 %v904
    %1066 = vmatmul.mubr.bf16.gmra.mxu0 %v902
    %v1067 = vpop.f32.mrf.mxu0
    %v1068 = vadd.f32 %v1028, %v1067
    %v1069 = vpop.f32.mrf.mxu0
    %v1070 = vpop.f32.mrf.mxu0
    %v1071 = vpop.f32.mrf.mxu0
    %1072 = vdwg.mxu0
    %v1073 = vpack.c.bf16 %v1068, %v1068
    %v1075 = vsel %vm810, %v1073, 0
    %1077 = vmatprep.subr.bf16.mxu0 0
    %1078 = vmatpush1.bf16.msra.mxu0 0
    %1079 = vmatprep.subr.bf16.mxu0 0
    %1080 = vmatpush1.bf16.msra.mxu0 0
    %1081 = vmatprep.subr.bf16.mxu0 0
    %1082 = vmatpush1.bf16.msra.mxu0 0
    %1083 = vmatprep.subr.bf16.mxu0 0
    %1084 = vmatpush1.bf16.msra.mxu0 0
    %1085 = vmatprep.subr.bf16.mxu0 0
    %1086 = vmatpush1.bf16.msra.mxu0 0
    %1087 = vmatprep.subr.bf16.mxu0 0
    %1088 = vmatpush1.bf16.msra.mxu0 0
    %1089 = vmatprep.subr.bf16.mxu0 0
    %1090 = vmatpush1.bf16.msra.mxu0 %v807
    %1091 = vmatprep.subr.bf16.mxu0 0
    %1092 = vmatpush1.bf16.msra.mxu0 %v806
    %1093 = vmatprep.subr.bf16.mxu0 0
    %1094 = vmatpush2.bf16.msra.mxu0 0
    %1095 = vmatprep.subr.bf16.mxu0 0
    %1096 = vmatpush2.bf16.msra.mxu0 0
    %1097 = vmatprep.subr.bf16.mxu0 0
    %1098 = vmatpush2.bf16.msra.mxu0 0
    %1099 = vmatprep.subr.bf16.mxu0 0
    %1100 = vmatpush2.bf16.msra.mxu0 0
    %1101 = vmatprep.subr.bf16.mxu0 0
    %1102 = vmatpush2.bf16.msra.mxu0 0
    %1103 = vmatprep.subr.bf16.mxu0 0
    %1104 = vmatpush2.bf16.msra.mxu0 0
    %1105 = vmatprep.subr.bf16.mxu0 0
    %1106 = vmatpush2.bf16.msra.mxu0 0
    %1107 = vmatprep.subr.bf16.mxu0 0
    %1108 = vmatpush2.bf16.msra.mxu0 0
    %1109 = vmatprep.mubr.bf16.mxu0 0
    %1110 = vmatmul.mubr.bf16.gmra.mxu0 %v1075
    %v1111 = vpop.f32.mrf.mxu0
    %v1112 = vadd.f32 0.0, %v1111
    %v1113 = vpop.f32.mrf.mxu0
    %v1114 = vpop.f32.mrf.mxu0
    %v1115 = vpop.f32.mrf.mxu0
    %1116 = vdwg.mxu0
    %v1117 = vld [vmem:[%s0] sm:$0x1]
    %v1118 = vld [vmem:[%s4] sm:$0xf]
    %v1119 = vld [vmem:[%s4 + $0x4] sm:$0xf]
    %v1120 = vld [vmem:[%s4 + $0x8] sm:$0xf]
    %v1121 = vld [vmem:[%s4 + $0xc] sm:$0xf]
    %v1122 = vld [vmem:[%s4 + $0x10] sm:$0xf]
    %v1123 = vld [vmem:[%s4 + $0x14] sm:$0xf]
    %v1124 = vld [vmem:[%s4 + $0x18] sm:$0xf]
    %v1125 = vld [vmem:[%s4 + $0x1c] sm:$0xf]
    %v1127 = vlaneseq
    %v1128 = vshrl.u32 %v1127, 7
    %v1129 = vsub.s32 0, %v1128
    %v1130 = vrot.slane %v47, %v1129
    %v1140 = vunpack.c.l.b16 %v1118
    %v1141 = vunpack.c.l.b16 %v1119
    %v1142 = vunpack.c.l.b16 %v1120
    %v1143 = vunpack.c.l.b16 %v1121
    %v1144 = vunpack.c.l.b16 %v1122
    %v1145 = vunpack.c.l.b16 %v1123
    %v1146 = vunpack.c.l.b16 %v1124
    %v1147 = vunpack.c.l.b16 %v1125
    %v1148 = vpack.c.b16 %v1141, %v1140
    %v1149 = vpack.c.b16 %v1143, %v1142
    %v1150 = vpack.c.b16 %v1145, %v1144
    %v1151 = vpack.c.b16 %v1147, %v1146
    %vm1156 = vcmask 523264
    %v1158 = vsel %vm1156, %v1117, 0
    %1160 = vmatprep.subr.bf16.mxu0 0
    %1161 = vmatpush1.bf16.msra.mxu0 0
    %1162 = vmatprep.subr.bf16.mxu0 0
    %1163 = vmatpush1.bf16.msra.mxu0 0
    %1164 = vmatprep.subr.bf16.mxu0 0
    %1165 = vmatpush1.bf16.msra.mxu0 0
    %1166 = vmatprep.subr.bf16.mxu0 0
    %1167 = vmatpush1.bf16.msra.mxu0 0
    %1168 = vmatprep.subr.bf16.mxu0 0
    %1169 = vmatpush1.bf16.msra.mxu0 %v1151
    %1170 = vmatprep.subr.bf16.mxu0 0
    %1171 = vmatpush1.bf16.msra.mxu0 %v1150
    %1172 = vmatprep.subr.bf16.mxu0 0
    %1173 = vmatpush1.bf16.msra.mxu0 %v1149
    %1174 = vmatprep.subr.bf16.mxu0 0
    %1175 = vmatpush1.bf16.msra.mxu0 %v1148
    %1176 = vmatprep.subr.bf16.mxu0 0
    %1177 = vmatpush2.bf16.msra.mxu0 0
    %1178 = vmatprep.subr.bf16.mxu0 0
    %1179 = vmatpush2.bf16.msra.mxu0 0
    %1180 = vmatprep.subr.bf16.mxu0 0
    %1181 = vmatpush2.bf16.msra.mxu0 0
    %1182 = vmatprep.subr.bf16.mxu0 0
    %1183 = vmatpush2.bf16.msra.mxu0 0
    %1184 = vmatprep.subr.bf16.mxu0 0
    %1185 = vmatpush2.bf16.msra.mxu0 0
    %1186 = vmatprep.subr.bf16.mxu0 0
    %1187 = vmatpush2.bf16.msra.mxu0 0
    %1188 = vmatprep.subr.bf16.mxu0 0
    %1189 = vmatpush2.bf16.msra.mxu0 0
    %1190 = vmatprep.subr.bf16.mxu0 0
    %1191 = vmatpush2.bf16.msra.mxu0 0
    %1192 = vmatprep.mubr.bf16.mxu0 0
    %1193 = vmatmul.mubr.bf16.gmra.mxu0 %v1158
    %v1194 = vpop.f32.mrf.mxu0
    %v1195 = vadd.f32 %v1130, %v1194
    %v1196 = vpop.f32.mrf.mxu0
    %v1197 = vpop.f32.mrf.mxu0
    %v1198 = vpop.f32.mrf.mxu0
    %1199 = vdwg.mxu0
    %v1200 = vpack.c.bf16 %v1195, %v1195
    %v1205 = vunpack.c.l.b16 %v56
    %v1206 = vunpack.c.l.b16 %v57
    %v1207 = vunpack.c.l.b16 %v58
    %v1208 = vunpack.c.l.b16 %v59
    %v1209 = vpack.c.b16 %v1206, %v1205
    %v1210 = vpack.c.b16 %v1208, %v1207
    %v1214 = vsel %vm810, %v1200, 0
    %1216 = vmatprep.subr.bf16.mxu0 0
    %1217 = vmatpush1.bf16.msra.mxu0 0
    %1218 = vmatprep.subr.bf16.mxu0 0
    %1219 = vmatpush1.bf16.msra.mxu0 0
    %1220 = vmatprep.subr.bf16.mxu0 0
    %1221 = vmatpush1.bf16.msra.mxu0 0
    %1222 = vmatprep.subr.bf16.mxu0 0
    %1223 = vmatpush1.bf16.msra.mxu0 0
    %1224 = vmatprep.subr.bf16.mxu0 0
    %1225 = vmatpush1.bf16.msra.mxu0 0
    %1226 = vmatprep.subr.bf16.mxu0 0
    %1227 = vmatpush1.bf16.msra.mxu0 0
    %1228 = vmatprep.subr.bf16.mxu0 0
    %1229 = vmatpush1.bf16.msra.mxu0 %v1210
    %1230 = vmatprep.subr.bf16.mxu0 0
    %1231 = vmatpush1.bf16.msra.mxu0 %v1209
    %1232 = vmatprep.subr.bf16.mxu0 0
    %1233 = vmatpush2.bf16.msra.mxu0 0
    %1234 = vmatprep.subr.bf16.mxu0 0
    %1235 = vmatpush2.bf16.msra.mxu0 0
    %1236 = vmatprep.subr.bf16.mxu0 0
    %1237 = vmatpush2.bf16.msra.mxu0 0
    %1238 = vmatprep.subr.bf16.mxu0 0
    %1239 = vmatpush2.bf16.msra.mxu0 0
    %1240 = vmatprep.subr.bf16.mxu0 0
    %1241 = vmatpush2.bf16.msra.mxu0 0
    %1242 = vmatprep.subr.bf16.mxu0 0
    %1243 = vmatpush2.bf16.msra.mxu0 0
    %1244 = vmatprep.subr.bf16.mxu0 0
    %1245 = vmatpush2.bf16.msra.mxu0 0
    %1246 = vmatprep.subr.bf16.mxu0 0
    %1247 = vmatpush2.bf16.msra.mxu0 0
    %1248 = vmatprep.mubr.bf16.mxu0 0
    %1249 = vmatmul.mubr.bf16.gmra.mxu0 %v1214
    %v1250 = vpop.f32.mrf.mxu0
    %v1251 = vadd.f32 0.0, %v1250
    %v1252 = vpop.f32.mrf.mxu0
    %v1253 = vpop.f32.mrf.mxu0
    %v1254 = vpop.f32.mrf.mxu0
    %1255 = vdwg.mxu0
    %v1256 = vld [vmem:[%s1] sm:$0x1]
    %v1258 = vsel %vm1156, %v1256, 0
    %1260 = vmatprep.subr.bf16.mxu0 0
    %1261 = vmatpush1.bf16.msra.mxu0 0
    %1262 = vmatprep.subr.bf16.mxu0 0
    %1263 = vmatpush1.bf16.msra.mxu0 0
    %1264 = vmatprep.subr.bf16.mxu0 0
    %1265 = vmatpush1.bf16.msra.mxu0 0
    %1266 = vmatprep.subr.bf16.mxu0 0
    %1267 = vmatpush1.bf16.msra.mxu0 0
    %1268 = vmatprep.subr.bf16.mxu0 0
    %1269 = vmatpush1.bf16.msra.mxu0 %v1151
    %1270 = vmatprep.subr.bf16.mxu0 0
    %1271 = vmatpush1.bf16.msra.mxu0 %v1150
    %1272 = vmatprep.subr.bf16.mxu0 0
    %1273 = vmatpush1.bf16.msra.mxu0 %v1149
    %1274 = vmatprep.subr.bf16.mxu0 0
    %1275 = vmatpush1.bf16.msra.mxu0 %v1148
    %1276 = vmatprep.subr.bf16.mxu0 0
    %1277 = vmatpush2.bf16.msra.mxu0 0
    %1278 = vmatprep.subr.bf16.mxu0 0
    %1279 = vmatpush2.bf16.msra.mxu0 0
    %1280 = vmatprep.subr.bf16.mxu0 0
    %1281 = vmatpush2.bf16.msra.mxu0 0
    %1282 = vmatprep.subr.bf16.mxu0 0
    %1283 = vmatpush2.bf16.msra.mxu0 0
    %1284 = vmatprep.subr.bf16.mxu0 0
    %1285 = vmatpush2.bf16.msra.mxu0 0
    %1286 = vmatprep.subr.bf16.mxu0 0
    %1287 = vmatpush2.bf16.msra.mxu0 0
    %1288 = vmatprep.subr.bf16.mxu0 0
    %1289 = vmatpush2.bf16.msra.mxu0 0
    %1290 = vmatprep.subr.bf16.mxu0 0
    %1291 = vmatpush2.bf16.msra.mxu0 0
    %1292 = vmatprep.mubr.bf16.mxu0 0
    %1293 = vmatmul.mubr.bf16.gmra.mxu0 %v1258
    %v1294 = vpop.f32.mrf.mxu0
    %v1295 = vadd.f32 %v1130, %v1294
    %v1296 = vpop.f32.mrf.mxu0
    %v1297 = vpop.f32.mrf.mxu0
    %v1298 = vpop.f32.mrf.mxu0
    %1299 = vdwg.mxu0
    %v1300 = vpack.c.bf16 %v1295, %v1295
    %v1302 = vsel %vm810, %v1300, 0
    %1304 = vmatprep.subr.bf16.mxu0 0
    %1305 = vmatpush1.bf16.msra.mxu0 0
    %1306 = vmatprep.subr.bf16.mxu0 0
    %1307 = vmatpush1.bf16.msra.mxu0 0
    %1308 = vmatprep.subr.bf16.mxu0 0
    %1309 = vmatpush1.bf16.msra.mxu0 0
    %1310 = vmatprep.subr.bf16.mxu0 0
    %1311 = vmatpush1.bf16.msra.mxu0 0
    %1312 = vmatprep.subr.bf16.mxu0 0
    %1313 = vmatpush1.bf16.msra.mxu0 0
    %1314 = vmatprep.subr.bf16.mxu0 0
    %1315 = vmatpush1.bf16.msra.mxu0 0
    %1316 = vmatprep.subr.bf16.mxu0 0
    %1317 = vmatpush1.bf16.msra.mxu0 %v1210
    %1318 = vmatprep.subr.bf16.mxu0 0
    %1319 = vmatpush1.bf16.msra.mxu0 %v1209
    %1320 = vmatprep.subr.bf16.mxu0 0
    %1321 = vmatpush2.bf16.msra.mxu0 0
    %1322 = vmatprep.subr.bf16.mxu0 0
    %1323 = vmatpush2.bf16.msra.mxu0 0
    %1324 = vmatprep.subr.bf16.mxu0 0
    %1325 = vmatpush2.bf16.msra.mxu0 0
    %1326 = vmatprep.subr.bf16.mxu0 0
    %1327 = vmatpush2.bf16.msra.mxu0 0
    %1328 = vmatprep.subr.bf16.mxu0 0
    %1329 = vmatpush2.bf16.msra.mxu0 0
    %1330 = vmatprep.subr.bf16.mxu0 0
    %1331 = vmatpush2.bf16.msra.mxu0 0
    %1332 = vmatprep.subr.bf16.mxu0 0
    %1333 = vmatpush2.bf16.msra.mxu0 0
    %1334 = vmatprep.subr.bf16.mxu0 0
    %1335 = vmatpush2.bf16.msra.mxu0 0
    %1336 = vmatprep.mubr.bf16.mxu0 0
    %1337 = vmatmul.mubr.bf16.gmra.mxu0 %v1302
    %v1338 = vpop.f32.mrf.mxu0
    %v1339 = vadd.f32 0.0, %v1338
    %v1340 = vpop.f32.mrf.mxu0
    %v1341 = vpop.f32.mrf.mxu0
    %v1342 = vpop.f32.mrf.mxu0
    %1343 = vdwg.mxu0
    %v1344 = vadd.f32 %v849, %v1251
    %v1346 = vlaneseq
    %v1347 = vshrl.u32 %v1346, 7
    %v1348 = vsub.s32 0, %v1347
    %v1349 = vrot.slane %v49, %v1348
    %v1351 = vadd.f32 %v1344, %v1349
    %v1352 = vmax.f32 %v1351, 0.0
    %v1354 = vlaneseq
    %v1355 = vshrl.u32 %v1354, 7
    %v1356 = vsub.s32 0, %v1355
    %v1357 = vrot.slane %v50, %v1356
    %v1359 = vmul.f32 %v1352, %v1357
    %vm1360 = vcmask 254976
    %v1361 = vsel %vm1360, %v1359, 0.0
    %1362 = vadd.xlane.f32.xlu0 %v1361
    %v1363 = vpop.xlane.xlu0 %1362
    %v1364 = vstv %s51
    %v1365 = vadd.f32 %v1363, %v1364
    %v1366 = vadd.f32 %v849, %v1339
    %v1367 = vadd.f32 %v1366, %v1349
    %v1368 = vmax.f32 %v1367, 0.0
    %v1369 = vmul.f32 %v1368, %v1357
    %v1370 = vsel %vm1360, %v1369, 0.0
    %1371 = vadd.xlane.f32.xlu0 %v1370
    %v1372 = vpop.xlane.xlu0 %1371
    %v1373 = vadd.f32 %v1372, %v1364
    %v1374 = vadd.f32 %v1112, %v1251
    %v1375 = vadd.f32 %v1374, %v1349
    %v1376 = vmax.f32 %v1375, 0.0
    %v1377 = vmul.f32 %v1376, %v1357
    %v1378 = vsel %vm1360, %v1377, 0.0
    %1379 = vadd.xlane.f32.xlu0 %v1378
    %v1380 = vpop.xlane.xlu0 %1379
    %v1381 = vadd.f32 %v1380, %v1364
    %v1382 = vadd.f32 %v1112, %v1339
    %v1383 = vadd.f32 %v1382, %v1349
    %v1384 = vmax.f32 %v1383, 0.0
    %v1385 = vmul.f32 %v1384, %v1357
    %v1386 = vsel %vm1360, %v1385, 0.0
    %1387 = vadd.xlane.f32.xlu0 %v1386
    %v1388 = vpop.xlane.xlu0 %1387
    %v1389 = vadd.f32 %v1388, %v1364
    %vm1390 = vcmask 7168
    %v1391 = vsel %vm1390, %v1365, %v1373
    %vm1392 = vcmask 15360
    %v1393 = vsel %vm1392, %v1391, %v1381
    %vm1394 = vcmask 23552
    %v1395 = vsel %vm1394, %v1393, %v1389
    %vm1396 = vcmask 25600
    %1397 = vst.msk [vmem:[#allocation3] sm:$0x3] %vm1396, %v1395
    // Predicated region
    $region54: #{tpu_custom_call.1} parent=1 // pred_check
      _
    $region55: #{tpu_custom_call.1} parent=1 // pred_check_branch
      %1399 = sbr.rel (0) target = $region57
    $region56: #{tpu_custom_call.1} parent=1 // pred_region
      %s1401 = ssub.s32 32, 32
      %1402 = vsyncadd [#allocation4], %s1401
      %s1404 = sshll.u32 [#allocation3], 4
      %s1405 = int_to_ptr.vmem [resolvable:$true] %s1404
      %1407 = dma.vmem_to_hbm [thread:$0]  %s1405, 32, %s13, [#allocation4]
    $region57: #{tpu_custom_call.1} parent=1 // pred_fallthru
      _
    // Predicated region
    $region58: #{tpu_custom_call.1} parent=1 // pred_check
      _
    $region59: #{tpu_custom_call.1} parent=1 // pred_check_branch
      %1409 = sbr.rel (0) target = $region61
    $region60: #{tpu_custom_call.1} parent=1 // pred_region
      %1410 = dma.done [#allocation4], 32
    $region61: #{tpu_custom_call.1} parent=1 // pred_fallthru
      _
    %1411 = vsyncpa [#allocation4], 1

// kernel: tpu_custom_call.1
$region0: #{tpu_custom_call.1}
  #allocation0 [shape = 'u32[]', space=smem, size = 0x4, offset = 0x4, fixed_abs, tag = 'smem constant byte address 0x4 - core index']
  #allocation1 [shape = 'u32[144,128]{1,0:T(1,128)}', space=vmem, size = 0x12000, scoped, tag = 'internal scratch']
  #allocation2 [shape = 'f32[1]{0:T(128)S(6)}', space=smem, size = 0x200, scoped, tag = 'scoped memory for tpu_custom_call.1']
  %s0 = inlined_call_operand.vmem [shape: bf16[2,64], index: 0, kind: input, shape index: {}]
  %s1 = inlined_call_operand.vmem [shape: bf16[2,64], index: 1, kind: input, shape index: {}]
  %s2 = inlined_call_operand.vmem [shape: bf16[2,1024], index: 2, kind: input, shape index: {}]
  %s3 = inlined_call_operand.vmem [shape: bf16[2,1024], index: 3, kind: input, shape index: {}]
  %s4 = inlined_call_operand.vmem [shape: bf16[64,32], index: 4, kind: input, shape index: {}]
  %s5 = inlined_call_operand.vmem [shape: bf16[1024,32], index: 5, kind: input, shape index: {}]
  %s6 = inlined_call_operand.vmem [shape: bf16[32,32], index: 6, kind: input, shape index: {}]
  %s7 = inlined_call_operand.vmem [shape: bf16[32,32], index: 7, kind: input, shape index: {}]
  %s8 = inlined_call_operand.vmem [shape: f32[1,32], index: 8, kind: input, shape index: {}]
  %s9 = inlined_call_operand.vmem [shape: f32[1,32], index: 9, kind: input, shape index: {}]
  %s10 = inlined_call_operand.vmem [shape: f32[1,32], index: 10, kind: input, shape index: {}]
  %s11 = inlined_call_operand.vmem [shape: f32[1,32], index: 11, kind: input, shape index: {}]
  %s12 = inlined_call_operand.<no memory space> [shape: f32[1], index: 12, kind: input, shape index: {}]
  %s13 = inlined_call_operand.hbm [shape: f32[2,4], index: 13, kind: output, shape index: {}]
  %s14 = sld [smem:[#allocation0]]
  $region62: #{tpu_custom_call.1} parent=0
    _
  %s16 = ssub.s32 1, %s14
  %s17 = scalar_select 0, %s16, %s14
  %18 = sst [smem:[#allocation2]] %s12
  $region1: #{tpu_custom_call.1} parent=0
    #allocation3 [shape = 'u8[1024]{0}', space=vmem, size = 0x400, scoped, tag = 'output window, operand 0, single buffered']
    #allocation4 [shape = 's32[1]{0}', space=sflag, size = 0x4, scoped, tag = 'scoped memory for tpu_custom_call.1']
    %19 = vsyncpa [#allocation4], 0
    // Predicated region
    $region2: #{tpu_custom_call.1} parent=1 // pred_check
      _
    $region3: #{tpu_custom_call.1} parent=1 // pred_check_branch
      %21 = sbr.rel (0) target = $region5
    $region4: #{tpu_custom_call.1} parent=1 // pred_region
      _
    $region5: #{tpu_custom_call.1} parent=1 // pred_fallthru
      _
    // Predicated region
    $region6: #{tpu_custom_call.1} parent=1 // pred_check
      _
    $region7: #{tpu_custom_call.1} parent=1 // pred_check_branch
      %23 = sbr.rel (0) target = $region9
    $region8: #{tpu_custom_call.1} parent=1 // pred_region
      _
    $region9: #{tpu_custom_call.1} parent=1 // pred_fallthru
      _
    // Predicated region
    $region10: #{tpu_custom_call.1} parent=1 // pred_check
      _
    $region11: #{tpu_custom_call.1} parent=1 // pred_check_branch
      %25 = sbr.rel (0) target = $region13
    $region12: #{tpu_custom_call.1} parent=1 // pred_region
      _
    $region13: #{tpu_custom_call.1} parent=1 // pred_fallthru
      _
    // Predicated region
    $region14: #{tpu_custom_call.1} parent=1 // pred_check
      _
    $region15: #{tpu_custom_call.1} parent=1 // pred_check_branch
      %27 = sbr.rel (0) target = $region17
    $region16: #{tpu_custom_call.1} parent=1 // pred_region
      _
    $region17: #{tpu_custom_call.1} parent=1 // pred_fallthru
      _
    // Predicated region
    $region18: #{tpu_custom_call.1} parent=1 // pred_check
      _
    $region19: #{tpu_custom_call.1} parent=1 // pred_check_branch
      %29 = sbr.rel (0) target = $region21
    $region20: #{tpu_custom_call.1} parent=1 // pred_region
      _
    $region21: #{tpu_custom_call.1} parent=1 // pred_fallthru
      _
    // Predicated region
    $region22: #{tpu_custom_call.1} parent=1 // pred_check
      _
    $region23: #{tpu_custom_call.1} parent=1 // pred_check_branch
      %31 = sbr.rel (0) target = $region25
    $region24: #{tpu_custom_call.1} parent=1 // pred_region
      _
    $region25: #{tpu_custom_call.1} parent=1 // pred_fallthru
      _
    // Predicated region
    $region26: #{tpu_custom_call.1} parent=1 // pred_check
      _
    $region27: #{tpu_custom_call.1} parent=1 // pred_check_branch
      %33 = sbr.rel (0) target = $region29
    $region28: #{tpu_custom_call.1} parent=1 // pred_region
      _
    $region29: #{tpu_custom_call.1} parent=1 // pred_fallthru
      _
    // Predicated region
    $region30: #{tpu_custom_call.1} parent=1 // pred_check
      _
    $region31: #{tpu_custom_call.1} parent=1 // pred_check_branch
      %35 = sbr.rel (0) target = $region33
    $region32: #{tpu_custom_call.1} parent=1 // pred_region
      _
    $region33: #{tpu_custom_call.1} parent=1 // pred_fallthru
      _
    // Predicated region
    $region34: #{tpu_custom_call.1} parent=1 // pred_check
      _
    $region35: #{tpu_custom_call.1} parent=1 // pred_check_branch
      %37 = sbr.rel (0) target = $region37
    $region36: #{tpu_custom_call.1} parent=1 // pred_region
      _
    $region37: #{tpu_custom_call.1} parent=1 // pred_fallthru
      _
    // Predicated region
    $region38: #{tpu_custom_call.1} parent=1 // pred_check
      _
    $region39: #{tpu_custom_call.1} parent=1 // pred_check_branch
      %39 = sbr.rel (0) target = $region41
    $region40: #{tpu_custom_call.1} parent=1 // pred_region
      _
    $region41: #{tpu_custom_call.1} parent=1 // pred_fallthru
      _
    // Predicated region
    $region42: #{tpu_custom_call.1} parent=1 // pred_check
      _
    $region43: #{tpu_custom_call.1} parent=1 // pred_check_branch
      %41 = sbr.rel (0) target = $region45
    $region44: #{tpu_custom_call.1} parent=1 // pred_region
      _
    $region45: #{tpu_custom_call.1} parent=1 // pred_fallthru
      _
    // Predicated region
    $region46: #{tpu_custom_call.1} parent=1 // pred_check
      _
    $region47: #{tpu_custom_call.1} parent=1 // pred_check_branch
      %43 = sbr.rel (0) target = $region49
    $region48: #{tpu_custom_call.1} parent=1 // pred_region
      _
    $region49: #{tpu_custom_call.1} parent=1 // pred_fallthru
      _
    // Predicated region
    $region50: #{tpu_custom_call.1} parent=1 // pred_check
      _
    $region51: #{tpu_custom_call.1} parent=1 // pred_check_branch
      %45 = sbr.rel (0) target = $region53
    $region52: #{tpu_custom_call.1} parent=1 // pred_region
      _
    $region53: #{tpu_custom_call.1} parent=1 // pred_fallthru
      _
    %v47 = vld [vmem:[%s8] sm:$0x1]
    %v48 = vld [vmem:[%s9] sm:$0x1]
    %v49 = vld [vmem:[%s10] sm:$0x1]
    %v50 = vld [vmem:[%s11] sm:$0x1]
    %s51 = sld [smem:[#allocation2]]
    %v52 = vld [vmem:[%s6] sm:$0xf]
    %v53 = vld [vmem:[%s6 + $0x4] sm:$0xf]
    %v54 = vld [vmem:[%s6 + $0x8] sm:$0xf]
    %v55 = vld [vmem:[%s6 + $0xc] sm:$0xf]
    %v56 = vld [vmem:[%s7] sm:$0xf]
    %v57 = vld [vmem:[%s7 + $0x4] sm:$0xf]
    %v58 = vld [vmem:[%s7 + $0x8] sm:$0xf]
    %v59 = vld [vmem:[%s7 + $0xc] sm:$0xf]
    %v60 = vld [vmem:[%s2] sm:$0xff]
    %v61 = vld [vmem:[%s5] sm:$0xf]
    %v62 = vld [vmem:[%s5 + $0x4] sm:$0xf]
    %v63 = vld [vmem:[%s5 + $0x8] sm:$0xf]
    %v64 = vld [vmem:[%s5 + $0xc] sm:$0xf]
    %v65 = vld [vmem:[%s5 + $0x10] sm:$0xf]
    %v66 = vld [vmem:[%s5 + $0x14] sm:$0xf]
    %v67 = vld [vmem:[%s5 + $0x18] sm:$0xf]
    %v68 = vld [vmem:[%s5 + $0x1c] sm:$0xf]
    %v69 = vld [vmem:[%s5 + $0x20] sm:$0xf]
    %v70 = vld [vmem:[%s5 + $0x24] sm:$0xf]
    %v71 = vld [vmem:[%s5 + $0x28] sm:$0xf]
    %v72 = vld [vmem:[%s5 + $0x2c] sm:$0xf]
    %v73 = vld [vmem:[%s5 + $0x30] sm:$0xf]
    %v74 = vld [vmem:[%s5 + $0x34] sm:$0xf]
    %v75 = vld [vmem:[%s5 + $0x38] sm:$0xf]
    %v76 = vld [vmem:[%s5 + $0x3c] sm:$0xf]
    %v77 = vld [vmem:[%s5 + $0x40] sm:$0xf]
    %v78 = vld [vmem:[%s5 + $0x44] sm:$0xf]
    %v79 = vld [vmem:[%s5 + $0x48] sm:$0xf]
    %v80 = vld [vmem:[%s5 + $0x4c] sm:$0xf]
    %v81 = vld [vmem:[%s5 + $0x50] sm:$0xf]
    %v82 = vld [vmem:[%s5 + $0x54] sm:$0xf]
    %v83 = vld [vmem:[%s5 + $0x58] sm:$0xf]
    %v84 = vld [vmem:[%s5 + $0x5c] sm:$0xf]
    %v85 = vld [vmem:[%s5 + $0x60] sm:$0xf]
    %v86 = vld [vmem:[%s5 + $0x64] sm:$0xf]
    %v87 = vld [vmem:[%s5 + $0x68] sm:$0xf]
    %v88 = vld [vmem:[%s5 + $0x6c] sm:$0xf]
    %v89 = vld [vmem:[%s5 + $0x70] sm:$0xf]
    %v90 = vld [vmem:[%s5 + $0x74] sm:$0xf]
    %v91 = vld [vmem:[%s5 + $0x78] sm:$0xf]
    %v92 = vld [vmem:[%s5 + $0x7c] sm:$0xf]
    %v93 = vld [vmem:[%s5 + $0x80] sm:$0xf]
    %v94 = vld [vmem:[%s5 + $0x84] sm:$0xf]
    %v95 = vld [vmem:[%s5 + $0x88] sm:$0xf]
    %v96 = vld [vmem:[%s5 + $0x8c] sm:$0xf]
    %v97 = vld [vmem:[%s5 + $0x90] sm:$0xf]
    %v98 = vld [vmem:[%s5 + $0x94] sm:$0xf]
    %v99 = vld [vmem:[%s5 + $0x98] sm:$0xf]
    %v100 = vld [vmem:[%s5 + $0x9c] sm:$0xf]
    %v101 = vld [vmem:[%s5 + $0xa0] sm:$0xf]
    %v102 = vld [vmem:[%s5 + $0xa4] sm:$0xf]
    %v103 = vld [vmem:[%s5 + $0xa8] sm:$0xf]
    %v104 = vld [vmem:[%s5 + $0xac] sm:$0xf]
    %v105 = vld [vmem:[%s5 + $0xb0] sm:$0xf]
    %v106 = vld [vmem:[%s5 + $0xb4] sm:$0xf]
    %v107 = vld [vmem:[%s5 + $0xb8] sm:$0xf]
    %v108 = vld [vmem:[%s5 + $0xbc] sm:$0xf]
    %v109 = vld [vmem:[%s5 + $0xc0] sm:$0xf]
    %v110 = vld [vmem:[%s5 + $0xc4] sm:$0xf]
    %v111 = vld [vmem:[%s5 + $0xc8] sm:$0xf]
    %v112 = vld [vmem:[%s5 + $0xcc] sm:$0xf]
    %v113 = vld [vmem:[%s5 + $0xd0] sm:$0xf]
    %v114 = vld [vmem:[%s5 + $0xd4] sm:$0xf]
    %v115 = vld [vmem:[%s5 + $0xd8] sm:$0xf]
    %v116 = vld [vmem:[%s5 + $0xdc] sm:$0xf]
    %v117 = vld [vmem:[%s5 + $0xe0] sm:$0xf]
    %v118 = vld [vmem:[%s5 + $0xe4] sm:$0xf]
    %v119 = vld [vmem:[%s5 + $0xe8] sm:$0xf]
    %v120 = vld [vmem:[%s5 + $0xec] sm:$0xf]
    %v121 = vld [vmem:[%s5 + $0xf0] sm:$0xf]
    %v122 = vld [vmem:[%s5 + $0xf4] sm:$0xf]
    %v123 = vld [vmem:[%s5 + $0xf8] sm:$0xf]
    %v124 = vld [vmem:[%s5 + $0xfc] sm:$0xf]
    %v125 = vld [vmem:[%s5 + $0x100] sm:$0xf]
    %v126 = vld [vmem:[%s5 + $0x104] sm:$0xf]
    %v127 = vld [vmem:[%s5 + $0x108] sm:$0xf]
    %v128 = vld [vmem:[%s5 + $0x10c] sm:$0xf]
    %v129 = vld [vmem:[%s5 + $0x110] sm:$0xf]
    %v130 = vld [vmem:[%s5 + $0x114] sm:$0xf]
    %v131 = vld [vmem:[%s5 + $0x118] sm:$0xf]
    %v132 = vld [vmem:[%s5 + $0x11c] sm:$0xf]
    %v133 = vld [vmem:[%s5 + $0x120] sm:$0xf]
    %v134 = vld [vmem:[%s5 + $0x124] sm:$0xf]
    %v135 = vld [vmem:[%s5 + $0x128] sm:$0xf]
    %v136 = vld [vmem:[%s5 + $0x12c] sm:$0xf]
    %v137 = vld [vmem:[%s5 + $0x130] sm:$0xf]
    %v138 = vld [vmem:[%s5 + $0x134] sm:$0xf]
    %v139 = vld [vmem:[%s5 + $0x138] sm:$0xf]
    %v140 = vld [vmem:[%s5 + $0x13c] sm:$0xf]
    %v141 = vld [vmem:[%s5 + $0x140] sm:$0xf]
    %v142 = vld [vmem:[%s5 + $0x144] sm:$0xf]
    %v143 = vld [vmem:[%s5 + $0x148] sm:$0xf]
    %v144 = vld [vmem:[%s5 + $0x14c] sm:$0xf]
    %v145 = vld [vmem:[%s5 + $0x150] sm:$0xf]
    %v146 = vld [vmem:[%s5 + $0x154] sm:$0xf]
    %v147 = vld [vmem:[%s5 + $0x158] sm:$0xf]
    %v148 = vld [vmem:[%s5 + $0x15c] sm:$0xf]
    %v149 = vld [vmem:[%s5 + $0x160] sm:$0xf]
    %v150 = vld [vmem:[%s5 + $0x164] sm:$0xf]
    %v151 = vld [vmem:[%s5 + $0x168] sm:$0xf]
    %v152 = vld [vmem:[%s5 + $0x16c] sm:$0xf]
    %v153 = vld [vmem:[%s5 + $0x170] sm:$0xf]
    %v154 = vld [vmem:[%s5 + $0x174] sm:$0xf]
    %v155 = vld [vmem:[%s5 + $0x178] sm:$0xf]
    %v156 = vld [vmem:[%s5 + $0x17c] sm:$0xf]
    %v157 = vld [vmem:[%s5 + $0x180] sm:$0xf]
    %v158 = vld [vmem:[%s5 + $0x184] sm:$0xf]
    %v159 = vld [vmem:[%s5 + $0x188] sm:$0xf]
    %v160 = vld [vmem:[%s5 + $0x18c] sm:$0xf]
    %v161 = vld [vmem:[%s5 + $0x190] sm:$0xf]
    %v162 = vld [vmem:[%s5 + $0x194] sm:$0xf]
    %v163 = vld [vmem:[%s5 + $0x198] sm:$0xf]
    %v164 = vld [vmem:[%s5 + $0x19c] sm:$0xf]
    %v165 = vld [vmem:[%s5 + $0x1a0] sm:$0xf]
    %v166 = vld [vmem:[%s5 + $0x1a4] sm:$0xf]
    %v167 = vld [vmem:[%s5 + $0x1a8] sm:$0xf]
    %v168 = vld [vmem:[%s5 + $0x1ac] sm:$0xf]
    %v169 = vld [vmem:[%s5 + $0x1b0] sm:$0xf]
    %v170 = vld [vmem:[%s5 + $0x1b4] sm:$0xf]
    %v171 = vld [vmem:[%s5 + $0x1b8] sm:$0xf]
    %v172 = vld [vmem:[%s5 + $0x1bc] sm:$0xf]
    %v173 = vld [vmem:[%s5 + $0x1c0] sm:$0xf]
    %v174 = vld [vmem:[%s5 + $0x1c4] sm:$0xf]
    %v175 = vld [vmem:[%s5 + $0x1c8] sm:$0xf]
    %v176 = vld [vmem:[%s5 + $0x1cc] sm:$0xf]
    %v177 = vld [vmem:[%s5 + $0x1d0] sm:$0xf]
    %v178 = vld [vmem:[%s5 + $0x1d4] sm:$0xf]
    %v179 = vld [vmem:[%s5 + $0x1d8] sm:$0xf]
    %v180 = vld [vmem:[%s5 + $0x1dc] sm:$0xf]
    %v181 = vld [vmem:[%s5 + $0x1e0] sm:$0xf]
    %v182 = vld [vmem:[%s5 + $0x1e4] sm:$0xf]
    %v183 = vld [vmem:[%s5 + $0x1e8] sm:$0xf]
    %v184 = vld [vmem:[%s5 + $0x1ec] sm:$0xf]
    %v185 = vld [vmem:[%s5 + $0x1f0] sm:$0xf]
    %v186 = vld [vmem:[%s5 + $0x1f4] sm:$0xf]
    %v187 = vld [vmem:[%s5 + $0x1f8] sm:$0xf]
    %v188 = vld [vmem:[%s5 + $0x1fc] sm:$0xf]
    %v190 = vlaneseq
    %v191 = vshrl.u32 %v190, 7
    %v192 = vsub.s32 0, %v191
    %v193 = vrot.slane %v48, %v192
    %v196 = vcombine.high %v60, %v60
    %v198 = vunpack.c.l.s4 1966171168
    %v199 = vunpack.c.0.s8 %v198
    %v200 = vlaneseq
    %v201 = vshrl.u32 %v200, 7
    %v202 = vsub.s32 %v199, %v201
    %v203 = vrot.slane %v60, %v202
    %v205 = vunpack.c.l.s4 1966171168
    %v206 = vunpack.c.0.s8 %v205
    %v207 = vlaneseq
    %v208 = vshrl.u32 %v207, 7
    %v209 = vsub.s32 %v206, %v208
    %v210 = vrot.slane %v196, %v209
    %v211 = vcombine.high %v203, %v203
    %v212 = vcombine.high %v210, %v210
    %v214 = vunpack.c.l.s4 1966171168
    %v215 = vunpack.c.0.s8 %v214
    %v216 = vlaneseq
    %v217 = vshrl.u32 %v216, 7
    %v218 = vsub.s32 %v215, %v217
    %v219 = vrot.slane %v203, %v218
    %v221 = vunpack.c.l.s4 1966171168
    %v222 = vunpack.c.0.s8 %v221
    %v223 = vlaneseq
    %v224 = vshrl.u32 %v223, 7
    %v225 = vsub.s32 %v222, %v224
    %v226 = vrot.slane %v210, %v225
    %v228 = vunpack.c.l.s4 1966171168
    %v229 = vunpack.c.0.s8 %v228
    %v230 = vlaneseq
    %v231 = vshrl.u32 %v230, 7
    %v232 = vsub.s32 %v229, %v231
    %v233 = vrot.slane %v211, %v232
    %v235 = vunpack.c.l.s4 1966171168
    %v236 = vunpack.c.0.s8 %v235
    %v237 = vlaneseq
    %v238 = vshrl.u32 %v237, 7
    %v239 = vsub.s32 %v236, %v238
    %v240 = vrot.slane %v212, %v239
    %v241 = vcombine.high %v219, %v219
    %v242 = vcombine.high %v226, %v226
    %v243 = vcombine.high %v233, %v233
    %v244 = vcombine.high %v240, %v240
    %v381 = vunpack.c.l.b16 %v61
    %v382 = vunpack.c.l.b16 %v62
    %v383 = vunpack.c.l.b16 %v63
    %v384 = vunpack.c.l.b16 %v64
    %v385 = vunpack.c.l.b16 %v65
    %v386 = vunpack.c.l.b16 %v66
    %v387 = vunpack.c.l.b16 %v67
    %v388 = vunpack.c.l.b16 %v68
    %v389 = vunpack.c.l.b16 %v69
    %v390 = vunpack.c.l.b16 %v70
    %v391 = vunpack.c.l.b16 %v71
    %v392 = vunpack.c.l.b16 %v72
    %v393 = vunpack.c.l.b16 %v73
    %v394 = vunpack.c.l.b16 %v74
    %v395 = vunpack.c.l.b16 %v75
    %v396 = vunpack.c.l.b16 %v76
    %v397 = vunpack.c.l.b16 %v77
    %v398 = vunpack.c.l.b16 %v78
    %v399 = vunpack.c.l.b16 %v79
    %v400 = vunpack.c.l.b16 %v80
    %v401 = vunpack.c.l.b16 %v81
    %v402 = vunpack.c.l.b16 %v82
    %v403 = vunpack.c.l.b16 %v83
    %v404 = vunpack.c.l.b16 %v84
    %v405 = vunpack.c.l.b16 %v85
    %v406 = vunpack.c.l.b16 %v86
    %v407 = vunpack.c.l.b16 %v87
    %v408 = vunpack.c.l.b16 %v88
    %v409 = vunpack.c.l.b16 %v89
    %v410 = vunpack.c.l.b16 %v90
    %v411 = vunpack.c.l.b16 %v91
    %v412 = vunpack.c.l.b16 %v92
    %v413 = vunpack.c.l.b16 %v93
    %v414 = vunpack.c.l.b16 %v94
    %v415 = vunpack.c.l.b16 %v95
    %v416 = vunpack.c.l.b16 %v96
    %v417 = vunpack.c.l.b16 %v97
    %v418 = vunpack.c.l.b16 %v98
    %v419 = vunpack.c.l.b16 %v99
    %v420 = vunpack.c.l.b16 %v100
    %v421 = vunpack.c.l.b16 %v101
    %v422 = vunpack.c.l.b16 %v102
    %v423 = vunpack.c.l.b16 %v103
    %v424 = vunpack.c.l.b16 %v104
    %v425 = vunpack.c.l.b16 %v105
    %v426 = vunpack.c.l.b16 %v106
    %v427 = vunpack.c.l.b16 %v107
    %v428 = vunpack.c.l.b16 %v108
    %v429 = vunpack.c.l.b16 %v109
    %v430 = vunpack.c.l.b16 %v110
    %v431 = vunpack.c.l.b16 %v111
    %v432 = vunpack.c.l.b16 %v112
    %v433 = vunpack.c.l.b16 %v113
    %v434 = vunpack.c.l.b16 %v114
    %v435 = vunpack.c.l.b16 %v115
    %v436 = vunpack.c.l.b16 %v116
    %v437 = vunpack.c.l.b16 %v117
    %v438 = vunpack.c.l.b16 %v118
    %v439 = vunpack.c.l.b16 %v119
    %v440 = vunpack.c.l.b16 %v120
    %v441 = vunpack.c.l.b16 %v121
    %v442 = vunpack.c.l.b16 %v122
    %v443 = vunpack.c.l.b16 %v123
    %v444 = vunpack.c.l.b16 %v124
    %v445 = vunpack.c.l.b16 %v125
    %v446 = vunpack.c.l.b16 %v126
    %v447 = vunpack.c.l.b16 %v127
    %v448 = vunpack.c.l.b16 %v128
    %v449 = vunpack.c.l.b16 %v129
    %v450 = vunpack.c.l.b16 %v130
    %v451 = vunpack.c.l.b16 %v131
    %v452 = vunpack.c.l.b16 %v132
    %v453 = vunpack.c.l.b16 %v133
    %v454 = vunpack.c.l.b16 %v134
    %v455 = vunpack.c.l.b16 %v135
    %v456 = vunpack.c.l.b16 %v136
    %v457 = vunpack.c.l.b16 %v137
    %v458 = vunpack.c.l.b16 %v138
    %v459 = vunpack.c.l.b16 %v139
    %v460 = vunpack.c.l.b16 %v140
    %v461 = vunpack.c.l.b16 %v141
    %v462 = vunpack.c.l.b16 %v142
    %v463 = vunpack.c.l.b16 %v143
    %v464 = vunpack.c.l.b16 %v144
    %v465 = vunpack.c.l.b16 %v145
    %v466 = vunpack.c.l.b16 %v146
    %v467 = vunpack.c.l.b16 %v147
    %v468 = vunpack.c.l.b16 %v148
    %v469 = vunpack.c.l.b16 %v149
    %v470 = vunpack.c.l.b16 %v150
    %v471 = vunpack.c.l.b16 %v151
    %v472 = vunpack.c.l.b16 %v152
    %v473 = vunpack.c.l.b16 %v153
    %v474 = vunpack.c.l.b16 %v154
    %v475 = vunpack.c.l.b16 %v155
    %v476 = vunpack.c.l.b16 %v156
    %v477 = vunpack.c.l.b16 %v157
    %v478 = vunpack.c.l.b16 %v158
    %v479 = vunpack.c.l.b16 %v159
    %v480 = vunpack.c.l.b16 %v160
    %v481 = vunpack.c.l.b16 %v161
    %v482 = vunpack.c.l.b16 %v162
    %v483 = vunpack.c.l.b16 %v163
    %v484 = vunpack.c.l.b16 %v164
    %v485 = vunpack.c.l.b16 %v165
    %v486 = vunpack.c.l.b16 %v166
    %v487 = vunpack.c.l.b16 %v167
    %v488 = vunpack.c.l.b16 %v168
    %v489 = vunpack.c.l.b16 %v169
    %v490 = vunpack.c.l.b16 %v170
    %v491 = vunpack.c.l.b16 %v171
    %v492 = vunpack.c.l.b16 %v172
    %v493 = vunpack.c.l.b16 %v173
    %v494 = vunpack.c.l.b16 %v174
    %v495 = vunpack.c.l.b16 %v175
    %v496 = vunpack.c.l.b16 %v176
    %v497 = vunpack.c.l.b16 %v177
    %v498 = vunpack.c.l.b16 %v178
    %v499 = vunpack.c.l.b16 %v179
    %v500 = vunpack.c.l.b16 %v180
    %v501 = vunpack.c.l.b16 %v181
    %v502 = vunpack.c.l.b16 %v182
    %v503 = vunpack.c.l.b16 %v183
    %v504 = vunpack.c.l.b16 %v184
    %v505 = vunpack.c.l.b16 %v185
    %v506 = vunpack.c.l.b16 %v186
    %v507 = vunpack.c.l.b16 %v187
    %v508 = vunpack.c.l.b16 %v188
    %v509 = vpack.c.b16 %v382, %v381
    %v510 = vpack.c.b16 %v384, %v383
    %v511 = vpack.c.b16 %v386, %v385
    %v512 = vpack.c.b16 %v388, %v387
    %v513 = vpack.c.b16 %v390, %v389
    %v514 = vpack.c.b16 %v392, %v391
    %v515 = vpack.c.b16 %v394, %v393
    %v516 = vpack.c.b16 %v396, %v395
    %v517 = vpack.c.b16 %v398, %v397
    %v518 = vpack.c.b16 %v400, %v399
    %v519 = vpack.c.b16 %v402, %v401
    %v520 = vpack.c.b16 %v404, %v403
    %v521 = vpack.c.b16 %v406, %v405
    %v522 = vpack.c.b16 %v408, %v407
    %v523 = vpack.c.b16 %v410, %v409
    %v524 = vpack.c.b16 %v412, %v411
    %v525 = vpack.c.b16 %v414, %v413
    %v526 = vpack.c.b16 %v416, %v415
    %v527 = vpack.c.b16 %v418, %v417
    %v528 = vpack.c.b16 %v420, %v419
    %v529 = vpack.c.b16 %v422, %v421
    %v530 = vpack.c.b16 %v424, %v423
    %v531 = vpack.c.b16 %v426, %v425
    %v532 = vpack.c.b16 %v428, %v427
    %v533 = vpack.c.b16 %v430, %v429
    %v534 = vpack.c.b16 %v432, %v431
    %v535 = vpack.c.b16 %v434, %v433
    %v536 = vpack.c.b16 %v436, %v435
    %v537 = vpack.c.b16 %v438, %v437
    %v538 = vpack.c.b16 %v440, %v439
    %v539 = vpack.c.b16 %v442, %v441
    %v540 = vpack.c.b16 %v444, %v443
    %v541 = vpack.c.b16 %v446, %v445
    %v542 = vpack.c.b16 %v448, %v447
    %v543 = vpack.c.b16 %v450, %v449
    %v544 = vpack.c.b16 %v452, %v451
    %v545 = vpack.c.b16 %v454, %v453
    %v546 = vpack.c.b16 %v456, %v455
    %v547 = vpack.c.b16 %v458, %v457
    %v548 = vpack.c.b16 %v460, %v459
    %v549 = vpack.c.b16 %v462, %v461
    %v550 = vpack.c.b16 %v464, %v463
    %v551 = vpack.c.b16 %v466, %v465
    %v552 = vpack.c.b16 %v468, %v467
    %v553 = vpack.c.b16 %v470, %v469
    %v554 = vpack.c.b16 %v472, %v471
    %v555 = vpack.c.b16 %v474, %v473
    %v556 = vpack.c.b16 %v476, %v475
    %v557 = vpack.c.b16 %v478, %v477
    %v558 = vpack.c.b16 %v480, %v479
    %v559 = vpack.c.b16 %v482, %v481
    %v560 = vpack.c.b16 %v484, %v483
    %v561 = vpack.c.b16 %v486, %v485
    %v562 = vpack.c.b16 %v488, %v487
    %v563 = vpack.c.b16 %v490, %v489
    %v564 = vpack.c.b16 %v492, %v491
    %v565 = vpack.c.b16 %v494, %v493
    %v566 = vpack.c.b16 %v496, %v495
    %v567 = vpack.c.b16 %v498, %v497
    %v568 = vpack.c.b16 %v500, %v499
    %v569 = vpack.c.b16 %v502, %v501
    %v570 = vpack.c.b16 %v504, %v503
    %v571 = vpack.c.b16 %v506, %v505
    %v572 = vpack.c.b16 %v508, %v507
    %637 = vmatprep.subr.bf16.mxu0 0
    %638 = vmatpush1.bf16.msra.mxu0 %v516
    %639 = vmatprep.subr.bf16.mxu0 0
    %640 = vmatpush1.bf16.msra.mxu0 %v515
    %641 = vmatprep.subr.bf16.mxu0 0
    %642 = vmatpush1.bf16.msra.mxu0 %v514
    %643 = vmatprep.subr.bf16.mxu0 0
    %644 = vmatpush1.bf16.msra.mxu0 %v513
    %645 = vmatprep.subr.bf16.mxu0 0
    %646 = vmatpush1.bf16.msra.mxu0 %v512
    %647 = vmatprep.subr.bf16.mxu0 0
    %648 = vmatpush1.bf16.msra.mxu0 %v511
    %649 = vmatprep.subr.bf16.mxu0 0
    %650 = vmatpush1.bf16.msra.mxu0 %v510
    %651 = vmatprep.subr.bf16.mxu0 0
    %652 = vmatpush1.bf16.msra.mxu0 %v509
    %653 = vmatprep.subr.bf16.mxu0 0
    %654 = vmatpush2.bf16.msra.mxu0 %v524
    %655 = vmatprep.subr.bf16.mxu0 0
    %656 = vmatpush2.bf16.msra.mxu0 %v523
    %657 = vmatprep.subr.bf16.mxu0 0
    %658 = vmatpush2.bf16.msra.mxu0 %v522
    %659 = vmatprep.subr.bf16.mxu0 0
    %660 = vmatpush2.bf16.msra.mxu0 %v521
    %661 = vmatprep.subr.bf16.mxu0 0
    %662 = vmatpush2.bf16.msra.mxu0 %v520
    %663 = vmatprep.subr.bf16.mxu0 0
    %664 = vmatpush2.bf16.msra.mxu0 %v519
    %665 = vmatprep.subr.bf16.mxu0 0
    %666 = vmatpush2.bf16.msra.mxu0 %v518
    %667 = vmatprep.subr.bf16.mxu0 0
    %668 = vmatpush2.bf16.msra.mxu0 %v517
    %669 = vmatprep.mubr.bf16.mxu0 %v233
    %670 = vmatmul.mubr.bf16.gmra.mxu0 %v219
    %v671 = vpop.f32.mrf.mxu0
    %v672 = vadd.f32 %v193, %v671
    %v673 = vpop.f32.mrf.mxu0
    %v674 = vpop.f32.mrf.mxu0
    %v675 = vpop.f32.mrf.mxu0
    %676 = vdwg.mxu0
    %677 = vmatprep.subr.bf16.mxu0 0
    %678 = vmatpush1.bf16.msra.mxu0 %v532
    %679 = vmatprep.subr.bf16.mxu0 0
    %680 = vmatpush1.bf16.msra.mxu0 %v531
    %681 = vmatprep.subr.bf16.mxu0 0
    %682 = vmatpush1.bf16.msra.mxu0 %v530
    %683 = vmatprep.subr.bf16.mxu0 0
    %684 = vmatpush1.bf16.msra.mxu0 %v529
    %685 = vmatprep.subr.bf16.mxu0 0
    %686 = vmatpush1.bf16.msra.mxu0 %v528
    %687 = vmatprep.subr.bf16.mxu0 0
    %688 = vmatpush1.bf16.msra.mxu0 %v527
    %689 = vmatprep.subr.bf16.mxu0 0
    %690 = vmatpush1.bf16.msra.mxu0 %v526
    %691 = vmatprep.subr.bf16.mxu0 0
    %692 = vmatpush1.bf16.msra.mxu0 %v525
    %693 = vmatprep.subr.bf16.mxu0 0
    %694 = vmatpush2.bf16.msra.mxu0 %v540
    %695 = vmatprep.subr.bf16.mxu0 0
    %696 = vmatpush2.bf16.msra.mxu0 %v539
    %697 = vmatprep.subr.bf16.mxu0 0
    %698 = vmatpush2.bf16.msra.mxu0 %v538
    %699 = vmatprep.subr.bf16.mxu0 0
    %700 = vmatpush2.bf16.msra.mxu0 %v537
    %701 = vmatprep.subr.bf16.mxu0 0
    %702 = vmatpush2.bf16.msra.mxu0 %v536
    %703 = vmatprep.subr.bf16.mxu0 0
    %704 = vmatpush2.bf16.msra.mxu0 %v535
    %705 = vmatprep.subr.bf16.mxu0 0
    %706 = vmatpush2.bf16.msra.mxu0 %v534
    %707 = vmatprep.subr.bf16.mxu0 0
    %708 = vmatpush2.bf16.msra.mxu0 %v533
    %709 = vmatprep.mubr.bf16.mxu0 %v243
    %710 = vmatmul.mubr.bf16.gmra.mxu0 %v241
    %v711 = vpop.f32.mrf.mxu0
    %v712 = vadd.f32 %v672, %v711
    %v713 = vpop.f32.mrf.mxu0
    %v714 = vpop.f32.mrf.mxu0
    %v715 = vpop.f32.mrf.mxu0
    %716 = vdwg.mxu0
    %717 = vmatprep.subr.bf16.mxu0 0
    %718 = vmatpush1.bf16.msra.mxu0 %v548
    %719 = vmatprep.subr.bf16.mxu0 0
    %720 = vmatpush1.bf16.msra.mxu0 %v547
    %721 = vmatprep.subr.bf16.mxu0 0
    %722 = vmatpush1.bf16.msra.mxu0 %v546
    %723 = vmatprep.subr.bf16.mxu0 0
    %724 = vmatpush1.bf16.msra.mxu0 %v545
    %725 = vmatprep.subr.bf16.mxu0 0
    %726 = vmatpush1.bf16.msra.mxu0 %v544
    %727 = vmatprep.subr.bf16.mxu0 0
    %728 = vmatpush1.bf16.msra.mxu0 %v543
    %729 = vmatprep.subr.bf16.mxu0 0
    %730 = vmatpush1.bf16.msra.mxu0 %v542
    %731 = vmatprep.subr.bf16.mxu0 0
    %732 = vmatpush1.bf16.msra.mxu0 %v541
    %733 = vmatprep.subr.bf16.mxu0 0
    %734 = vmatpush2.bf16.msra.mxu0 %v556
    %735 = vmatprep.subr.bf16.mxu0 0
    %736 = vmatpush2.bf16.msra.mxu0 %v555
    %737 = vmatprep.subr.bf16.mxu0 0
    %738 = vmatpush2.bf16.msra.mxu0 %v554
    %739 = vmatprep.subr.bf16.mxu0 0
    %740 = vmatpush2.bf16.msra.mxu0 %v553
    %741 = vmatprep.subr.bf16.mxu0 0
    %742 = vmatpush2.bf16.msra.mxu0 %v552
    %743 = vmatprep.subr.bf16.mxu0 0
    %744 = vmatpush2.bf16.msra.mxu0 %v551
    %745 = vmatprep.subr.bf16.mxu0 0
    %746 = vmatpush2.bf16.msra.mxu0 %v550
    %747 = vmatprep.subr.bf16.mxu0 0
    %748 = vmatpush2.bf16.msra.mxu0 %v549
    %749 = vmatprep.mubr.bf16.mxu0 %v240
    %750 = vmatmul.mubr.bf16.gmra.mxu0 %v226
    %v751 = vpop.f32.mrf.mxu0
    %v752 = vadd.f32 %v712, %v751
    %v753 = vpop.f32.mrf.mxu0
    %v754 = vpop.f32.mrf.mxu0
    %v755 = vpop.f32.mrf.mxu0
    %756 = vdwg.mxu0
    %757 = vmatprep.subr.bf16.mxu0 0
    %758 = vmatpush1.bf16.msra.mxu0 %v564
    %759 = vmatprep.subr.bf16.mxu0 0
    %760 = vmatpush1.bf16.msra.mxu0 %v563
    %761 = vmatprep.subr.bf16.mxu0 0
    %762 = vmatpush1.bf16.msra.mxu0 %v562
    %763 = vmatprep.subr.bf16.mxu0 0
    %764 = vmatpush1.bf16.msra.mxu0 %v561
    %765 = vmatprep.subr.bf16.mxu0 0
    %766 = vmatpush1.bf16.msra.mxu0 %v560
    %767 = vmatprep.subr.bf16.mxu0 0
    %768 = vmatpush1.bf16.msra.mxu0 %v559
    %769 = vmatprep.subr.bf16.mxu0 0
    %770 = vmatpush1.bf16.msra.mxu0 %v558
    %771 = vmatprep.subr.bf16.mxu0 0
    %772 = vmatpush1.bf16.msra.mxu0 %v557
    %773 = vmatprep.subr.bf16.mxu0 0
    %774 = vmatpush2.bf16.msra.mxu0 %v572
    %775 = vmatprep.subr.bf16.mxu0 0
    %776 = vmatpush2.bf16.msra.mxu0 %v571
    %777 = vmatprep.subr.bf16.mxu0 0
    %778 = vmatpush2.bf16.msra.mxu0 %v570
    %779 = vmatprep.subr.bf16.mxu0 0
    %780 = vmatpush2.bf16.msra.mxu0 %v569
    %781 = vmatprep.subr.bf16.mxu0 0
    %782 = vmatpush2.bf16.msra.mxu0 %v568
    %783 = vmatprep.subr.bf16.mxu0 0
    %784 = vmatpush2.bf16.msra.mxu0 %v567
    %785 = vmatprep.subr.bf16.mxu0 0
    %786 = vmatpush2.bf16.msra.mxu0 %v566
    %787 = vmatprep.subr.bf16.mxu0 0
    %788 = vmatpush2.bf16.msra.mxu0 %v565
    %789 = vmatprep.mubr.bf16.mxu0 %v244
    %790 = vmatmul.mubr.bf16.gmra.mxu0 %v242
    %v791 = vpop.f32.mrf.mxu0
    %v792 = vadd.f32 %v752, %v791
    %v793 = vpop.f32.mrf.mxu0
    %v794 = vpop.f32.mrf.mxu0
    %v795 = vpop.f32.mrf.mxu0
    %796 = vdwg.mxu0
    %v797 = vpack.c.bf16 %v792, %v792
    %v802 = vunpack.c.l.b16 %v52
    %v803 = vunpack.c.l.b16 %v53
    %v804 = vunpack.c.l.b16 %v54
    %v805 = vunpack.c.l.b16 %v55
    %v806 = vpack.c.b16 %v803, %v802
    %v807 = vpack.c.b16 %v805, %v804
    %vm810 = vcmask 261120
    %v812 = vsel %vm810, %v797, 0
    %814 = vmatprep.subr.bf16.mxu0 0
    %815 = vmatpush1.bf16.msra.mxu0 0
    %816 = vmatprep.subr.bf16.mxu0 0
    %817 = vmatpush1.bf16.msra.mxu0 0
    %818 = vmatprep.subr.bf16.mxu0 0
    %819 = vmatpush1.bf16.msra.mxu0 0
    %820 = vmatprep.subr.bf16.mxu0 0
    %821 = vmatpush1.bf16.msra.mxu0 0
    %822 = vmatprep.subr.bf16.mxu0 0
    %823 = vmatpush1.bf16.msra.mxu0 0
    %824 = vmatprep.subr.bf16.mxu0 0
    %825 = vmatpush1.bf16.msra.mxu0 0
    %826 = vmatprep.subr.bf16.mxu0 0
    %827 = vmatpush1.bf16.msra.mxu0 %v807
    %828 = vmatprep.subr.bf16.mxu0 0
    %829 = vmatpush1.bf16.msra.mxu0 %v806
    %830 = vmatprep.subr.bf16.mxu0 0
    %831 = vmatpush2.bf16.msra.mxu0 0
    %832 = vmatprep.subr.bf16.mxu0 0
    %833 = vmatpush2.bf16.msra.mxu0 0
    %834 = vmatprep.subr.bf16.mxu0 0
    %835 = vmatpush2.bf16.msra.mxu0 0
    %836 = vmatprep.subr.bf16.mxu0 0
    %837 = vmatpush2.bf16.msra.mxu0 0
    %838 = vmatprep.subr.bf16.mxu0 0
    %839 = vmatpush2.bf16.msra.mxu0 0
    %840 = vmatprep.subr.bf16.mxu0 0
    %841 = vmatpush2.bf16.msra.mxu0 0
    %842 = vmatprep.subr.bf16.mxu0 0
    %843 = vmatpush2.bf16.msra.mxu0 0
    %844 = vmatprep.subr.bf16.mxu0 0
    %845 = vmatpush2.bf16.msra.mxu0 0
    %846 = vmatprep.mubr.bf16.mxu0 0
    %847 = vmatmul.mubr.bf16.gmra.mxu0 %v812
    %v848 = vpop.f32.mrf.mxu0
    %v849 = vadd.f32 0.0, %v848
    %v850 = vpop.f32.mrf.mxu0
    %v851 = vpop.f32.mrf.mxu0
    %v852 = vpop.f32.mrf.mxu0
    %853 = vdwg.mxu0
    %v854 = vld [vmem:[%s3] sm:$0xff]
    %v856 = vcombine.high %v854, %v854
    %v858 = vunpack.c.l.s4 1966171168
    %v859 = vunpack.c.0.s8 %v858
    %v860 = vlaneseq
    %v861 = vshrl.u32 %v860, 7
    %v862 = vsub.s32 %v859, %v861
    %v863 = vrot.slane %v854, %v862
    %v865 = vunpack.c.l.s4 1966171168
    %v866 = vunpack.c.0.s8 %v865
    %v867 = vlaneseq
    %v868 = vshrl.u32 %v867, 7
    %v869 = vsub.s32 %v866, %v868
    %v870 = vrot.slane %v856, %v869
    %v871 = vcombine.high %v863, %v863
    %v872 = vcombine.high %v870, %v870
    %v874 = vunpack.c.l.s4 1966171168
    %v875 = vunpack.c.0.s8 %v874
    %v876 = vlaneseq
    %v877 = vshrl.u32 %v876, 7
    %v878 = vsub.s32 %v875, %v877
    %v879 = vrot.slane %v863, %v878
    %v881 = vunpack.c.l.s4 1966171168
    %v882 = vunpack.c.0.s8 %v881
    %v883 = vlaneseq
    %v884 = vshrl.u32 %v883, 7
    %v885 = vsub.s32 %v882, %v884
    %v886 = vrot.slane %v870, %v885
    %v888 = vunpack.c.l.s4 1966171168
    %v889 = vunpack.c.0.s8 %v888
    %v890 = vlaneseq
    %v891 = vshrl.u32 %v890, 7
    %v892 = vsub.s32 %v889, %v891
    %v893 = vrot.slane %v871, %v892
    %v895 = vunpack.c.l.s4 1966171168
    %v896 = vunpack.c.0.s8 %v895
    %v897 = vlaneseq
    %v898 = vshrl.u32 %v897, 7
    %v899 = vsub.s32 %v896, %v898
    %v900 = vrot.slane %v872, %v899
    %v901 = vcombine.high %v879, %v879
    %v902 = vcombine.high %v886, %v886
    %v903 = vcombine.high %v893, %v893
    %v904 = vcombine.high %v900, %v900
    %913 = vmatprep.subr.bf16.mxu0 0
    %914 = vmatpush1.bf16.msra.mxu0 %v516
    %915 = vmatprep.subr.bf16.mxu0 0
    %916 = vmatpush1.bf16.msra.mxu0 %v515
    %917 = vmatprep.subr.bf16.mxu0 0
    %918 = vmatpush1.bf16.msra.mxu0 %v514
    %919 = vmatprep.subr.bf16.mxu0 0
    %920 = vmatpush1.bf16.msra.mxu0 %v513
    %921 = vmatprep.subr.bf16.mxu0 0
    %922 = vmatpush1.bf16.msra.mxu0 %v512
    %923 = vmatprep.subr.bf16.mxu0 0
    %924 = vmatpush1.bf16.msra.mxu0 %v511
    %925 = vmatprep.subr.bf16.mxu0 0
    %926 = vmatpush1.bf16.msra.mxu0 %v510
    %927 = vmatprep.subr.bf16.mxu0 0
    %928 = vmatpush1.bf16.msra.mxu0 %v509
    %929 = vmatprep.subr.bf16.mxu0 0
    %930 = vmatpush2.bf16.msra.mxu0 %v524
    %931 = vmatprep.subr.bf16.mxu0 0
    %932 = vmatpush2.bf16.msra.mxu0 %v523
    %933 = vmatprep.subr.bf16.mxu0 0
    %934 = vmatpush2.bf16.msra.mxu0 %v522
    %935 = vmatprep.subr.bf16.mxu0 0
    %936 = vmatpush2.bf16.msra.mxu0 %v521
    %937 = vmatprep.subr.bf16.mxu0 0
    %938 = vmatpush2.bf16.msra.mxu0 %v520
    %939 = vmatprep.subr.bf16.mxu0 0
    %940 = vmatpush2.bf16.msra.mxu0 %v519
    %941 = vmatprep.subr.bf16.mxu0 0
    %942 = vmatpush2.bf16.msra.mxu0 %v518
    %943 = vmatprep.subr.bf16.mxu0 0
    %944 = vmatpush2.bf16.msra.mxu0 %v517
    %945 = vmatprep.mubr.bf16.mxu0 %v893
    %946 = vmatmul.mubr.bf16.gmra.mxu0 %v879
    %v947 = vpop.f32.mrf.mxu0
    %v948 = vadd.f32 %v193, %v947
    %v949 = vpop.f32.mrf.mxu0
    %v950 = vpop.f32.mrf.mxu0
    %v951 = vpop.f32.mrf.mxu0
    %952 = vdwg.mxu0
    %953 = vmatprep.subr.bf16.mxu0 0
    %954 = vmatpush1.bf16.msra.mxu0 %v532
    %955 = vmatprep.subr.bf16.mxu0 0
    %956 = vmatpush1.bf16.msra.mxu0 %v531
    %957 = vmatprep.subr.bf16.mxu0 0
    %958 = vmatpush1.bf16.msra.mxu0 %v530
    %959 = vmatprep.subr.bf16.mxu0 0
    %960 = vmatpush1.bf16.msra.mxu0 %v529
    %961 = vmatprep.subr.bf16.mxu0 0
    %962 = vmatpush1.bf16.msra.mxu0 %v528
    %963 = vmatprep.subr.bf16.mxu0 0
    %964 = vmatpush1.bf16.msra.mxu0 %v527
    %965 = vmatprep.subr.bf16.mxu0 0
    %966 = vmatpush1.bf16.msra.mxu0 %v526
    %967 = vmatprep.subr.bf16.mxu0 0
    %968 = vmatpush1.bf16.msra.mxu0 %v525
    %969 = vmatprep.subr.bf16.mxu0 0
    %970 = vmatpush2.bf16.msra.mxu0 %v540
    %971 = vmatprep.subr.bf16.mxu0 0
    %972 = vmatpush2.bf16.msra.mxu0 %v539
    %973 = vmatprep.subr.bf16.mxu0 0
    %974 = vmatpush2.bf16.msra.mxu0 %v538
    %975 = vmatprep.subr.bf16.mxu0 0
    %976 = vmatpush2.bf16.msra.mxu0 %v537
    %977 = vmatprep.subr.bf16.mxu0 0
    %978 = vmatpush2.bf16.msra.mxu0 %v536
    %979 = vmatprep.subr.bf16.mxu0 0
    %980 = vmatpush2.bf16.msra.mxu0 %v535
    %981 = vmatprep.subr.bf16.mxu0 0
    %982 = vmatpush2.bf16.msra.mxu0 %v534
    %983 = vmatprep.subr.bf16.mxu0 0
    %984 = vmatpush2.bf16.msra.mxu0 %v533
    %985 = vmatprep.mubr.bf16.mxu0 %v903
    %986 = vmatmul.mubr.bf16.gmra.mxu0 %v901
    %v987 = vpop.f32.mrf.mxu0
    %v988 = vadd.f32 %v948, %v987
    %v989 = vpop.f32.mrf.mxu0
    %v990 = vpop.f32.mrf.mxu0
    %v991 = vpop.f32.mrf.mxu0
    %992 = vdwg.mxu0
    %993 = vmatprep.subr.bf16.mxu0 0
    %994 = vmatpush1.bf16.msra.mxu0 %v548
    %995 = vmatprep.subr.bf16.mxu0 0
    %996 = vmatpush1.bf16.msra.mxu0 %v547
    %997 = vmatprep.subr.bf16.mxu0 0
    %998 = vmatpush1.bf16.msra.mxu0 %v546
    %999 = vmatprep.subr.bf16.mxu0 0
    %1000 = vmatpush1.bf16.msra.mxu0 %v545
    %1001 = vmatprep.subr.bf16.mxu0 0
    %1002 = vmatpush1.bf16.msra.mxu0 %v544
    %1003 = vmatprep.subr.bf16.mxu0 0
    %1004 = vmatpush1.bf16.msra.mxu0 %v543
    %1005 = vmatprep.subr.bf16.mxu0 0
    %1006 = vmatpush1.bf16.msra.mxu0 %v542
    %1007 = vmatprep.subr.bf16.mxu0 0
    %1008 = vmatpush1.bf16.msra.mxu0 %v541
    %1009 = vmatprep.subr.bf16.mxu0 0
    %1010 = vmatpush2.bf16.msra.mxu0 %v556
    %1011 = vmatprep.subr.bf16.mxu0 0
    %1012 = vmatpush2.bf16.msra.mxu0 %v555
    %1013 = vmatprep.subr.bf16.mxu0 0
    %1014 = vmatpush2.bf16.msra.mxu0 %v554
    %1015 = vmatprep.subr.bf16.mxu0 0
    %1016 = vmatpush2.bf16.msra.mxu0 %v553
    %1017 = vmatprep.subr.bf16.mxu0 0
    %1018 = vmatpush2.bf16.msra.mxu0 %v552
    %1019 = vmatprep.subr.bf16.mxu0 0
    %1020 = vmatpush2.bf16.msra.mxu0 %v551
    %1021 = vmatprep.subr.bf16.mxu0 0
    %1022 = vmatpush2.bf16.msra.mxu0 %v550
    %1023 = vmatprep.subr.bf16.mxu0 0
    %1024 = vmatpush2.bf16.msra.mxu0 %v549
    %1025 = vmatprep.mubr.bf16.mxu0 %v900
    %1026 = vmatmul.mubr.bf16.gmra.mxu0 %v886
    %v1027 = vpop.f32.mrf.mxu0
    %v1028 = vadd.f32 %v988, %v1027
    %v1029 = vpop.f32.mrf.mxu0
    %v1030 = vpop.f32.mrf.mxu0
    %v1031 = vpop.f32.mrf.mxu0
    %1032 = vdwg.mxu0
    %1033 = vmatprep.subr.bf16.mxu0 0
    %1034 = vmatpush1.bf16.msra.mxu0 %v564
    %1035 = vmatprep.subr.bf16.mxu0 0
    %1036 = vmatpush1.bf16.msra.mxu0 %v563
    %1037 = vmatprep.subr.bf16.mxu0 0
    %1038 = vmatpush1.bf16.msra.mxu0 %v562
    %1039 = vmatprep.subr.bf16.mxu0 0
    %1040 = vmatpush1.bf16.msra.mxu0 %v561
    %1041 = vmatprep.subr.bf16.mxu0 0
    %1042 = vmatpush1.bf16.msra.mxu0 %v560
    %1043 = vmatprep.subr.bf16.mxu0 0
    %1044 = vmatpush1.bf16.msra.mxu0 %v559
    %1045 = vmatprep.subr.bf16.mxu0 0
    %1046 = vmatpush1.bf16.msra.mxu0 %v558
    %1047 = vmatprep.subr.bf16.mxu0 0
    %1048 = vmatpush1.bf16.msra.mxu0 %v557
    %1049 = vmatprep.subr.bf16.mxu0 0
    %1050 = vmatpush2.bf16.msra.mxu0 %v572
    %1051 = vmatprep.subr.bf16.mxu0 0
    %1052 = vmatpush2.bf16.msra.mxu0 %v571
    %1053 = vmatprep.subr.bf16.mxu0 0
    %1054 = vmatpush2.bf16.msra.mxu0 %v570
    %1055 = vmatprep.subr.bf16.mxu0 0
    %1056 = vmatpush2.bf16.msra.mxu0 %v569
    %1057 = vmatprep.subr.bf16.mxu0 0
    %1058 = vmatpush2.bf16.msra.mxu0 %v568
    %1059 = vmatprep.subr.bf16.mxu0 0
    %1060 = vmatpush2.bf16.msra.mxu0 %v567
    %1061 = vmatprep.subr.bf16.mxu0 0
    %1062 = vmatpush2.bf16.msra.mxu0 %v566
    %1063 = vmatprep.subr.bf16.mxu0 0
    %1064 = vmatpush2.bf16.msra.mxu0 %v565
    %1065 = vmatprep.mubr.bf16.mxu0 %v904
    %1066 = vmatmul.mubr.bf16.gmra.mxu0 %v902
    %v1067 = vpop.f32.mrf.mxu0
    %v1068 = vadd.f32 %v1028, %v1067
    %v1069 = vpop.f32.mrf.mxu0
    %v1070 = vpop.f32.mrf.mxu0
    %v1071 = vpop.f32.mrf.mxu0
    %1072 = vdwg.mxu0
    %v1073 = vpack.c.bf16 %v1068, %v1068
    %v1075 = vsel %vm810, %v1073, 0
    %1077 = vmatprep.subr.bf16.mxu0 0
    %1078 = vmatpush1.bf16.msra.mxu0 0
    %1079 = vmatprep.subr.bf16.mxu0 0
    %1080 = vmatpush1.bf16.msra.mxu0 0
    %1081 = vmatprep.subr.bf16.mxu0 0
    %1082 = vmatpush1.bf16.msra.mxu0 0
    %1083 = vmatprep.subr.bf16.mxu0 0
    %1084 = vmatpush1.bf16.msra.mxu0 0
    %1085 = vmatprep.subr.bf16.mxu0 0
    %1086 = vmatpush1.bf16.msra.mxu0 0
    %1087 = vmatprep.subr.bf16.mxu0 0
    %1088 = vmatpush1.bf16.msra.mxu0 0
    %1089 = vmatprep.subr.bf16.mxu0 0
    %1090 = vmatpush1.bf16.msra.mxu0 %v807
    %1091 = vmatprep.subr.bf16.mxu0 0
    %1092 = vmatpush1.bf16.msra.mxu0 %v806
    %1093 = vmatprep.subr.bf16.mxu0 0
    %1094 = vmatpush2.bf16.msra.mxu0 0
    %1095 = vmatprep.subr.bf16.mxu0 0
    %1096 = vmatpush2.bf16.msra.mxu0 0
    %1097 = vmatprep.subr.bf16.mxu0 0
    %1098 = vmatpush2.bf16.msra.mxu0 0
    %1099 = vmatprep.subr.bf16.mxu0 0
    %1100 = vmatpush2.bf16.msra.mxu0 0
    %1101 = vmatprep.subr.bf16.mxu0 0
    %1102 = vmatpush2.bf16.msra.mxu0 0
    %1103 = vmatprep.subr.bf16.mxu0 0
    %1104 = vmatpush2.bf16.msra.mxu0 0
    %1105 = vmatprep.subr.bf16.mxu0 0
    %1106 = vmatpush2.bf16.msra.mxu0 0
    %1107 = vmatprep.subr.bf16.mxu0 0
    %1108 = vmatpush2.bf16.msra.mxu0 0
    %1109 = vmatprep.mubr.bf16.mxu0 0
    %1110 = vmatmul.mubr.bf16.gmra.mxu0 %v1075
    %v1111 = vpop.f32.mrf.mxu0
    %v1112 = vadd.f32 0.0, %v1111
    %v1113 = vpop.f32.mrf.mxu0
    %v1114 = vpop.f32.mrf.mxu0
    %v1115 = vpop.f32.mrf.mxu0
    %1116 = vdwg.mxu0
    %v1117 = vld [vmem:[%s0] sm:$0x1]
    %v1118 = vld [vmem:[%s4] sm:$0xf]
    %v1119 = vld [vmem:[%s4 + $0x4] sm:$0xf]
    %v1120 = vld [vmem:[%s4 + $0x8] sm:$0xf]
    %v1121 = vld [vmem:[%s4 + $0xc] sm:$0xf]
    %v1122 = vld [vmem:[%s4 + $0x10] sm:$0xf]
    %v1123 = vld [vmem:[%s4 + $0x14] sm:$0xf]
    %v1124 = vld [vmem:[%s4 + $0x18] sm:$0xf]
    %v1125 = vld [vmem:[%s4 + $0x1c] sm:$0xf]
    %v1127 = vlaneseq
    %v1128 = vshrl.u32 %v1127, 7
    %v1129 = vsub.s32 0, %v1128
    %v1130 = vrot.slane %v47, %v1129
    %v1140 = vunpack.c.l.b16 %v1118
    %v1141 = vunpack.c.l.b16 %v1119
    %v1142 = vunpack.c.l.b16 %v1120
    %v1143 = vunpack.c.l.b16 %v1121
    %v1144 = vunpack.c.l.b16 %v1122
    %v1145 = vunpack.c.l.b16 %v1123
    %v1146 = vunpack.c.l.b16 %v1124
    %v1147 = vunpack.c.l.b16 %v1125
    %v1148 = vpack.c.b16 %v1141, %v1140
    %v1149 = vpack.c.b16 %v1143, %v1142
    %v1150 = vpack.c.b16 %v1145, %v1144
    %v1151 = vpack.c.b16 %v1147, %v1146
    %vm1156 = vcmask 523264
    %v1158 = vsel %vm1156, %v1117, 0
    %1160 = vmatprep.subr.bf16.mxu0 0
    %1161 = vmatpush1.bf16.msra.mxu0 0
    %1162 = vmatprep.subr.bf16.mxu0 0
    %1163 = vmatpush1.bf16.msra.mxu0 0
    %1164 = vmatprep.subr.bf16.mxu0 0
    %1165 = vmatpush1.bf16.msra.mxu0 0
    %1166 = vmatprep.subr.bf16.mxu0 0
    %1167 = vmatpush1.bf16.msra.mxu0 0
    %1168 = vmatprep.subr.bf16.mxu0 0
    %1169 = vmatpush1.bf16.msra.mxu0 %v1151
    %1170 = vmatprep.subr.bf16.mxu0 0
    %1171 = vmatpush1.bf16.msra.mxu0 %v1150
    %1172 = vmatprep.subr.bf16.mxu0 0
    %1173 = vmatpush1.bf16.msra.mxu0 %v1149
    %1174 = vmatprep.subr.bf16.mxu0 0
    %1175 = vmatpush1.bf16.msra.mxu0 %v1148
    %1176 = vmatprep.subr.bf16.mxu0 0
    %1177 = vmatpush2.bf16.msra.mxu0 0
    %1178 = vmatprep.subr.bf16.mxu0 0
    %1179 = vmatpush2.bf16.msra.mxu0 0
    %1180 = vmatprep.subr.bf16.mxu0 0
    %1181 = vmatpush2.bf16.msra.mxu0 0
    %1182 = vmatprep.subr.bf16.mxu0 0
    %1183 = vmatpush2.bf16.msra.mxu0 0
    %1184 = vmatprep.subr.bf16.mxu0 0
    %1185 = vmatpush2.bf16.msra.mxu0 0
    %1186 = vmatprep.subr.bf16.mxu0 0
    %1187 = vmatpush2.bf16.msra.mxu0 0
    %1188 = vmatprep.subr.bf16.mxu0 0
    %1189 = vmatpush2.bf16.msra.mxu0 0
    %1190 = vmatprep.subr.bf16.mxu0 0
    %1191 = vmatpush2.bf16.msra.mxu0 0
    %1192 = vmatprep.mubr.bf16.mxu0 0
    %1193 = vmatmul.mubr.bf16.gmra.mxu0 %v1158
    %v1194 = vpop.f32.mrf.mxu0
    %v1195 = vadd.f32 %v1130, %v1194
    %v1196 = vpop.f32.mrf.mxu0
    %v1197 = vpop.f32.mrf.mxu0
    %v1198 = vpop.f32.mrf.mxu0
    %1199 = vdwg.mxu0
    %v1200 = vpack.c.bf16 %v1195, %v1195
    %v1205 = vunpack.c.l.b16 %v56
    %v1206 = vunpack.c.l.b16 %v57
    %v1207 = vunpack.c.l.b16 %v58
    %v1208 = vunpack.c.l.b16 %v59
    %v1209 = vpack.c.b16 %v1206, %v1205
    %v1210 = vpack.c.b16 %v1208, %v1207
    %v1214 = vsel %vm810, %v1200, 0
    %1216 = vmatprep.subr.bf16.mxu0 0
    %1217 = vmatpush1.bf16.msra.mxu0 0
    %1218 = vmatprep.subr.bf16.mxu0 0
    %1219 = vmatpush1.bf16.msra.mxu0 0
    %1220 = vmatprep.subr.bf16.mxu0 0
    %1221 = vmatpush1.bf16.msra.mxu0 0
    %1222 = vmatprep.subr.bf16.mxu0 0
    %1223 = vmatpush1.bf16.msra.mxu0 0
    %1224 = vmatprep.subr.bf16.mxu0 0
    %1225 = vmatpush1.bf16.msra.mxu0 0
    %1226 = vmatprep.subr.bf16.mxu0 0
    %1227 = vmatpush1.bf16.msra.mxu0 0
    %1228 = vmatprep.subr.bf16.mxu0 0
    %1229 = vmatpush1.bf16.msra.mxu0 %v1210
    %1230 = vmatprep.subr.bf16.mxu0 0
    %1231 = vmatpush1.bf16.msra.mxu0 %v1209
    %1232 = vmatprep.subr.bf16.mxu0 0
    %1233 = vmatpush2.bf16.msra.mxu0 0
    %1234 = vmatprep.subr.bf16.mxu0 0
    %1235 = vmatpush2.bf16.msra.mxu0 0
    %1236 = vmatprep.subr.bf16.mxu0 0
    %1237 = vmatpush2.bf16.msra.mxu0 0
    %1238 = vmatprep.subr.bf16.mxu0 0
    %1239 = vmatpush2.bf16.msra.mxu0 0
    %1240 = vmatprep.subr.bf16.mxu0 0
    %1241 = vmatpush2.bf16.msra.mxu0 0
    %1242 = vmatprep.subr.bf16.mxu0 0
    %1243 = vmatpush2.bf16.msra.mxu0 0
    %1244 = vmatprep.subr.bf16.mxu0 0
    %1245 = vmatpush2.bf16.msra.mxu0 0
    %1246 = vmatprep.subr.bf16.mxu0 0
    %1247 = vmatpush2.bf16.msra.mxu0 0
    %1248 = vmatprep.mubr.bf16.mxu0 0
    %1249 = vmatmul.mubr.bf16.gmra.mxu0 %v1214
    %v1250 = vpop.f32.mrf.mxu0
    %v1251 = vadd.f32 0.0, %v1250
    %v1252 = vpop.f32.mrf.mxu0
    %v1253 = vpop.f32.mrf.mxu0
    %v1254 = vpop.f32.mrf.mxu0
    %1255 = vdwg.mxu0
    %v1256 = vld [vmem:[%s1] sm:$0x1]
    %v1258 = vsel %vm1156, %v1256, 0
    %1260 = vmatprep.subr.bf16.mxu0 0
    %1261 = vmatpush1.bf16.msra.mxu0 0
    %1262 = vmatprep.subr.bf16.mxu0 0
    %1263 = vmatpush1.bf16.msra.mxu0 0
    %1264 = vmatprep.subr.bf16.mxu0 0
    %1265 = vmatpush1.bf16.msra.mxu0 0
    %1266 = vmatprep.subr.bf16.mxu0 0
    %1267 = vmatpush1.bf16.msra.mxu0 0
    %1268 = vmatprep.subr.bf16.mxu0 0
    %1269 = vmatpush1.bf16.msra.mxu0 %v1151
    %1270 = vmatprep.subr.bf16.mxu0 0
    %1271 = vmatpush1.bf16.msra.mxu0 %v1150
    %1272 = vmatprep.subr.bf16.mxu0 0
    %1273 = vmatpush1.bf16.msra.mxu0 %v1149
    %1274 = vmatprep.subr.bf16.mxu0 0
    %1275 = vmatpush1.bf16.msra.mxu0 %v1148
    %1276 = vmatprep.subr.bf16.mxu0 0
    %1277 = vmatpush2.bf16.msra.mxu0 0
    %1278 = vmatprep.subr.bf16.mxu0 0
    %1279 = vmatpush2.bf16.msra.mxu0 0
    %1280 = vmatprep.subr.bf16.mxu0 0
    %1281 = vmatpush2.bf16.msra.mxu0 0
    %1282 = vmatprep.subr.bf16.mxu0 0
    %1283 = vmatpush2.bf16.msra.mxu0 0
    %1284 = vmatprep.subr.bf16.mxu0 0
    %1285 = vmatpush2.bf16.msra.mxu0 0
    %1286 = vmatprep.subr.bf16.mxu0 0
    %1287 = vmatpush2.bf16.msra.mxu0 0
    %1288 = vmatprep.subr.bf16.mxu0 0
    %1289 = vmatpush2.bf16.msra.mxu0 0
    %1290 = vmatprep.subr.bf16.mxu0 0
    %1291 = vmatpush2.bf16.msra.mxu0 0
    %1292 = vmatprep.mubr.bf16.mxu0 0
    %1293 = vmatmul.mubr.bf16.gmra.mxu0 %v1258
    %v1294 = vpop.f32.mrf.mxu0
    %v1295 = vadd.f32 %v1130, %v1294
    %v1296 = vpop.f32.mrf.mxu0
    %v1297 = vpop.f32.mrf.mxu0
    %v1298 = vpop.f32.mrf.mxu0
    %1299 = vdwg.mxu0
    %v1300 = vpack.c.bf16 %v1295, %v1295
    %v1302 = vsel %vm810, %v1300, 0
    %1304 = vmatprep.subr.bf16.mxu0 0
    %1305 = vmatpush1.bf16.msra.mxu0 0
    %1306 = vmatprep.subr.bf16.mxu0 0
    %1307 = vmatpush1.bf16.msra.mxu0 0
    %1308 = vmatprep.subr.bf16.mxu0 0
    %1309 = vmatpush1.bf16.msra.mxu0 0
    %1310 = vmatprep.subr.bf16.mxu0 0
    %1311 = vmatpush1.bf16.msra.mxu0 0
    %1312 = vmatprep.subr.bf16.mxu0 0
    %1313 = vmatpush1.bf16.msra.mxu0 0
    %1314 = vmatprep.subr.bf16.mxu0 0
    %1315 = vmatpush1.bf16.msra.mxu0 0
    %1316 = vmatprep.subr.bf16.mxu0 0
    %1317 = vmatpush1.bf16.msra.mxu0 %v1210
    %1318 = vmatprep.subr.bf16.mxu0 0
    %1319 = vmatpush1.bf16.msra.mxu0 %v1209
    %1320 = vmatprep.subr.bf16.mxu0 0
    %1321 = vmatpush2.bf16.msra.mxu0 0
    %1322 = vmatprep.subr.bf16.mxu0 0
    %1323 = vmatpush2.bf16.msra.mxu0 0
    %1324 = vmatprep.subr.bf16.mxu0 0
    %1325 = vmatpush2.bf16.msra.mxu0 0
    %1326 = vmatprep.subr.bf16.mxu0 0
    %1327 = vmatpush2.bf16.msra.mxu0 0
    %1328 = vmatprep.subr.bf16.mxu0 0
    %1329 = vmatpush2.bf16.msra.mxu0 0
    %1330 = vmatprep.subr.bf16.mxu0 0
    %1331 = vmatpush2.bf16.msra.mxu0 0
    %1332 = vmatprep.subr.bf16.mxu0 0
    %1333 = vmatpush2.bf16.msra.mxu0 0
    %1334 = vmatprep.subr.bf16.mxu0 0
    %1335 = vmatpush2.bf16.msra.mxu0 0
    %1336 = vmatprep.mubr.bf16.mxu0 0
    %1337 = vmatmul.mubr.bf16.gmra.mxu0 %v1302
    %v1338 = vpop.f32.mrf.mxu0
    %v1339 = vadd.f32 0.0, %v1338
    %v1340 = vpop.f32.mrf.mxu0
    %v1341 = vpop.f32.mrf.mxu0
    %v1342 = vpop.f32.mrf.mxu0
    %1343 = vdwg.mxu0
    %v1344 = vadd.f32 %v849, %v1251
    %v1346 = vlaneseq
    %v1347 = vshrl.u32 %v1346, 7
    %v1348 = vsub.s32 0, %v1347
    %v1349 = vrot.slane %v49, %v1348
    %v1351 = vadd.f32 %v1344, %v1349
    %v1352 = vmax.f32 %v1351, 0.0
    %v1354 = vlaneseq
    %v1355 = vshrl.u32 %v1354, 7
    %v1356 = vsub.s32 0, %v1355
    %v1357 = vrot.slane %v50, %v1356
    %v1359 = vmul.f32 %v1352, %v1357
    %vm1360 = vcmask 254976
    %v1361 = vsel %vm1360, %v1359, 0.0
    %1362 = vadd.xlane.f32.xlu0 %v1361
    %v1363 = vpop.xlane.xlu0 %1362
    %v1364 = vstv %s51
    %v1365 = vadd.f32 %v1363, %v1364
    %v1366 = vadd.f32 %v849, %v1339
    %v1367 = vadd.f32 %v1366, %v1349
    %v1368 = vmax.f32 %v1367, 0.0
    %v1369 = vmul.f32 %v1368, %v1357
    %v1370 = vsel %vm1360, %v1369, 0.0
    %1371 = vadd.xlane.f32.xlu0 %v1370
    %v1372 = vpop.xlane.xlu0 %1371
    %v1373 = vadd.f32 %v1372, %v1364
    %v1374 = vadd.f32 %v1112, %v1251
    %v1375 = vadd.f32 %v1374, %v1349
    %v1376 = vmax.f32 %v1375, 0.0
    %v1377 = vmul.f32 %v1376, %v1357
    %v1378 = vsel %vm1360, %v1377, 0.0
    %1379 = vadd.xlane.f32.xlu0 %v1378
    %v1380 = vpop.xlane.xlu0 %1379
    %v1381 = vadd.f32 %v1380, %v1364
    %v1382 = vadd.f32 %v1112, %v1339
    %v1383 = vadd.f32 %v1382, %v1349
    %v1384 = vmax.f32 %v1383, 0.0
    %v1385 = vmul.f32 %v1384, %v1357
    %v1386 = vsel %vm1360, %v1385, 0.0
    %1387 = vadd.xlane.f32.xlu0 %v1386
    %v1388 = vpop.xlane.xlu0 %1387
    %v1389 = vadd.f32 %v1388, %v1364
    %vm1390 = vcmask 7168
    %v1391 = vsel %vm1390, %v1365, %v1373
    %vm1392 = vcmask 15360
    %v1393 = vsel %vm1392, %v1391, %v1381
    %vm1394 = vcmask 23552
    %v1395 = vsel %vm1394, %v1393, %v1389
    %vm1396 = vcmask 25600
    %1397 = vst.msk [vmem:[#allocation3] sm:$0x3] %vm1396, %v1395
    // Predicated region
    $region54: #{tpu_custom_call.1} parent=1 // pred_check
      _
    $region55: #{tpu_custom_call.1} parent=1 // pred_check_branch
      %1399 = sbr.rel (0) target = $region57
    $region56: #{tpu_custom_call.1} parent=1 // pred_region
      %s1401 = ssub.s32 32, 32
      %1402 = vsyncadd [#allocation4], %s1401
      %s1404 = sshll.u32 [#allocation3], 4
      %s1405 = int_to_ptr.vmem [resolvable:$true] %s1404
      %1407 = dma.vmem_to_hbm [thread:$0]  %s1405, 32, %s13, [#allocation4]
    $region57: #{tpu_custom_call.1} parent=1 // pred_fallthru
      _
    // Predicated region
    $region58: #{tpu_custom_call.1} parent=1 // pred_check
      _
    $region59: #{tpu_custom_call.1} parent=1 // pred_check_branch
      %1409 = sbr.rel (0) target = $region61
    $region60: #{tpu_custom_call.1} parent=1 // pred_region
      %1410 = dma.done [#allocation4], 32
    $region61: #{tpu_custom_call.1} parent=1 // pred_fallthru
      _
    %1411 = vsyncpa [#allocation4], 1

</llo_original>
